<compile_context>
chip_gen: v7x
topology: tpu7x:2x2x1
jax: 0.10.0
libtpu: 0.0.40
codegen_flags: <defaults>
</compile_context>

<pallas_src>
import jax
import jax.numpy as jnp
from jax.experimental import pallas as pl
from jax.experimental.pallas import tpu as pltpu

HIDDEN = 128      # hidden width of the synthetic SDF / color MLPs
FEAT = 64         # rgb_latent_dim / feature_size in the reference module
HEAD_W = 128      # fused head width: [sdf(1) | grad(3) | feat(64) | zero-pad] -> 128 lanes
TILE = 1024       # point-tile size (lane axis) for the network kernel; sweep 512-2048
BETA_MIN = 1e-4


# ----------------------------------------------------------------------------
# Kernel 1: implicit (SDF) network + color network over a tile of points.
# Channels-first: x (8, T), output (4, T) = [sdf; rgb].
# ----------------------------------------------------------------------------
def _network_kernel(x_ref,
                    w_in_ref, b1_ref,
                    w_head_ref, b_head_ref,
                    wc_head_ref, wc_in_ref, bc1_ref,
                    wc2_ref, bc2_ref,
                    out_ref):
    f32 = jnp.float32
    bf16 = jnp.bfloat16

    x = x_ref[...]                       # (8, T) f32: rows 0-2 pts, 3-5 viewdirs, 6 mask
    x_bf = x.astype(bf16)
    mask = x[6:7, :]                     # (1, T)  1.0 == outside bbox

    # --- implicit_network trunk: pts -> hidden (mask/vdir columns of w_in are zero) ---
    h = jnp.dot(w_in_ref[...], x_bf, preferred_element_type=f32) + b1_ref[...]
    h = jnp.maximum(h, 0.0)              # (HIDDEN, T)

    # --- fused heads: one full-width MXU matmul -> [sdf(1); grad(3); feat(64); 0-pad] ---
    heads = (jnp.dot(w_head_ref[...], h.astype(bf16), preferred_element_type=f32)
             + b_head_ref[...])          # (128, T)
    sdf = heads[0:1, :]                  # (1, T)
    # TODO(synk): SDFNetwork/ColorNetwork are not defined in the reference source;
    # gradients_out is produced by a linear head here instead of analytic SDF grads.

    # --- color_network first layer, fused:
    #     wc_head picks grad/feat columns out of the head slab (K=128),
    #     wc_in  picks pts/viewdirs columns out of the packed input (K=8).
    c = (jnp.dot(wc_head_ref[...], heads.astype(bf16), preferred_element_type=f32)
         + jnp.dot(wc_in_ref[...], x_bf, preferred_element_type=f32)
         + bc1_ref[...])
    c = jnp.maximum(c, 0.0)              # (HIDDEN, T)

    logits = (jnp.dot(wc2_ref[...], c.astype(bf16), preferred_element_type=f32)
              + bc2_ref[...])            # (3, T)
    rgb = jax.nn.sigmoid(logits)

    # masked-select in torch (ray_pts[~mask_outbox]) reproduced densely:
    # sdf init 100.0, rgb init 0.0 at out-of-bbox samples.
    inside = mask < 0.5
    out_ref[0:1, :] = jnp.where(inside, sdf, 100.0)
    out_ref[1:4, :] = jnp.where(inside, rgb, 0.0)


# ----------------------------------------------------------------------------
# Kernel 2: LaplaceDensity + volume rendering, gridded over rays.
#   vals (4, TILE_B, S) = [rgb_r; rgb_g; rgb_b; dist2cam]
#   out  (4, TILE_B)    = [rgb_r; rgb_g; rgb_b; depth]
# ----------------------------------------------------------------------------
def _render_kernel(beta_ref, sdf_ref, dists_ref, vals_ref, tri_ref, out_ref):
    beta = beta_ref[0]
    inv_beta = 1.0 / beta
    sdf = sdf_ref[...]                   # (TILE_B, S)
    dists = dists_ref[...]               # (TILE_B, S)

    # LaplaceDensity:  (1/beta) * (0.5 + 0.5 * sign(sdf) * expm1(-|sdf|/beta))
    # written in the exact branch form (avoids the exp(x)-1 cancellation):
    #   sdf >= 0:  0.5/beta * exp(-|sdf|/beta)
    #   sdf <  0:  1/beta - 0.5/beta * exp(-|sdf|/beta)
    e = 0.5 * inv_beta * jnp.exp(-jnp.abs(sdf) * inv_beta)
    dens = jnp.where(sdf >= 0.0, e, inv_beta - e)
    fe = dists * dens                    # free energy (TILE_B, S)

    # transmittance = exp(-cumsum([0, fe]))[:, :-1] == exp(-exclusive_cumsum(fe)).
    # Exclusive cumsum via MXU matmul against a resident strictly-upper-triangular matrix.
    cum_excl = jnp.dot(fe, tri_ref[...], preferred_element_type=jnp.float32)
    fg_trans = jnp.exp(-cum_excl)

    alpha = 1.0 - jnp.exp(-fe)
    weights = alpha * fg_trans           # (TILE_B, S)

    # weighted reductions along the lane (S) axis for rgb planes + depth together.
    out_ref[...] = jnp.sum(weights[None, :, :] * vals_ref[...], axis=-1)   # (4, TILE_B)


# ----------------------------------------------------------------------------
# Parameters (deterministic synthetic init; shapes follow the module __init__),
# pre-packed / pre-transposed into the fused channels-first layout, bf16 weights.
# ----------------------------------------------------------------------------
def init_params(key, hidden=HIDDEN, feat=FEAT):
    ks = jax.random.split(key, 9)
    f32 = jnp.float32
    bf16 = jnp.bfloat16

    def w(k, shape, scale):
        return jax.random.normal(k, shape, f32) * scale

    # logical (reference-style) weights
    w1 = w(ks[0], (3, hidden), 0.5)
    b1 = jnp.zeros((hidden,), f32)
    w_sdf = w(ks[1], (hidden, 1), 0.1)
    b_sdf = jnp.full((1,), 0.1, f32)
    w_feat = w(ks[2], (hidden, feat), 0.1)
    b_feat = jnp.zeros((feat,), f32)
    w_grad = w(ks[3], (hidden, 3), 0.1)
    b_grad = jnp.zeros((3,), f32)
    wc1_p = w(ks[4], (3, hidden), 0.3)
    wc1_g = w(ks[5], (3, hidden), 0.3)
    wc1_v = w(ks[6], (3, hidden), 0.3)
    wc1_f = w(ks[7], (feat, hidden), 0.1)
    bc1 = jnp.zeros((hidden,), f32)
    wc2 = w(ks[8], (hidden, 3), 0.1)
    bc2 = jnp.zeros((3,), f32)

    # pack into the fused channels-first layout
    w_in = jnp.zeros((hidden, 8), f32).at[:, 0:3].set(w1.T)                # (H, 8)
    w_head = (jnp.zeros((HEAD_W, hidden), f32)
              .at[0:1].set(w_sdf.T)
              .at[1:4].set(w_grad.T)
              .at[4:4 + feat].set(w_feat.T))                               # (128, H)
    b_head = (jnp.zeros((HEAD_W, 1), f32)
              .at[0:1, 0].set(b_sdf)
              .at[1:4, 0].set(b_grad)
              .at[4:4 + feat, 0].set(b_feat))
    wc_head = (jnp.zeros((hidden, HEAD_W), f32)
               .at[:, 1:4].set(wc1_g.T)
               .at[:, 4:4 + feat].set(wc1_f.T))                            # (H, 128)
    wc_in = (jnp.zeros((hidden, 8), f32)
             .at[:, 0:3].set(wc1_p.T)
             .at[:, 3:6].set(wc1_v.T))                                     # (H, 8)

    return {
        'w_in': w_in.astype(bf16),
        'b1': b1.reshape(hidden, 1),
        'w_head': w_head.astype(bf16),
        'b_head': b_head,
        'wc_head': wc_head.astype(bf16),
        'wc_in': wc_in.astype(bf16),
        'bc1': bc1.reshape(hidden, 1),
        'wc2': wc2.T.astype(bf16),          # (3, H)
        'bc2': bc2.reshape(3, 1),
        # LaplaceDensity parameter (param_init={'beta': 0.1}, beta_min=1e-4)
        'beta': jnp.asarray(0.1, f32),
        'beta_min': jnp.asarray(BETA_MIN, f32),
        # bbox
        'xyz_min': jnp.array([-1.0, -1.0, -1.0], f32),
        'xyz_max': jnp.array([1.0, 1.0, 1.0], f32),
    }


# ----------------------------------------------------------------------------
# Forward wrapper (== SingleScaleVolSDF.forward, eval mode / global_step=None).
# ----------------------------------------------------------------------------
def single_scale_volsdf_forward(params, rays_o, rays_d, viewdirs, near, far,
                                n_samples=500):
    f32 = jnp.float32
    B = rays_o.shape[0]
    S = n_samples

    # --- sample_ray (glue: tiny broadcasting math) ---
    t = jnp.linspace(0.0, 1.0, S, dtype=f32)
    z_vals = near + (far - near) * t[None, :]                               # (B, S)
    ray_pts = rays_o[:, None, :] + rays_d[:, None, :] * z_vals[..., None]   # (B, S, 3)
    mask_outbox = jnp.any((params['xyz_min'] > ray_pts)
                          | (ray_pts > params['xyz_max']), axis=-1)         # (B, S)
    dist2cam = jnp.linalg.norm(rays_o[:, None, :] - ray_pts, axis=-1)       # (B, S)

    # --- pack points channels-first: (8, N) = [pts; viewdirs; mask; pad] ---
    N = B * S
    pts_cf = ray_pts.reshape(N, 3).T.astype(f32)                            # (3, N)
    vdir_cf = jnp.broadcast_to(viewdirs[:, None, :],
                               (B, S, 3)).reshape(N, 3).T.astype(f32)       # (3, N)
    mask_cf = mask_outbox.reshape(1, N).astype(f32)                         # (1, N)
    x_packed = jnp.concatenate(
        [pts_cf, vdir_cf, mask_cf, jnp.zeros((1, N), f32)], axis=0)         # (8, N)

    n_pad = pl.cdiv(N, TILE) * TILE
    x_packed = jnp.pad(x_packed, ((0, 0), (0, n_pad - N)))

    weight_names = ['w_in', 'b1', 'w_head', 'b_head',
                    'wc_head', 'wc_in', 'bc1', 'wc2', 'bc2']
    weights = [params[n] for n in weight_names]

    x_spec = pl.BlockSpec((8, TILE), lambda i: (0, i))
    w_specs = [pl.BlockSpec(w.shape, lambda i: (0, 0)) for w in weights]

    net_out = pl.pallas_call(
        _network_kernel,
        grid=(n_pad // TILE,),
        in_specs=[x_spec] + w_specs,
        out_specs=pl.BlockSpec((4, TILE), lambda i: (0, i)),
        out_shape=jax.ShapeDtypeStruct((4, n_pad), f32),
        compiler_params=pltpu.CompilerParams(
            dimension_semantics=("parallel",),
            vmem_limit_bytes=32 * 1024 * 1024),
    )(x_packed, *weights)

    net = net_out[:, :N].reshape(4, B, S)
    sdfs = net[0]                                                            # (B, S)
    rgb_planes = net[1:4]                                                    # (3, B, S)

    # dists (glue): torch appends dists[..., -2:-1] (the second-to-last diff)
    d = z_vals[:, 1:] - z_vals[:, :-1]
    dists = jnp.concatenate([d, d[:, -2:-1]], axis=-1)                       # (B, S)

    # sample values packed lane-dense along S: [rgb_r; rgb_g; rgb_b; dist2cam]
    vals = jnp.concatenate([rgb_planes, dist2cam[None]], axis=0)             # (4, B, S)

    # strictly-upper-triangular cumsum matrix, built once in the wrapper
    row = jnp.arange(S)[:, None]
    col = jnp.arange(S)[None, :]
    tri = (row < col).astype(f32)                                            # (S, S)

    beta = (jnp.abs(params['beta']) + params['beta_min']).reshape(1).astype(f32)

    # --- ray-tiled render kernel ---
    TILE_B = 128 if B >= 128 else max(8, pl.cdiv(B, 8) * 8)
    b_pad = pl.cdiv(B, TILE_B) * TILE_B
    pad_b = b_pad - B
    sdfs_p = jnp.pad(sdfs, ((0, pad_b), (0, 0)))
    dists_p = jnp.pad(dists, ((0, pad_b), (0, 0)))      # zero dists -> zero weights for pad rays
    vals_p = jnp.pad(vals, ((0, 0), (0, pad_b), (0, 0)))

    out = pl.pallas_call(
        _render_kernel,
        grid=(b_pad // TILE_B,),
        in_specs=[pl.BlockSpec(memory_space=pltpu.MemorySpace.SMEM),          # beta
                  pl.BlockSpec((TILE_B, S), lambda i: (i, 0)),                # sdf
                  pl.BlockSpec((TILE_B, S), lambda i: (i, 0)),                # dists
                  pl.BlockSpec((4, TILE_B, S), lambda i: (0, i, 0)),          # vals
                  pl.BlockSpec((S, S), lambda i: (0, 0))],                    # tri (resident)
        out_specs=pl.BlockSpec((4, TILE_B), lambda i: (0, i)),
        out_shape=jax.ShapeDtypeStruct((4, b_pad), f32),
        compiler_params=pltpu.CompilerParams(
            dimension_semantics=("parallel",),
            vmem_limit_bytes=32 * 1024 * 1024),
    )(beta, sdfs_p, dists_p, vals_p, tri)

    rgb = out[0:3, :B].T                                                     # (B, 3)
    depth = out[3, :B]                                                       # (B,)
    return {'rgb': rgb, 'depth': depth}


if __name__ == "__main__":
    key = jax.random.PRNGKey(0)
    k_param, k_o, k_d = jax.random.split(key, 3)
    params = init_params(k_param)

    B = 2
    rays_o = jax.random.uniform(k_o, (B, 3), jnp.float32, -0.2, 0.2)
    rays_d = jax.random.normal(k_d, (B, 3), jnp.float32)
    rays_d = rays_d / jnp.linalg.norm(rays_d, axis=-1, keepdims=True)
    viewdirs = rays_d
    near = jnp.full((B, 1), 0.2, jnp.float32)
    far = jnp.full((B, 1), 2.5, jnp.float32)

    # original module hard-codes N_samples=500; use a small S=16 for the test run
    out = single_scale_volsdf_forward(params, rays_o, rays_d, viewdirs,
                                      near, far, n_samples=16)
    out = jax.block_until_ready(out)
    assert out['rgb'].shape == (B, 3)
    assert out['depth'].shape == (B,)
    assert bool(jnp.all(jnp.isfinite(out['rgb']))) and bool(jnp.all(jnp.isfinite(out['depth'])))
    print("KERNEL_OK")
</pallas_src>

<mosaic_0001>
module attributes {stable_mosaic.version = 11 : i64} {
  func.func @_network_kernel(%arg0: i32, %arg1: memref<8x1024xf32, #tpu.memory_space<vmem>>, %arg2: memref<128x8xbf16, #tpu.memory_space<vmem>>, %arg3: memref<128x1xf32, #tpu.memory_space<vmem>>, %arg4: memref<128x128xbf16, #tpu.memory_space<vmem>>, %arg5: memref<128x1xf32, #tpu.memory_space<vmem>>, %arg6: memref<128x128xbf16, #tpu.memory_space<vmem>>, %arg7: memref<128x8xbf16, #tpu.memory_space<vmem>>, %arg8: memref<128x1xf32, #tpu.memory_space<vmem>>, %arg9: memref<3x128xbf16, #tpu.memory_space<vmem>>, %arg10: memref<3x1xf32, #tpu.memory_space<vmem>>, %arg11: memref<4x1024xf32, #tpu.memory_space<vmem>>) attributes {dimension_semantics = [#tpu.dimension_semantics<parallel>], iteration_bounds = array<i64: 1>, scalar_prefetch = 0 : i64, scratch_operands = 0 : i64, tpu.core_type = #tpu.core_type<tc>, window_params = [{transform_indices = @transform_0, window_bounds = array<i64: 8, 1024>}, {pipeline_mode = #tpu.pipeline_mode<synchronous>, transform_indices = @transform_1, window_bounds = array<i64: 128, 8>}, {pipeline_mode = #tpu.pipeline_mode<synchronous>, transform_indices = @transform_2, window_bounds = array<i64: 128, 1>}, {pipeline_mode = #tpu.pipeline_mode<synchronous>, transform_indices = @transform_3, window_bounds = array<i64: 128, 128>}, {pipeline_mode = #tpu.pipeline_mode<synchronous>, transform_indices = @transform_4, window_bounds = array<i64: 128, 1>}, {pipeline_mode = #tpu.pipeline_mode<synchronous>, transform_indices = @transform_5, window_bounds = array<i64: 128, 128>}, {pipeline_mode = #tpu.pipeline_mode<synchronous>, transform_indices = @transform_6, window_bounds = array<i64: 128, 8>}, {pipeline_mode = #tpu.pipeline_mode<synchronous>, transform_indices = @transform_7, window_bounds = array<i64: 128, 1>}, {pipeline_mode = #tpu.pipeline_mode<synchronous>, transform_indices = @transform_8, window_bounds = array<i64: 3, 128>}, {pipeline_mode = #tpu.pipeline_mode<synchronous>, transform_indices = @transform_9, window_bounds = array<i64: 3, 1>}, {transform_indices = @transform_10, window_bounds = array<i64: 4, 1024>}]} {
    %c0 = arith.constant 0 : index
    %c0_0 = arith.constant 0 : index
    %0 = vector.load %arg1[%c0, %c0_0] : memref<8x1024xf32, #tpu.memory_space<vmem>>, vector<8x1024xf32>
    %1 = arith.truncf %0 : vector<8x1024xf32> to vector<8x1024xbf16>
    %2 = vector.extract_strided_slice %0 {offsets = [6, 0], sizes = [1, 1024], strides = [1, 1]} : vector<8x1024xf32> to vector<1x1024xf32>
    %c0_1 = arith.constant 0 : index
    %c0_2 = arith.constant 0 : index
    %3 = vector.load %arg2[%c0_1, %c0_2] : memref<128x8xbf16, #tpu.memory_space<vmem>>, vector<128x8xbf16>
    %cst = arith.constant dense<0.000000e+00> : vector<128x1024xf32>
    %4 = tpu.matmul %3, %1, %cst {dimension_numbers = #tpu.dot_dimension_numbers<[1], [0], [0], [1], [0, 0, 1, 1], [], []>} : vector<128x8xbf16>, vector<8x1024xbf16>, vector<128x1024xf32> -> vector<128x1024xf32>
    %c0_3 = arith.constant 0 : index
    %c0_4 = arith.constant 0 : index
    %5 = vector.load %arg3[%c0_3, %c0_4] : memref<128x1xf32, #tpu.memory_space<vmem>>, vector<128x1xf32>
    %6 = vector.broadcast %5 : vector<128x1xf32> to vector<128x1024xf32>
    %7 = arith.addf %4, %6 : vector<128x1024xf32>
    %cst_5 = arith.constant 0.000000e+00 : f32
    %8 = vector.broadcast %cst_5 : f32 to vector<128x1024xf32>
    %9 = arith.maximumf %7, %8 : vector<128x1024xf32>
    %c0_6 = arith.constant 0 : index
    %c0_7 = arith.constant 0 : index
    %10 = vector.load %arg4[%c0_6, %c0_7] : memref<128x128xbf16, #tpu.memory_space<vmem>>, vector<128x128xbf16>
    %11 = arith.truncf %9 : vector<128x1024xf32> to vector<128x1024xbf16>
    %cst_8 = arith.constant dense<0.000000e+00> : vector<128x1024xf32>
    %12 = tpu.matmul %10, %11, %cst_8 {dimension_numbers = #tpu.dot_dimension_numbers<[1], [0], [0], [1], [0, 0, 1, 1], [], []>} : vector<128x128xbf16>, vector<128x1024xbf16>, vector<128x1024xf32> -> vector<128x1024xf32>
    %c0_9 = arith.constant 0 : index
    %c0_10 = arith.constant 0 : index
    %13 = vector.load %arg5[%c0_9, %c0_10] : memref<128x1xf32, #tpu.memory_space<vmem>>, vector<128x1xf32>
    %14 = vector.broadcast %13 : vector<128x1xf32> to vector<128x1024xf32>
    %15 = arith.addf %12, %14 : vector<128x1024xf32>
    %16 = vector.extract_strided_slice %15 {offsets = [0, 0], sizes = [1, 1024], strides = [1, 1]} : vector<128x1024xf32> to vector<1x1024xf32>
    %c0_11 = arith.constant 0 : index
    %c0_12 = arith.constant 0 : index
    %17 = vector.load %arg6[%c0_11, %c0_12] : memref<128x128xbf16, #tpu.memory_space<vmem>>, vector<128x128xbf16>
    %18 = arith.truncf %15 : vector<128x1024xf32> to vector<128x1024xbf16>
    %cst_13 = arith.constant dense<0.000000e+00> : vector<128x1024xf32>
    %19 = tpu.matmul %17, %18, %cst_13 {dimension_numbers = #tpu.dot_dimension_numbers<[1], [0], [0], [1], [0, 0, 1, 1], [], []>} : vector<128x128xbf16>, vector<128x1024xbf16>, vector<128x1024xf32> -> vector<128x1024xf32>
    %c0_14 = arith.constant 0 : index
    %c0_15 = arith.constant 0 : index
    %20 = vector.load %arg7[%c0_14, %c0_15] : memref<128x8xbf16, #tpu.memory_space<vmem>>, vector<128x8xbf16>
    %cst_16 = arith.constant dense<0.000000e+00> : vector<128x1024xf32>
    %21 = tpu.matmul %20, %1, %cst_16 {dimension_numbers = #tpu.dot_dimension_numbers<[1], [0], [0], [1], [0, 0, 1, 1], [], []>} : vector<128x8xbf16>, vector<8x1024xbf16>, vector<128x1024xf32> -> vector<128x1024xf32>
    %22 = arith.addf %19, %21 : vector<128x1024xf32>
    %c0_17 = arith.constant 0 : index
    %c0_18 = arith.constant 0 : index
    %23 = vector.load %arg8[%c0_17, %c0_18] : memref<128x1xf32, #tpu.memory_space<vmem>>, vector<128x1xf32>
    %24 = vector.broadcast %23 : vector<128x1xf32> to vector<128x1024xf32>
    %25 = arith.addf %22, %24 : vector<128x1024xf32>
    %cst_19 = arith.constant 0.000000e+00 : f32
    %26 = vector.broadcast %cst_19 : f32 to vector<128x1024xf32>
    %27 = arith.maximumf %25, %26 : vector<128x1024xf32>
    %c0_20 = arith.constant 0 : index
    %c0_21 = arith.constant 0 : index
    %28 = vector.load %arg9[%c0_20, %c0_21] : memref<3x128xbf16, #tpu.memory_space<vmem>>, vector<3x128xbf16>
    %29 = arith.truncf %27 : vector<128x1024xf32> to vector<128x1024xbf16>
    %cst_22 = arith.constant dense<0.000000e+00> : vector<3x1024xf32>
    %30 = tpu.matmul %28, %29, %cst_22 {dimension_numbers = #tpu.dot_dimension_numbers<[1], [0], [0], [1], [0, 0, 1, 1], [], []>} : vector<3x128xbf16>, vector<128x1024xbf16>, vector<3x1024xf32> -> vector<3x1024xf32>
    %c0_23 = arith.constant 0 : index
    %c0_24 = arith.constant 0 : index
    %31 = vector.load %arg10[%c0_23, %c0_24] : memref<3x1xf32, #tpu.memory_space<vmem>>, vector<3x1xf32>
    %32 = vector.broadcast %31 : vector<3x1xf32> to vector<3x1024xf32>
    %33 = arith.addf %30, %32 : vector<3x1024xf32>
    %34 = arith.negf %33 : vector<3x1024xf32>
    %35 = math.exp %34 : vector<3x1024xf32>
    %cst_25 = arith.constant 1.000000e+00 : f32
    %36 = vector.broadcast %cst_25 : f32 to vector<3x1024xf32>
    %37 = arith.addf %36, %35 : vector<3x1024xf32>
    %38 = arith.divf %36, %37 : vector<3x1024xf32>
    %cst_26 = arith.constant 5.000000e-01 : f32
    %39 = vector.broadcast %cst_26 : f32 to vector<1x1024xf32>
    %40 = arith.cmpf olt, %2, %39 : vector<1x1024xf32>
    %cst_27 = arith.constant 1.000000e+02 : f32
    %41 = vector.broadcast %cst_27 : f32 to vector<1x1024xf32>
    %42 = arith.select %40, %16, %41 : vector<1x1024xi1>, vector<1x1024xf32>
    %c0_28 = arith.constant 0 : index
    %c0_29 = arith.constant 0 : index
    %43 = vector.load %arg11[%c0_28, %c0_29] : memref<4x1024xf32, #tpu.memory_space<vmem>>, vector<1x1024xf32>
    tpu.vector_store %arg11[%c0_28, %c0_29], %42 {strides = array<i32>} : memref<4x1024xf32, #tpu.memory_space<vmem>>, vector<1x1024xf32>,
    %cst_30 = arith.constant 0.000000e+00 : f32
    %44 = vector.shape_cast %40 : vector<1x1024xi1> to vector<1x1024xi1>
    %45 = vector.broadcast %44 : vector<1x1024xi1> to vector<3x1024xi1>
    %46 = vector.broadcast %cst_30 : f32 to vector<3x1024xf32>
    %47 = arith.select %45, %38, %46 : vector<3x1024xi1>, vector<3x1024xf32>
    %c1 = arith.constant 1 : index
    %c0_31 = arith.constant 0 : index
    %48 = vector.load %arg11[%c1, %c0_31] : memref<4x1024xf32, #tpu.memory_space<vmem>>, vector<3x1024xf32>
    tpu.vector_store %arg11[%c1, %c0_31], %47 {strides = array<i32>} : memref<4x1024xf32, #tpu.memory_space<vmem>>, vector<3x1024xf32>,
    return
  }
  func.func @transform_0(%arg0: i32) -> (i32, i32) {
    %c0_i32 = arith.constant 0 : i32
    %c0_i32_0 = arith.constant 0 : i32
    return %c0_i32, %arg0 : i32, i32
  }
  func.func @transform_1(%arg0: i32) -> (i32, i32) {
    %c0_i32 = arith.constant 0 : i32
    %c0_i32_0 = arith.constant 0 : i32
    %c0_i32_1 = arith.constant 0 : i32
    return %c0_i32, %c0_i32_0 : i32, i32
  }
  func.func @transform_2(%arg0: i32) -> (i32, i32) {
    %c0_i32 = arith.constant 0 : i32
    %c0_i32_0 = arith.constant 0 : i32
    %c0_i32_1 = arith.constant 0 : i32
    return %c0_i32, %c0_i32_0 : i32, i32
  }
  func.func @transform_3(%arg0: i32) -> (i32, i32) {
    %c0_i32 = arith.constant 0 : i32
    %c0_i32_0 = arith.constant 0 : i32
    %c0_i32_1 = arith.constant 0 : i32
    return %c0_i32, %c0_i32_0 : i32, i32
  }
  func.func @transform_4(%arg0: i32) -> (i32, i32) {
    %c0_i32 = arith.constant 0 : i32
    %c0_i32_0 = arith.constant 0 : i32
    %c0_i32_1 = arith.constant 0 : i32
    return %c0_i32, %c0_i32_0 : i32, i32
  }
  func.func @transform_5(%arg0: i32) -> (i32, i32) {
    %c0_i32 = arith.constant 0 : i32
    %c0_i32_0 = arith.constant 0 : i32
    %c0_i32_1 = arith.constant 0 : i32
    return %c0_i32, %c0_i32_0 : i32, i32
  }
  func.func @transform_6(%arg0: i32) -> (i32, i32) {
    %c0_i32 = arith.constant 0 : i32
    %c0_i32_0 = arith.constant 0 : i32
    %c0_i32_1 = arith.constant 0 : i32
    return %c0_i32, %c0_i32_0 : i32, i32
  }
  func.func @transform_7(%arg0: i32) -> (i32, i32) {
    %c0_i32 = arith.constant 0 : i32
    %c0_i32_0 = arith.constant 0 : i32
    %c0_i32_1 = arith.constant 0 : i32
    return %c0_i32, %c0_i32_0 : i32, i32
  }
  func.func @transform_8(%arg0: i32) -> (i32, i32) {
    %c0_i32 = arith.constant 0 : i32
    %c0_i32_0 = arith.constant 0 : i32
    %c0_i32_1 = arith.constant 0 : i32
    return %c0_i32, %c0_i32_0 : i32, i32
  }
  func.func @transform_9(%arg0: i32) -> (i32, i32) {
    %c0_i32 = arith.constant 0 : i32
    %c0_i32_0 = arith.constant 0 : i32
    %c0_i32_1 = arith.constant 0 : i32
    return %c0_i32, %c0_i32_0 : i32, i32
  }
  func.func @transform_10(%arg0: i32) -> (i32, i32) {
    %c0_i32 = arith.constant 0 : i32
    %c0_i32_0 = arith.constant 0 : i32
    return %c0_i32, %arg0 : i32, i32
  }
}

</mosaic_0001>

<llo_original>
// kernel: tpu_custom_call.1
$region0: #{tpu_custom_call.1}
  #allocation0 [shape = 'u32[]', space=smem, size = 0x4, offset = 0x4, fixed_abs, tag = 'smem constant byte address 0x4 - core index']
  #allocation1 [shape = 'u32[144,128]{1,0:T(1,128)}', space=vmem, size = 0x12000, scoped, tag = 'internal scratch']
  %s0 = inlined_call_operand.vmem [shape: f32[8,1024], index: 0, kind: input, shape index: {}]
  %s1 = inlined_call_operand.vmem [shape: bf16[128,8], index: 1, kind: input, shape index: {}]
  %s2 = inlined_call_operand.vmem [shape: f32[128,1], index: 2, kind: input, shape index: {}]
  %s3 = inlined_call_operand.vmem [shape: bf16[128,128], index: 3, kind: input, shape index: {}]
  %s4 = inlined_call_operand.vmem [shape: f32[128,1], index: 4, kind: input, shape index: {}]
  %s5 = inlined_call_operand.vmem [shape: bf16[128,128], index: 5, kind: input, shape index: {}]
  %s6 = inlined_call_operand.vmem [shape: bf16[128,8], index: 6, kind: input, shape index: {}]
  %s7 = inlined_call_operand.vmem [shape: f32[128,1], index: 7, kind: input, shape index: {}]
  %s8 = inlined_call_operand.vmem [shape: bf16[3,128], index: 8, kind: input, shape index: {}]
  %s9 = inlined_call_operand.vmem [shape: f32[3,1], index: 9, kind: input, shape index: {}]
  %s10 = inlined_call_operand.hbm [shape: f32[4,1024], index: 10, kind: output, shape index: {}]
  %s11 = sld [smem:[#allocation0]]
  $region50: #{tpu_custom_call.1} parent=0
    _
  %s13 = ssub.s32 1, %s11
  %s14 = scalar_select 0, %s13, %s11
  $region1: #{tpu_custom_call.1} parent=0
    #allocation2 [shape = 'u8[16384]{0}', space=vmem, size = 0x4000, scoped, tag = 'output window, operand 0, single buffered']
    #allocation3 [shape = 's32[1]{0}', space=sflag, size = 0x4, scoped, tag = 'scoped memory for tpu_custom_call.1']
    %15 = vsyncpa [#allocation3], 0
    // Predicated region
    $region2: #{tpu_custom_call.1} parent=1 // pred_check
      _
    $region3: #{tpu_custom_call.1} parent=1 // pred_check_branch
      %17 = sbr.rel (0) target = $region5
    $region4: #{tpu_custom_call.1} parent=1 // pred_region
      _
    $region5: #{tpu_custom_call.1} parent=1 // pred_fallthru
      _
    // Predicated region
    $region6: #{tpu_custom_call.1} parent=1 // pred_check
      _
    $region7: #{tpu_custom_call.1} parent=1 // pred_check_branch
      %19 = sbr.rel (0) target = $region9
    $region8: #{tpu_custom_call.1} parent=1 // pred_region
      _
    $region9: #{tpu_custom_call.1} parent=1 // pred_fallthru
      _
    // Predicated region
    $region10: #{tpu_custom_call.1} parent=1 // pred_check
      _
    $region11: #{tpu_custom_call.1} parent=1 // pred_check_branch
      %21 = sbr.rel (0) target = $region13
    $region12: #{tpu_custom_call.1} parent=1 // pred_region
      _
    $region13: #{tpu_custom_call.1} parent=1 // pred_fallthru
      _
    // Predicated region
    $region14: #{tpu_custom_call.1} parent=1 // pred_check
      _
    $region15: #{tpu_custom_call.1} parent=1 // pred_check_branch
      %23 = sbr.rel (0) target = $region17
    $region16: #{tpu_custom_call.1} parent=1 // pred_region
      _
    $region17: #{tpu_custom_call.1} parent=1 // pred_fallthru
      _
    // Predicated region
    $region18: #{tpu_custom_call.1} parent=1 // pred_check
      _
    $region19: #{tpu_custom_call.1} parent=1 // pred_check_branch
      %25 = sbr.rel (0) target = $region21
    $region20: #{tpu_custom_call.1} parent=1 // pred_region
      _
    $region21: #{tpu_custom_call.1} parent=1 // pred_fallthru
      _
    // Predicated region
    $region22: #{tpu_custom_call.1} parent=1 // pred_check
      _
    $region23: #{tpu_custom_call.1} parent=1 // pred_check_branch
      %27 = sbr.rel (0) target = $region25
    $region24: #{tpu_custom_call.1} parent=1 // pred_region
      _
    $region25: #{tpu_custom_call.1} parent=1 // pred_fallthru
      _
    // Predicated region
    $region26: #{tpu_custom_call.1} parent=1 // pred_check
      _
    $region27: #{tpu_custom_call.1} parent=1 // pred_check_branch
      %29 = sbr.rel (0) target = $region29
    $region28: #{tpu_custom_call.1} parent=1 // pred_region
      _
    $region29: #{tpu_custom_call.1} parent=1 // pred_fallthru
      _
    // Predicated region
    $region30: #{tpu_custom_call.1} parent=1 // pred_check
      _
    $region31: #{tpu_custom_call.1} parent=1 // pred_check_branch
      %31 = sbr.rel (0) target = $region33
    $region32: #{tpu_custom_call.1} parent=1 // pred_region
      _
    $region33: #{tpu_custom_call.1} parent=1 // pred_fallthru
      _
    // Predicated region
    $region34: #{tpu_custom_call.1} parent=1 // pred_check
      _
    $region35: #{tpu_custom_call.1} parent=1 // pred_check_branch
      %33 = sbr.rel (0) target = $region37
    $region36: #{tpu_custom_call.1} parent=1 // pred_region
      _
    $region37: #{tpu_custom_call.1} parent=1 // pred_fallthru
      _
    // Predicated region
    $region38: #{tpu_custom_call.1} parent=1 // pred_check
      _
    $region39: #{tpu_custom_call.1} parent=1 // pred_check_branch
      %35 = sbr.rel (0) target = $region41
    $region40: #{tpu_custom_call.1} parent=1 // pred_region
      _
    $region41: #{tpu_custom_call.1} parent=1 // pred_fallthru
      _
    %v37 = vld [vmem:[%s0] sm:$0xff]
    %v38 = vld [vmem:[%s0 + $0x8] sm:$0xff]
    %v39 = vld [vmem:[%s0 + $0x10] sm:$0xff]
    %v40 = vld [vmem:[%s0 + $0x18] sm:$0xff]
    %v41 = vld [vmem:[%s0 + $0x20] sm:$0xff]
    %v42 = vld [vmem:[%s0 + $0x28] sm:$0xff]
    %v43 = vld [vmem:[%s0 + $0x30] sm:$0xff]
    %v44 = vld [vmem:[%s0 + $0x38] sm:$0xff]
    %v45 = vpack.c.bf16 %v37, %v37
    %v46 = vpack.c.bf16 %v38, %v38
    %v47 = vpack.c.bf16 %v39, %v39
    %v48 = vpack.c.bf16 %v40, %v40
    %v49 = vpack.c.bf16 %v41, %v41
    %v50 = vpack.c.bf16 %v42, %v42
    %v51 = vpack.c.bf16 %v43, %v43
    %v52 = vpack.c.bf16 %v44, %v44
    %v53 = vld [vmem:[%s1] sm:$0xf]
    %v54 = vld [vmem:[%s1 + $0x4] sm:$0xf]
    %v55 = vld [vmem:[%s1 + $0x8] sm:$0xf]
    %v56 = vld [vmem:[%s1 + $0xc] sm:$0xf]
    %v57 = vld [vmem:[%s1 + $0x10] sm:$0xf]
    %v58 = vld [vmem:[%s1 + $0x14] sm:$0xf]
    %v59 = vld [vmem:[%s1 + $0x18] sm:$0xf]
    %v60 = vld [vmem:[%s1 + $0x1c] sm:$0xf]
    %v61 = vld [vmem:[%s1 + $0x20] sm:$0xf]
    %v62 = vld [vmem:[%s1 + $0x24] sm:$0xf]
    %v63 = vld [vmem:[%s1 + $0x28] sm:$0xf]
    %v64 = vld [vmem:[%s1 + $0x2c] sm:$0xf]
    %v65 = vld [vmem:[%s1 + $0x30] sm:$0xf]
    %v66 = vld [vmem:[%s1 + $0x34] sm:$0xf]
    %v67 = vld [vmem:[%s1 + $0x38] sm:$0xf]
    %v68 = vld [vmem:[%s1 + $0x3c] sm:$0xf]
    %v69 = vld [vmem:[%s2] sm:$0xff]
    %v70 = vld [vmem:[%s2 + $0x8] sm:$0xff]
    %v71 = vld [vmem:[%s2 + $0x10] sm:$0xff]
    %v72 = vld [vmem:[%s2 + $0x18] sm:$0xff]
    %v73 = vld [vmem:[%s2 + $0x20] sm:$0xff]
    %v74 = vld [vmem:[%s2 + $0x28] sm:$0xff]
    %v75 = vld [vmem:[%s2 + $0x30] sm:$0xff]
    %v76 = vld [vmem:[%s2 + $0x38] sm:$0xff]
    %v77 = vld [vmem:[%s2 + $0x40] sm:$0xff]
    %v78 = vld [vmem:[%s2 + $0x48] sm:$0xff]
    %v79 = vld [vmem:[%s2 + $0x50] sm:$0xff]
    %v80 = vld [vmem:[%s2 + $0x58] sm:$0xff]
    %v81 = vld [vmem:[%s2 + $0x60] sm:$0xff]
    %v82 = vld [vmem:[%s2 + $0x68] sm:$0xff]
    %v83 = vld [vmem:[%s2 + $0x70] sm:$0xff]
    %v84 = vld [vmem:[%s2 + $0x78] sm:$0xff]
    %86 = vset.pattern.permute.xlu0 0
    %87 = vperm.xlu0 %86, %v69
    %v88 = vpop.permute.xlu0 %87
    %91 = vset.pattern.permute.xlu0 0
    %92 = vperm.xlu0 %91, %v70
    %v93 = vpop.permute.xlu0 %92
    %96 = vset.pattern.permute.xlu0 0
    %97 = vperm.xlu0 %96, %v71
    %v98 = vpop.permute.xlu0 %97
    %101 = vset.pattern.permute.xlu0 0
    %102 = vperm.xlu0 %101, %v72
    %v103 = vpop.permute.xlu0 %102
    %106 = vset.pattern.permute.xlu0 0
    %107 = vperm.xlu0 %106, %v73
    %v108 = vpop.permute.xlu0 %107
    %111 = vset.pattern.permute.xlu0 0
    %112 = vperm.xlu0 %111, %v74
    %v113 = vpop.permute.xlu0 %112
    %116 = vset.pattern.permute.xlu0 0
    %117 = vperm.xlu0 %116, %v75
    %v118 = vpop.permute.xlu0 %117
    %121 = vset.pattern.permute.xlu0 0
    %122 = vperm.xlu0 %121, %v76
    %v123 = vpop.permute.xlu0 %122
    %126 = vset.pattern.permute.xlu0 0
    %127 = vperm.xlu0 %126, %v77
    %v128 = vpop.permute.xlu0 %127
    %131 = vset.pattern.permute.xlu0 0
    %132 = vperm.xlu0 %131, %v78
    %v133 = vpop.permute.xlu0 %132
    %136 = vset.pattern.permute.xlu0 0
    %137 = vperm.xlu0 %136, %v79
    %v138 = vpop.permute.xlu0 %137
    %141 = vset.pattern.permute.xlu0 0
    %142 = vperm.xlu0 %141, %v80
    %v143 = vpop.permute.xlu0 %142
    %146 = vset.pattern.permute.xlu0 0
    %147 = vperm.xlu0 %146, %v81
    %v148 = vpop.permute.xlu0 %147
    %151 = vset.pattern.permute.xlu0 0
    %152 = vperm.xlu0 %151, %v82
    %v153 = vpop.permute.xlu0 %152
    %156 = vset.pattern.permute.xlu0 0
    %157 = vperm.xlu0 %156, %v83
    %v158 = vpop.permute.xlu0 %157
    %161 = vset.pattern.permute.xlu0 0
    %162 = vperm.xlu0 %161, %v84
    %v163 = vpop.permute.xlu0 %162
    %v181 = vunpack.c.l.b16 %v53
    %v182 = vunpack.c.l.b16 %v54
    %v183 = vunpack.c.l.b16 %v55
    %v184 = vunpack.c.l.b16 %v56
    %v185 = vunpack.c.l.b16 %v57
    %v186 = vunpack.c.l.b16 %v58
    %v187 = vunpack.c.l.b16 %v59
    %v188 = vunpack.c.l.b16 %v60
    %v189 = vunpack.c.l.b16 %v61
    %v190 = vunpack.c.l.b16 %v62
    %v191 = vunpack.c.l.b16 %v63
    %v192 = vunpack.c.l.b16 %v64
    %v193 = vunpack.c.l.b16 %v65
    %v194 = vunpack.c.l.b16 %v66
    %v195 = vunpack.c.l.b16 %v67
    %v196 = vunpack.c.l.b16 %v68
    %v197 = vpack.c.b16 %v182, %v181
    %v198 = vpack.c.b16 %v184, %v183
    %v199 = vpack.c.b16 %v186, %v185
    %v200 = vpack.c.b16 %v188, %v187
    %v201 = vpack.c.b16 %v190, %v189
    %v202 = vpack.c.b16 %v192, %v191
    %v203 = vpack.c.b16 %v194, %v193
    %v204 = vpack.c.b16 %v196, %v195
    %vm205 = vcmask 64512
    %v207 = vsel %vm205, %v197, 0
    %v210 = vsel %vm205, %v198, 0
    %v213 = vsel %vm205, %v199, 0
    %v216 = vsel %vm205, %v200, 0
    %v219 = vsel %vm205, %v201, 0
    %v222 = vsel %vm205, %v202, 0
    %v225 = vsel %vm205, %v203, 0
    %v228 = vsel %vm205, %v204, 0
    %vm230 = vcmask 1043456
    %v232 = vsel %vm230, %v45, 0
    %v235 = vsel %vm230, %v46, 0
    %v238 = vsel %vm230, %v47, 0
    %v241 = vsel %vm230, %v48, 0
    %v244 = vsel %vm230, %v49, 0
    %v247 = vsel %vm230, %v50, 0
    %v250 = vsel %vm230, %v51, 0
    %v253 = vsel %vm230, %v52, 0
    %255 = vmatprep.subr.bf16.mxu0 %v235
    %256 = vmatpush1.bf16.msra.mxu0 %v232
    %257 = vmatprep.subr.bf16.mxu0 0
    %258 = vmatpush1.bf16.msra.mxu0 0
    %259 = vmatprep.subr.bf16.mxu0 0
    %260 = vmatpush1.bf16.msra.mxu0 0
    %261 = vmatprep.subr.bf16.mxu0 0
    %262 = vmatpush1.bf16.msra.mxu0 0
    %263 = vmatprep.subr.bf16.mxu0 0
    %264 = vmatpush1.bf16.msra.mxu0 0
    %265 = vmatprep.subr.bf16.mxu0 0
    %266 = vmatpush1.bf16.msra.mxu0 0
    %267 = vmatprep.subr.bf16.mxu0 0
    %268 = vmatpush1.bf16.msra.mxu0 0
    %269 = vmatprep.subr.bf16.mxu0 0
    %270 = vmatpush1.bf16.msra.mxu0 0
    %271 = vmatprep.subr.bf16.mxu0 0
    %272 = vmatpush1.bf16.msra.mxu0 0
    %273 = vmatprep.subr.bf16.mxu0 0
    %274 = vmatpush1.bf16.msra.mxu0 0
    %275 = vmatprep.subr.bf16.mxu0 0
    %276 = vmatpush1.bf16.msra.mxu0 0
    %277 = vmatprep.subr.bf16.mxu0 0
    %278 = vmatpush1.bf16.msra.mxu0 0
    %279 = vmatprep.subr.bf16.mxu0 0
    %280 = vmatpush1.bf16.msra.mxu0 0
    %281 = vmatprep.subr.bf16.mxu0 0
    %282 = vmatpush1.bf16.msra.mxu0 0
    %283 = vmatprep.subr.bf16.mxu0 0
    %284 = vmatpush1.bf16.msra.mxu0 0
    %285 = vmatprep.subr.bf16.mxu0 0
    %286 = vmatpush1.bf16.msra.mxu0 0
    %287 = vmatprep.mubr.bf16.mxu0 0
    %288 = vmatmul.mubr.bf16.gmra.mrb[0].mxu0 %v207
    %v289 = vpop.f32.mrb[0].mxu0
    %v290 = vadd.f32 %v88, %v289
    %v291 = vpop.f32.mrb[0].mxu0
    %v292 = vadd.f32 %v88, %v291
    %v293 = vpop.f32.mrb[0].mxu0
    %v294 = vadd.f32 %v93, %v293
    %v295 = vpop.f32.mrb[0].mxu0
    %v296 = vadd.f32 %v93, %v295
    %297 = vmatprep.mubr.bf16.mxu0 0
    %298 = vmatmul.mubr.bf16.gmra.mrb[0].mxu0 %v210
    %v299 = vpop.f32.mrb[0].mxu0
    %v300 = vadd.f32 %v98, %v299
    %v301 = vpop.f32.mrb[0].mxu0
    %v302 = vadd.f32 %v98, %v301
    %v303 = vpop.f32.mrb[0].mxu0
    %v304 = vadd.f32 %v103, %v303
    %v305 = vpop.f32.mrb[0].mxu0
    %v306 = vadd.f32 %v103, %v305
    %307 = vmatprep.mubr.bf16.mxu0 0
    %308 = vmatmul.mubr.bf16.gmra.mrb[0].mxu0 %v213
    %v309 = vpop.f32.mrb[0].mxu0
    %v310 = vadd.f32 %v108, %v309
    %v311 = vpop.f32.mrb[0].mxu0
    %v312 = vadd.f32 %v108, %v311
    %v313 = vpop.f32.mrb[0].mxu0
    %v314 = vadd.f32 %v113, %v313
    %v315 = vpop.f32.mrb[0].mxu0
    %v316 = vadd.f32 %v113, %v315
    %317 = vmatprep.mubr.bf16.mxu0 0
    %318 = vmatmul.mubr.bf16.gmra.mrb[0].mxu0 %v216
    %v319 = vpop.f32.mrb[0].mxu0
    %v320 = vadd.f32 %v118, %v319
    %v321 = vpop.f32.mrb[0].mxu0
    %v322 = vadd.f32 %v118, %v321
    %v323 = vpop.f32.mrb[0].mxu0
    %v324 = vadd.f32 %v123, %v323
    %v325 = vpop.f32.mrb[0].mxu0
    %v326 = vadd.f32 %v123, %v325
    %327 = vmatprep.mubr.bf16.mxu0 0
    %328 = vmatmul.mubr.bf16.gmra.mrb[0].mxu0 %v219
    %v329 = vpop.f32.mrb[0].mxu0
    %v330 = vadd.f32 %v128, %v329
    %v331 = vpop.f32.mrb[0].mxu0
    %v332 = vadd.f32 %v128, %v331
    %v333 = vpop.f32.mrb[0].mxu0
    %v334 = vadd.f32 %v133, %v333
    %v335 = vpop.f32.mrb[0].mxu0
    %v336 = vadd.f32 %v133, %v335
    %337 = vmatprep.mubr.bf16.mxu0 0
    %338 = vmatmul.mubr.bf16.gmra.mrb[0].mxu0 %v222
    %v339 = vpop.f32.mrb[0].mxu0
    %v340 = vadd.f32 %v138, %v339
    %v341 = vpop.f32.mrb[0].mxu0
    %v342 = vadd.f32 %v138, %v341
    %v343 = vpop.f32.mrb[0].mxu0
    %v344 = vadd.f32 %v143, %v343
    %v345 = vpop.f32.mrb[0].mxu0
    %v346 = vadd.f32 %v143, %v345
    %347 = vmatprep.mubr.bf16.mxu0 0
    %348 = vmatmul.mubr.bf16.gmra.mrb[0].mxu0 %v225
    %v349 = vpop.f32.mrb[0].mxu0
    %v350 = vadd.f32 %v148, %v349
    %v351 = vpop.f32.mrb[0].mxu0
    %v352 = vadd.f32 %v148, %v351
    %v353 = vpop.f32.mrb[0].mxu0
    %v354 = vadd.f32 %v153, %v353
    %v355 = vpop.f32.mrb[0].mxu0
    %v356 = vadd.f32 %v153, %v355
    %357 = vmatprep.mubr.bf16.mxu0 0
    %358 = vmatmul.mubr.bf16.gmra.mrb[0].mxu0 %v228
    %v359 = vpop.f32.mrb[0].mxu0
    %v360 = vadd.f32 %v158, %v359
    %v361 = vpop.f32.mrb[0].mxu0
    %v362 = vadd.f32 %v158, %v361
    %v363 = vpop.f32.mrb[0].mxu0
    %v364 = vadd.f32 %v163, %v363
    %v365 = vpop.f32.mrb[0].mxu0
    %v366 = vadd.f32 %v163, %v365
    %367 = vdwg.mxu0
    %368 = vmatprep.subr.bf16.mxu0 %v241
    %369 = vmatpush1.bf16.msra.mxu0 %v238
    %370 = vmatprep.subr.bf16.mxu0 0
    %371 = vmatpush1.bf16.msra.mxu0 0
    %372 = vmatprep.subr.bf16.mxu0 0
    %373 = vmatpush1.bf16.msra.mxu0 0
    %374 = vmatprep.subr.bf16.mxu0 0
    %375 = vmatpush1.bf16.msra.mxu0 0
    %376 = vmatprep.subr.bf16.mxu0 0
    %377 = vmatpush1.bf16.msra.mxu0 0
    %378 = vmatprep.subr.bf16.mxu0 0
    %379 = vmatpush1.bf16.msra.mxu0 0
    %380 = vmatprep.subr.bf16.mxu0 0
    %381 = vmatpush1.bf16.msra.mxu0 0
    %382 = vmatprep.subr.bf16.mxu0 0
    %383 = vmatpush1.bf16.msra.mxu0 0
    %384 = vmatprep.subr.bf16.mxu0 0
    %385 = vmatpush1.bf16.msra.mxu0 0
    %386 = vmatprep.subr.bf16.mxu0 0
    %387 = vmatpush1.bf16.msra.mxu0 0
    %388 = vmatprep.subr.bf16.mxu0 0
    %389 = vmatpush1.bf16.msra.mxu0 0
    %390 = vmatprep.subr.bf16.mxu0 0
    %391 = vmatpush1.bf16.msra.mxu0 0
    %392 = vmatprep.subr.bf16.mxu0 0
    %393 = vmatpush1.bf16.msra.mxu0 0
    %394 = vmatprep.subr.bf16.mxu0 0
    %395 = vmatpush1.bf16.msra.mxu0 0
    %396 = vmatprep.subr.bf16.mxu0 0
    %397 = vmatpush1.bf16.msra.mxu0 0
    %398 = vmatprep.subr.bf16.mxu0 0
    %399 = vmatpush1.bf16.msra.mxu0 0
    %400 = vmatprep.mubr.bf16.mxu0 0
    %401 = vmatmul.mubr.bf16.gmra.mrb[0].mxu0 %v207
    %v402 = vpop.f32.mrb[0].mxu0
    %v403 = vadd.f32 %v88, %v402
    %v404 = vpop.f32.mrb[0].mxu0
    %v405 = vadd.f32 %v88, %v404
    %v406 = vpop.f32.mrb[0].mxu0
    %v407 = vadd.f32 %v93, %v406
    %v408 = vpop.f32.mrb[0].mxu0
    %v409 = vadd.f32 %v93, %v408
    %410 = vmatprep.mubr.bf16.mxu0 0
    %411 = vmatmul.mubr.bf16.gmra.mrb[0].mxu0 %v210
    %v412 = vpop.f32.mrb[0].mxu0
    %v413 = vadd.f32 %v98, %v412
    %v414 = vpop.f32.mrb[0].mxu0
    %v415 = vadd.f32 %v98, %v414
    %v416 = vpop.f32.mrb[0].mxu0
    %v417 = vadd.f32 %v103, %v416
    %v418 = vpop.f32.mrb[0].mxu0
    %v419 = vadd.f32 %v103, %v418
    %420 = vmatprep.mubr.bf16.mxu0 0
    %421 = vmatmul.mubr.bf16.gmra.mrb[0].mxu0 %v213
    %v422 = vpop.f32.mrb[0].mxu0
    %v423 = vadd.f32 %v108, %v422
    %v424 = vpop.f32.mrb[0].mxu0
    %v425 = vadd.f32 %v108, %v424
    %v426 = vpop.f32.mrb[0].mxu0
    %v427 = vadd.f32 %v113, %v426
    %v428 = vpop.f32.mrb[0].mxu0
    %v429 = vadd.f32 %v113, %v428
    %430 = vmatprep.mubr.bf16.mxu0 0
    %431 = vmatmul.mubr.bf16.gmra.mrb[0].mxu0 %v216
    %v432 = vpop.f32.mrb[0].mxu0
    %v433 = vadd.f32 %v118, %v432
    %v434 = vpop.f32.mrb[0].mxu0
    %v435 = vadd.f32 %v118, %v434
    %v436 = vpop.f32.mrb[0].mxu0
    %v437 = vadd.f32 %v123, %v436
    %v438 = vpop.f32.mrb[0].mxu0
    %v439 = vadd.f32 %v123, %v438
    %440 = vmatprep.mubr.bf16.mxu0 0
    %441 = vmatmul.mubr.bf16.gmra.mrb[0].mxu0 %v219
    %v442 = vpop.f32.mrb[0].mxu0
    %v443 = vadd.f32 %v128, %v442
    %v444 = vpop.f32.mrb[0].mxu0
    %v445 = vadd.f32 %v128, %v444
    %v446 = vpop.f32.mrb[0].mxu0
    %v447 = vadd.f32 %v133, %v446
    %v448 = vpop.f32.mrb[0].mxu0
    %v449 = vadd.f32 %v133, %v448
    %450 = vmatprep.mubr.bf16.mxu0 0
    %451 = vmatmul.mubr.bf16.gmra.mrb[0].mxu0 %v222
    %v452 = vpop.f32.mrb[0].mxu0
    %v453 = vadd.f32 %v138, %v452
    %v454 = vpop.f32.mrb[0].mxu0
    %v455 = vadd.f32 %v138, %v454
    %v456 = vpop.f32.mrb[0].mxu0
    %v457 = vadd.f32 %v143, %v456
    %v458 = vpop.f32.mrb[0].mxu0
    %v459 = vadd.f32 %v143, %v458
    %460 = vmatprep.mubr.bf16.mxu0 0
    %461 = vmatmul.mubr.bf16.gmra.mrb[0].mxu0 %v225
    %v462 = vpop.f32.mrb[0].mxu0
    %v463 = vadd.f32 %v148, %v462
    %v464 = vpop.f32.mrb[0].mxu0
    %v465 = vadd.f32 %v148, %v464
    %v466 = vpop.f32.mrb[0].mxu0
    %v467 = vadd.f32 %v153, %v466
    %v468 = vpop.f32.mrb[0].mxu0
    %v469 = vadd.f32 %v153, %v468
    %470 = vmatprep.mubr.bf16.mxu0 0
    %471 = vmatmul.mubr.bf16.gmra.mrb[0].mxu0 %v228
    %v472 = vpop.f32.mrb[0].mxu0
    %v473 = vadd.f32 %v158, %v472
    %v474 = vpop.f32.mrb[0].mxu0
    %v475 = vadd.f32 %v158, %v474
    %v476 = vpop.f32.mrb[0].mxu0
    %v477 = vadd.f32 %v163, %v476
    %v478 = vpop.f32.mrb[0].mxu0
    %v479 = vadd.f32 %v163, %v478
    %480 = vdwg.mxu0
    %481 = vmatprep.subr.bf16.mxu0 %v247
    %482 = vmatpush1.bf16.msra.mxu0 %v244
    %483 = vmatprep.subr.bf16.mxu0 0
    %484 = vmatpush1.bf16.msra.mxu0 0
    %485 = vmatprep.subr.bf16.mxu0 0
    %486 = vmatpush1.bf16.msra.mxu0 0
    %487 = vmatprep.subr.bf16.mxu0 0
    %488 = vmatpush1.bf16.msra.mxu0 0
    %489 = vmatprep.subr.bf16.mxu0 0
    %490 = vmatpush1.bf16.msra.mxu0 0
    %491 = vmatprep.subr.bf16.mxu0 0
    %492 = vmatpush1.bf16.msra.mxu0 0
    %493 = vmatprep.subr.bf16.mxu0 0
    %494 = vmatpush1.bf16.msra.mxu0 0
    %495 = vmatprep.subr.bf16.mxu0 0
    %496 = vmatpush1.bf16.msra.mxu0 0
    %497 = vmatprep.subr.bf16.mxu0 0
    %498 = vmatpush1.bf16.msra.mxu0 0
    %499 = vmatprep.subr.bf16.mxu0 0
    %500 = vmatpush1.bf16.msra.mxu0 0
    %501 = vmatprep.subr.bf16.mxu0 0
    %502 = vmatpush1.bf16.msra.mxu0 0
    %503 = vmatprep.subr.bf16.mxu0 0
    %504 = vmatpush1.bf16.msra.mxu0 0
    %505 = vmatprep.subr.bf16.mxu0 0
    %506 = vmatpush1.bf16.msra.mxu0 0
    %507 = vmatprep.subr.bf16.mxu0 0
    %508 = vmatpush1.bf16.msra.mxu0 0
    %509 = vmatprep.subr.bf16.mxu0 0
    %510 = vmatpush1.bf16.msra.mxu0 0
    %511 = vmatprep.subr.bf16.mxu0 0
    %512 = vmatpush1.bf16.msra.mxu0 0
    %513 = vmatprep.mubr.bf16.mxu0 0
    %514 = vmatmul.mubr.bf16.gmra.mrb[0].mxu0 %v207
    %v515 = vpop.f32.mrb[0].mxu0
    %v516 = vadd.f32 %v88, %v515
    %v517 = vpop.f32.mrb[0].mxu0
    %v518 = vadd.f32 %v88, %v517
    %v519 = vpop.f32.mrb[0].mxu0
    %v520 = vadd.f32 %v93, %v519
    %v521 = vpop.f32.mrb[0].mxu0
    %v522 = vadd.f32 %v93, %v521
    %523 = vmatprep.mubr.bf16.mxu0 0
    %524 = vmatmul.mubr.bf16.gmra.mrb[0].mxu0 %v210
    %v525 = vpop.f32.mrb[0].mxu0
    %v526 = vadd.f32 %v98, %v525
    %v527 = vpop.f32.mrb[0].mxu0
    %v528 = vadd.f32 %v98, %v527
    %v529 = vpop.f32.mrb[0].mxu0
    %v530 = vadd.f32 %v103, %v529
    %v531 = vpop.f32.mrb[0].mxu0
    %v532 = vadd.f32 %v103, %v531
    %533 = vmatprep.mubr.bf16.mxu0 0
    %534 = vmatmul.mubr.bf16.gmra.mrb[0].mxu0 %v213
    %v535 = vpop.f32.mrb[0].mxu0
    %v536 = vadd.f32 %v108, %v535
    %v537 = vpop.f32.mrb[0].mxu0
    %v538 = vadd.f32 %v108, %v537
    %v539 = vpop.f32.mrb[0].mxu0
    %v540 = vadd.f32 %v113, %v539
    %v541 = vpop.f32.mrb[0].mxu0
    %v542 = vadd.f32 %v113, %v541
    %543 = vmatprep.mubr.bf16.mxu0 0
    %544 = vmatmul.mubr.bf16.gmra.mrb[0].mxu0 %v216
    %v545 = vpop.f32.mrb[0].mxu0
    %v546 = vadd.f32 %v118, %v545
    %v547 = vpop.f32.mrb[0].mxu0
    %v548 = vadd.f32 %v118, %v547
    %v549 = vpop.f32.mrb[0].mxu0
    %v550 = vadd.f32 %v123, %v549
    %v551 = vpop.f32.mrb[0].mxu0
    %v552 = vadd.f32 %v123, %v551
    %553 = vmatprep.mubr.bf16.mxu0 0
    %554 = vmatmul.mubr.bf16.gmra.mrb[0].mxu0 %v219
    %v555 = vpop.f32.mrb[0].mxu0
    %v556 = vadd.f32 %v128, %v555
    %v557 = vpop.f32.mrb[0].mxu0
    %v558 = vadd.f32 %v128, %v557
    %v559 = vpop.f32.mrb[0].mxu0
    %v560 = vadd.f32 %v133, %v559
    %v561 = vpop.f32.mrb[0].mxu0
    %v562 = vadd.f32 %v133, %v561
    %563 = vmatprep.mubr.bf16.mxu0 0
    %564 = vmatmul.mubr.bf16.gmra.mrb[0].mxu0 %v222
    %v565 = vpop.f32.mrb[0].mxu0
    %v566 = vadd.f32 %v138, %v565
    %v567 = vpop.f32.mrb[0].mxu0
    %v568 = vadd.f32 %v138, %v567
    %v569 = vpop.f32.mrb[0].mxu0
    %v570 = vadd.f32 %v143, %v569
    %v571 = vpop.f32.mrb[0].mxu0
    %v572 = vadd.f32 %v143, %v571
    %573 = vmatprep.mubr.bf16.mxu0 0
    %574 = vmatmul.mubr.bf16.gmra.mrb[0].mxu0 %v225
    %v575 = vpop.f32.mrb[0].mxu0
    %v576 = vadd.f32 %v148, %v575
    %v577 = vpop.f32.mrb[0].mxu0
    %v578 = vadd.f32 %v148, %v577
    %v579 = vpop.f32.mrb[0].mxu0
    %v580 = vadd.f32 %v153, %v579
    %v581 = vpop.f32.mrb[0].mxu0
    %v582 = vadd.f32 %v153, %v581
    %583 = vmatprep.mubr.bf16.mxu0 0
    %584 = vmatmul.mubr.bf16.gmra.mrb[0].mxu0 %v228
    %v585 = vpop.f32.mrb[0].mxu0
    %v586 = vadd.f32 %v158, %v585
    %v587 = vpop.f32.mrb[0].mxu0
    %v588 = vadd.f32 %v158, %v587
    %v589 = vpop.f32.mrb[0].mxu0
    %v590 = vadd.f32 %v163, %v589
    %v591 = vpop.f32.mrb[0].mxu0
    %v592 = vadd.f32 %v163, %v591
    %593 = vdwg.mxu0
    %594 = vmatprep.subr.bf16.mxu0 %v253
    %595 = vmatpush1.bf16.msra.mxu0 %v250
    %596 = vmatprep.subr.bf16.mxu0 0
    %597 = vmatpush1.bf16.msra.mxu0 0
    %598 = vmatprep.subr.bf16.mxu0 0
    %599 = vmatpush1.bf16.msra.mxu0 0
    %600 = vmatprep.subr.bf16.mxu0 0
    %601 = vmatpush1.bf16.msra.mxu0 0
    %602 = vmatprep.subr.bf16.mxu0 0
    %603 = vmatpush1.bf16.msra.mxu0 0
    %604 = vmatprep.subr.bf16.mxu0 0
    %605 = vmatpush1.bf16.msra.mxu0 0
    %606 = vmatprep.subr.bf16.mxu0 0
    %607 = vmatpush1.bf16.msra.mxu0 0
    %608 = vmatprep.subr.bf16.mxu0 0
    %609 = vmatpush1.bf16.msra.mxu0 0
    %610 = vmatprep.subr.bf16.mxu0 0
    %611 = vmatpush1.bf16.msra.mxu0 0
    %612 = vmatprep.subr.bf16.mxu0 0
    %613 = vmatpush1.bf16.msra.mxu0 0
    %614 = vmatprep.subr.bf16.mxu0 0
    %615 = vmatpush1.bf16.msra.mxu0 0
    %616 = vmatprep.subr.bf16.mxu0 0
    %617 = vmatpush1.bf16.msra.mxu0 0
    %618 = vmatprep.subr.bf16.mxu0 0
    %619 = vmatpush1.bf16.msra.mxu0 0
    %620 = vmatprep.subr.bf16.mxu0 0
    %621 = vmatpush1.bf16.msra.mxu0 0
    %622 = vmatprep.subr.bf16.mxu0 0
    %623 = vmatpush1.bf16.msra.mxu0 0
    %624 = vmatprep.subr.bf16.mxu0 0
    %625 = vmatpush1.bf16.msra.mxu0 0
    %626 = vmatprep.mubr.bf16.mxu0 0
    %627 = vmatmul.mubr.bf16.gmra.mrb[0].mxu0 %v207
    %v628 = vpop.f32.mrb[0].mxu0
    %v629 = vadd.f32 %v88, %v628
    %v630 = vpop.f32.mrb[0].mxu0
    %v631 = vadd.f32 %v88, %v630
    %v632 = vpop.f32.mrb[0].mxu0
    %v633 = vadd.f32 %v93, %v632
    %v634 = vpop.f32.mrb[0].mxu0
    %v635 = vadd.f32 %v93, %v634
    %636 = vmatprep.mubr.bf16.mxu0 0
    %637 = vmatmul.mubr.bf16.gmra.mrb[0].mxu0 %v210
    %v638 = vpop.f32.mrb[0].mxu0
    %v639 = vadd.f32 %v98, %v638
    %v640 = vpop.f32.mrb[0].mxu0
    %v641 = vadd.f32 %v98, %v640
    %v642 = vpop.f32.mrb[0].mxu0
    %v643 = vadd.f32 %v103, %v642
    %v644 = vpop.f32.mrb[0].mxu0
    %v645 = vadd.f32 %v103, %v644
    %646 = vmatprep.mubr.bf16.mxu0 0
    %647 = vmatmul.mubr.bf16.gmra.mrb[0].mxu0 %v213
    %v648 = vpop.f32.mrb[0].mxu0
    %v649 = vadd.f32 %v108, %v648
    %v650 = vpop.f32.mrb[0].mxu0
    %v651 = vadd.f32 %v108, %v650
    %v652 = vpop.f32.mrb[0].mxu0
    %v653 = vadd.f32 %v113, %v652
    %v654 = vpop.f32.mrb[0].mxu0
    %v655 = vadd.f32 %v113, %v654
    %656 = vmatprep.mubr.bf16.mxu0 0
    %657 = vmatmul.mubr.bf16.gmra.mrb[0].mxu0 %v216
    %v658 = vpop.f32.mrb[0].mxu0
    %v659 = vadd.f32 %v118, %v658
    %v660 = vpop.f32.mrb[0].mxu0
    %v661 = vadd.f32 %v118, %v660
    %v662 = vpop.f32.mrb[0].mxu0
    %v663 = vadd.f32 %v123, %v662
    %v664 = vpop.f32.mrb[0].mxu0
    %v665 = vadd.f32 %v123, %v664
    %666 = vmatprep.mubr.bf16.mxu0 0
    %667 = vmatmul.mubr.bf16.gmra.mrb[0].mxu0 %v219
    %v668 = vpop.f32.mrb[0].mxu0
    %v669 = vadd.f32 %v128, %v668
    %v670 = vpop.f32.mrb[0].mxu0
    %v671 = vadd.f32 %v128, %v670
    %v672 = vpop.f32.mrb[0].mxu0
    %v673 = vadd.f32 %v133, %v672
    %v674 = vpop.f32.mrb[0].mxu0
    %v675 = vadd.f32 %v133, %v674
    %676 = vmatprep.mubr.bf16.mxu0 0
    %677 = vmatmul.mubr.bf16.gmra.mrb[0].mxu0 %v222
    %v678 = vpop.f32.mrb[0].mxu0
    %v679 = vadd.f32 %v138, %v678
    %v680 = vpop.f32.mrb[0].mxu0
    %v681 = vadd.f32 %v138, %v680
    %v682 = vpop.f32.mrb[0].mxu0
    %v683 = vadd.f32 %v143, %v682
    %v684 = vpop.f32.mrb[0].mxu0
    %v685 = vadd.f32 %v143, %v684
    %686 = vmatprep.mubr.bf16.mxu0 0
    %687 = vmatmul.mubr.bf16.gmra.mrb[0].mxu0 %v225
    %v688 = vpop.f32.mrb[0].mxu0
    %v689 = vadd.f32 %v148, %v688
    %v690 = vpop.f32.mrb[0].mxu0
    %v691 = vadd.f32 %v148, %v690
    %v692 = vpop.f32.mrb[0].mxu0
    %v693 = vadd.f32 %v153, %v692
    %v694 = vpop.f32.mrb[0].mxu0
    %v695 = vadd.f32 %v153, %v694
    %696 = vmatprep.mubr.bf16.mxu0 0
    %697 = vmatmul.mubr.bf16.gmra.mrb[0].mxu0 %v228
    %v698 = vpop.f32.mrb[0].mxu0
    %v699 = vadd.f32 %v158, %v698
    %v700 = vpop.f32.mrb[0].mxu0
    %v701 = vadd.f32 %v158, %v700
    %v702 = vpop.f32.mrb[0].mxu0
    %v703 = vadd.f32 %v163, %v702
    %v704 = vpop.f32.mrb[0].mxu0
    %v705 = vadd.f32 %v163, %v704
    %706 = vdwg.mxu0
    %v707 = vmax.f32 %v290, 0.0
    %v708 = vmax.f32 %v292, 0.0
    %v709 = vmax.f32 %v403, 0.0
    %v710 = vmax.f32 %v405, 0.0
    %v711 = vmax.f32 %v516, 0.0
    %v712 = vmax.f32 %v518, 0.0
    %v713 = vmax.f32 %v629, 0.0
    %v714 = vmax.f32 %v631, 0.0
    %v715 = vmax.f32 %v294, 0.0
    %v716 = vmax.f32 %v296, 0.0
    %v717 = vmax.f32 %v407, 0.0
    %v718 = vmax.f32 %v409, 0.0
    %v719 = vmax.f32 %v520, 0.0
    %v720 = vmax.f32 %v522, 0.0
    %v721 = vmax.f32 %v633, 0.0
    %v722 = vmax.f32 %v635, 0.0
    %v723 = vmax.f32 %v300, 0.0
    %v724 = vmax.f32 %v302, 0.0
    %v725 = vmax.f32 %v413, 0.0
    %v726 = vmax.f32 %v415, 0.0
    %v727 = vmax.f32 %v526, 0.0
    %v728 = vmax.f32 %v528, 0.0
    %v729 = vmax.f32 %v639, 0.0
    %v730 = vmax.f32 %v641, 0.0
    %v731 = vmax.f32 %v304, 0.0
    %v732 = vmax.f32 %v306, 0.0
    %v733 = vmax.f32 %v417, 0.0
    %v734 = vmax.f32 %v419, 0.0
    %v735 = vmax.f32 %v530, 0.0
    %v736 = vmax.f32 %v532, 0.0
    %v737 = vmax.f32 %v643, 0.0
    %v738 = vmax.f32 %v645, 0.0
    %v739 = vmax.f32 %v310, 0.0
    %v740 = vmax.f32 %v312, 0.0
    %v741 = vmax.f32 %v423, 0.0
    %v742 = vmax.f32 %v425, 0.0
    %v743 = vmax.f32 %v536, 0.0
    %v744 = vmax.f32 %v538, 0.0
    %v745 = vmax.f32 %v649, 0.0
    %v746 = vmax.f32 %v651, 0.0
    %v747 = vmax.f32 %v314, 0.0
    %v748 = vmax.f32 %v316, 0.0
    %v749 = vmax.f32 %v427, 0.0
    %v750 = vmax.f32 %v429, 0.0
    %v751 = vmax.f32 %v540, 0.0
    %v752 = vmax.f32 %v542, 0.0
    %v753 = vmax.f32 %v653, 0.0
    %v754 = vmax.f32 %v655, 0.0
    %v755 = vmax.f32 %v320, 0.0
    %v756 = vmax.f32 %v322, 0.0
    %v757 = vmax.f32 %v433, 0.0
    %v758 = vmax.f32 %v435, 0.0
    %v759 = vmax.f32 %v546, 0.0
    %v760 = vmax.f32 %v548, 0.0
    %v761 = vmax.f32 %v659, 0.0
    %v762 = vmax.f32 %v661, 0.0
    %v763 = vmax.f32 %v324, 0.0
    %v764 = vmax.f32 %v326, 0.0
    %v765 = vmax.f32 %v437, 0.0
    %v766 = vmax.f32 %v439, 0.0
    %v767 = vmax.f32 %v550, 0.0
    %v768 = vmax.f32 %v552, 0.0
    %v769 = vmax.f32 %v663, 0.0
    %v770 = vmax.f32 %v665, 0.0
    %v771 = vmax.f32 %v330, 0.0
    %v772 = vmax.f32 %v332, 0.0
    %v773 = vmax.f32 %v443, 0.0
    %v774 = vmax.f32 %v445, 0.0
    %v775 = vmax.f32 %v556, 0.0
    %v776 = vmax.f32 %v558, 0.0
    %v777 = vmax.f32 %v669, 0.0
    %v778 = vmax.f32 %v671, 0.0
    %v779 = vmax.f32 %v334, 0.0
    %v780 = vmax.f32 %v336, 0.0
    %v781 = vmax.f32 %v447, 0.0
    %v782 = vmax.f32 %v449, 0.0
    %v783 = vmax.f32 %v560, 0.0
    %v784 = vmax.f32 %v562, 0.0
    %v785 = vmax.f32 %v673, 0.0
    %v786 = vmax.f32 %v675, 0.0
    %v787 = vmax.f32 %v340, 0.0
    %v788 = vmax.f32 %v342, 0.0
    %v789 = vmax.f32 %v453, 0.0
    %v790 = vmax.f32 %v455, 0.0
    %v791 = vmax.f32 %v566, 0.0
    %v792 = vmax.f32 %v568, 0.0
    %v793 = vmax.f32 %v679, 0.0
    %v794 = vmax.f32 %v681, 0.0
    %v795 = vmax.f32 %v344, 0.0
    %v796 = vmax.f32 %v346, 0.0
    %v797 = vmax.f32 %v457, 0.0
    %v798 = vmax.f32 %v459, 0.0
    %v799 = vmax.f32 %v570, 0.0
    %v800 = vmax.f32 %v572, 0.0
    %v801 = vmax.f32 %v683, 0.0
    %v802 = vmax.f32 %v685, 0.0
    %v803 = vmax.f32 %v350, 0.0
    %v804 = vmax.f32 %v352, 0.0
    %v805 = vmax.f32 %v463, 0.0
    %v806 = vmax.f32 %v465, 0.0
    %v807 = vmax.f32 %v576, 0.0
    %v808 = vmax.f32 %v578, 0.0
    %v809 = vmax.f32 %v689, 0.0
    %v810 = vmax.f32 %v691, 0.0
    %v811 = vmax.f32 %v354, 0.0
    %v812 = vmax.f32 %v356, 0.0
    %v813 = vmax.f32 %v467, 0.0
    %v814 = vmax.f32 %v469, 0.0
    %v815 = vmax.f32 %v580, 0.0
    %v816 = vmax.f32 %v582, 0.0
    %v817 = vmax.f32 %v693, 0.0
    %v818 = vmax.f32 %v695, 0.0
    %v819 = vmax.f32 %v360, 0.0
    %v820 = vmax.f32 %v362, 0.0
    %v821 = vmax.f32 %v473, 0.0
    %v822 = vmax.f32 %v475, 0.0
    %v823 = vmax.f32 %v586, 0.0
    %v824 = vmax.f32 %v588, 0.0
    %v825 = vmax.f32 %v699, 0.0
    %v826 = vmax.f32 %v701, 0.0
    %v827 = vmax.f32 %v364, 0.0
    %v828 = vmax.f32 %v366, 0.0
    %v829 = vmax.f32 %v477, 0.0
    %v830 = vmax.f32 %v479, 0.0
    %v831 = vmax.f32 %v590, 0.0
    %v832 = vmax.f32 %v592, 0.0
    %v833 = vmax.f32 %v703, 0.0
    %v834 = vmax.f32 %v705, 0.0
    %v835 = vld [vmem:[%s3] sm:$0xf]
    %v836 = vld [vmem:[%s3 + $0x4] sm:$0xf]
    %v837 = vld [vmem:[%s3 + $0x8] sm:$0xf]
    %v838 = vld [vmem:[%s3 + $0xc] sm:$0xf]
    %v839 = vld [vmem:[%s3 + $0x10] sm:$0xf]
    %v840 = vld [vmem:[%s3 + $0x14] sm:$0xf]
    %v841 = vld [vmem:[%s3 + $0x18] sm:$0xf]
    %v842 = vld [vmem:[%s3 + $0x1c] sm:$0xf]
    %v843 = vld [vmem:[%s3 + $0x20] sm:$0xf]
    %v844 = vld [vmem:[%s3 + $0x24] sm:$0xf]
    %v845 = vld [vmem:[%s3 + $0x28] sm:$0xf]
    %v846 = vld [vmem:[%s3 + $0x2c] sm:$0xf]
    %v847 = vld [vmem:[%s3 + $0x30] sm:$0xf]
    %v848 = vld [vmem:[%s3 + $0x34] sm:$0xf]
    %v849 = vld [vmem:[%s3 + $0x38] sm:$0xf]
    %v850 = vld [vmem:[%s3 + $0x3c] sm:$0xf]
    %v851 = vpack.c.bf16 %v715, %v707
    %v852 = vpack.c.bf16 %v716, %v708
    %v853 = vpack.c.bf16 %v717, %v709
    %v854 = vpack.c.bf16 %v718, %v710
    %v855 = vpack.c.bf16 %v719, %v711
    %v856 = vpack.c.bf16 %v720, %v712
    %v857 = vpack.c.bf16 %v721, %v713
    %v858 = vpack.c.bf16 %v722, %v714
    %v859 = vpack.c.bf16 %v731, %v723
    %v860 = vpack.c.bf16 %v732, %v724
    %v861 = vpack.c.bf16 %v733, %v725
    %v862 = vpack.c.bf16 %v734, %v726
    %v863 = vpack.c.bf16 %v735, %v727
    %v864 = vpack.c.bf16 %v736, %v728
    %v865 = vpack.c.bf16 %v737, %v729
    %v866 = vpack.c.bf16 %v738, %v730
    %v867 = vpack.c.bf16 %v747, %v739
    %v868 = vpack.c.bf16 %v748, %v740
    %v869 = vpack.c.bf16 %v749, %v741
    %v870 = vpack.c.bf16 %v750, %v742
    %v871 = vpack.c.bf16 %v751, %v743
    %v872 = vpack.c.bf16 %v752, %v744
    %v873 = vpack.c.bf16 %v753, %v745
    %v874 = vpack.c.bf16 %v754, %v746
    %v875 = vpack.c.bf16 %v763, %v755
    %v876 = vpack.c.bf16 %v764, %v756
    %v877 = vpack.c.bf16 %v765, %v757
    %v878 = vpack.c.bf16 %v766, %v758
    %v879 = vpack.c.bf16 %v767, %v759
    %v880 = vpack.c.bf16 %v768, %v760
    %v881 = vpack.c.bf16 %v769, %v761
    %v882 = vpack.c.bf16 %v770, %v762
    %v883 = vpack.c.bf16 %v779, %v771
    %v884 = vpack.c.bf16 %v780, %v772
    %v885 = vpack.c.bf16 %v781, %v773
    %v886 = vpack.c.bf16 %v782, %v774
    %v887 = vpack.c.bf16 %v783, %v775
    %v888 = vpack.c.bf16 %v784, %v776
    %v889 = vpack.c.bf16 %v785, %v777
    %v890 = vpack.c.bf16 %v786, %v778
    %v891 = vpack.c.bf16 %v795, %v787
    %v892 = vpack.c.bf16 %v796, %v788
    %v893 = vpack.c.bf16 %v797, %v789
    %v894 = vpack.c.bf16 %v798, %v790
    %v895 = vpack.c.bf16 %v799, %v791
    %v896 = vpack.c.bf16 %v800, %v792
    %v897 = vpack.c.bf16 %v801, %v793
    %v898 = vpack.c.bf16 %v802, %v794
    %v899 = vpack.c.bf16 %v811, %v803
    %v900 = vpack.c.bf16 %v812, %v804
    %v901 = vpack.c.bf16 %v813, %v805
    %v902 = vpack.c.bf16 %v814, %v806
    %v903 = vpack.c.bf16 %v815, %v807
    %v904 = vpack.c.bf16 %v816, %v808
    %v905 = vpack.c.bf16 %v817, %v809
    %v906 = vpack.c.bf16 %v818, %v810
    %v907 = vpack.c.bf16 %v827, %v819
    %v908 = vpack.c.bf16 %v828, %v820
    %v909 = vpack.c.bf16 %v829, %v821
    %v910 = vpack.c.bf16 %v830, %v822
    %v911 = vpack.c.bf16 %v831, %v823
    %v912 = vpack.c.bf16 %v832, %v824
    %v913 = vpack.c.bf16 %v833, %v825
    %v914 = vpack.c.bf16 %v834, %v826
    %v915 = vld [vmem:[%s4] sm:$0xff]
    %v916 = vld [vmem:[%s4 + $0x8] sm:$0xff]
    %v917 = vld [vmem:[%s4 + $0x10] sm:$0xff]
    %v918 = vld [vmem:[%s4 + $0x18] sm:$0xff]
    %v919 = vld [vmem:[%s4 + $0x20] sm:$0xff]
    %v920 = vld [vmem:[%s4 + $0x28] sm:$0xff]
    %v921 = vld [vmem:[%s4 + $0x30] sm:$0xff]
    %v922 = vld [vmem:[%s4 + $0x38] sm:$0xff]
    %v923 = vld [vmem:[%s4 + $0x40] sm:$0xff]
    %v924 = vld [vmem:[%s4 + $0x48] sm:$0xff]
    %v925 = vld [vmem:[%s4 + $0x50] sm:$0xff]
    %v926 = vld [vmem:[%s4 + $0x58] sm:$0xff]
    %v927 = vld [vmem:[%s4 + $0x60] sm:$0xff]
    %v928 = vld [vmem:[%s4 + $0x68] sm:$0xff]
    %v929 = vld [vmem:[%s4 + $0x70] sm:$0xff]
    %v930 = vld [vmem:[%s4 + $0x78] sm:$0xff]
    %932 = vset.pattern.permute.xlu0 0
    %933 = vperm.xlu0 %932, %v915
    %v934 = vpop.permute.xlu0 %933
    %937 = vset.pattern.permute.xlu0 0
    %938 = vperm.xlu0 %937, %v916
    %v939 = vpop.permute.xlu0 %938
    %942 = vset.pattern.permute.xlu0 0
    %943 = vperm.xlu0 %942, %v917
    %v944 = vpop.permute.xlu0 %943
    %947 = vset.pattern.permute.xlu0 0
    %948 = vperm.xlu0 %947, %v918
    %v949 = vpop.permute.xlu0 %948
    %952 = vset.pattern.permute.xlu0 0
    %953 = vperm.xlu0 %952, %v919
    %v954 = vpop.permute.xlu0 %953
    %957 = vset.pattern.permute.xlu0 0
    %958 = vperm.xlu0 %957, %v920
    %v959 = vpop.permute.xlu0 %958
    %962 = vset.pattern.permute.xlu0 0
    %963 = vperm.xlu0 %962, %v921
    %v964 = vpop.permute.xlu0 %963
    %967 = vset.pattern.permute.xlu0 0
    %968 = vperm.xlu0 %967, %v922
    %v969 = vpop.permute.xlu0 %968
    %972 = vset.pattern.permute.xlu0 0
    %973 = vperm.xlu0 %972, %v923
    %v974 = vpop.permute.xlu0 %973
    %977 = vset.pattern.permute.xlu0 0
    %978 = vperm.xlu0 %977, %v924
    %v979 = vpop.permute.xlu0 %978
    %982 = vset.pattern.permute.xlu0 0
    %983 = vperm.xlu0 %982, %v925
    %v984 = vpop.permute.xlu0 %983
    %987 = vset.pattern.permute.xlu0 0
    %988 = vperm.xlu0 %987, %v926
    %v989 = vpop.permute.xlu0 %988
    %992 = vset.pattern.permute.xlu0 0
    %993 = vperm.xlu0 %992, %v927
    %v994 = vpop.permute.xlu0 %993
    %997 = vset.pattern.permute.xlu0 0
    %998 = vperm.xlu0 %997, %v928
    %v999 = vpop.permute.xlu0 %998
    %1002 = vset.pattern.permute.xlu0 0
    %1003 = vperm.xlu0 %1002, %v929
    %v1004 = vpop.permute.xlu0 %1003
    %1007 = vset.pattern.permute.xlu0 0
    %1008 = vperm.xlu0 %1007, %v930
    %v1009 = vpop.permute.xlu0 %1008
    %v1027 = vunpack.c.l.b16 %v835
    %v1028 = vunpack.c.l.b16 %v836
    %v1029 = vunpack.c.l.b16 %v837
    %v1030 = vunpack.c.l.b16 %v838
    %v1031 = vunpack.c.l.b16 %v839
    %v1032 = vunpack.c.l.b16 %v840
    %v1033 = vunpack.c.l.b16 %v841
    %v1034 = vunpack.c.l.b16 %v842
    %v1035 = vunpack.c.l.b16 %v843
    %v1036 = vunpack.c.l.b16 %v844
    %v1037 = vunpack.c.l.b16 %v845
    %v1038 = vunpack.c.l.b16 %v846
    %v1039 = vunpack.c.l.b16 %v847
    %v1040 = vunpack.c.l.b16 %v848
    %v1041 = vunpack.c.l.b16 %v849
    %v1042 = vunpack.c.l.b16 %v850
    %v1043 = vpack.c.b16 %v1028, %v1027
    %v1044 = vpack.c.b16 %v1030, %v1029
    %v1045 = vpack.c.b16 %v1032, %v1031
    %v1046 = vpack.c.b16 %v1034, %v1033
    %v1047 = vpack.c.b16 %v1036, %v1035
    %v1048 = vpack.c.b16 %v1038, %v1037
    %v1049 = vpack.c.b16 %v1040, %v1039
    %v1050 = vpack.c.b16 %v1042, %v1041
    %1059 = vmatprep.subr.bf16.mxu0 %v852
    %1060 = vmatpush1.bf16.msra.mxu0 %v851
    %1061 = vmatprep.subr.bf16.mxu0 %v860
    %1062 = vmatpush1.bf16.msra.mxu0 %v859
    %1063 = vmatprep.subr.bf16.mxu0 %v868
    %1064 = vmatpush1.bf16.msra.mxu0 %v867
    %1065 = vmatprep.subr.bf16.mxu0 %v876
    %1066 = vmatpush1.bf16.msra.mxu0 %v875
    %1067 = vmatprep.subr.bf16.mxu0 %v884
    %1068 = vmatpush1.bf16.msra.mxu0 %v883
    %1069 = vmatprep.subr.bf16.mxu0 %v892
    %1070 = vmatpush1.bf16.msra.mxu0 %v891
    %1071 = vmatprep.subr.bf16.mxu0 %v900
    %1072 = vmatpush1.bf16.msra.mxu0 %v899
    %1073 = vmatprep.subr.bf16.mxu0 %v908
    %1074 = vmatpush1.bf16.msra.mxu0 %v907
    %1075 = vmatprep.subr.bf16.mxu0 0
    %1076 = vmatpush1.bf16.msra.mxu0 0
    %1077 = vmatprep.subr.bf16.mxu0 0
    %1078 = vmatpush1.bf16.msra.mxu0 0
    %1079 = vmatprep.subr.bf16.mxu0 0
    %1080 = vmatpush1.bf16.msra.mxu0 0
    %1081 = vmatprep.subr.bf16.mxu0 0
    %1082 = vmatpush1.bf16.msra.mxu0 0
    %1083 = vmatprep.subr.bf16.mxu0 0
    %1084 = vmatpush1.bf16.msra.mxu0 0
    %1085 = vmatprep.subr.bf16.mxu0 0
    %1086 = vmatpush1.bf16.msra.mxu0 0
    %1087 = vmatprep.subr.bf16.mxu0 0
    %1088 = vmatpush1.bf16.msra.mxu0 0
    %1089 = vmatprep.subr.bf16.mxu0 0
    %1090 = vmatpush1.bf16.msra.mxu0 0
    %1091 = vmatprep.mubr.bf16.mxu0 0
    %1092 = vmatmul.mubr.bf16.gmra.mrb[0].mxu0 %v1043
    %v1093 = vpop.f32.mrb[0].mxu0
    %v1094 = vadd.f32 %v934, %v1093
    %v1095 = vpop.f32.mrb[0].mxu0
    %v1096 = vadd.f32 %v934, %v1095
    %v1097 = vpop.f32.mrb[0].mxu0
    %v1098 = vadd.f32 %v939, %v1097
    %v1099 = vpop.f32.mrb[0].mxu0
    %v1100 = vadd.f32 %v939, %v1099
    %1101 = vmatprep.mubr.bf16.mxu0 0
    %1102 = vmatmul.mubr.bf16.gmra.mrb[0].mxu0 %v1044
    %v1103 = vpop.f32.mrb[0].mxu0
    %v1104 = vadd.f32 %v944, %v1103
    %v1105 = vpop.f32.mrb[0].mxu0
    %v1106 = vadd.f32 %v944, %v1105
    %v1107 = vpop.f32.mrb[0].mxu0
    %v1108 = vadd.f32 %v949, %v1107
    %v1109 = vpop.f32.mrb[0].mxu0
    %v1110 = vadd.f32 %v949, %v1109
    %1111 = vmatprep.mubr.bf16.mxu0 0
    %1112 = vmatmul.mubr.bf16.gmra.mrb[0].mxu0 %v1045
    %v1113 = vpop.f32.mrb[0].mxu0
    %v1114 = vadd.f32 %v954, %v1113
    %v1115 = vpop.f32.mrb[0].mxu0
    %v1116 = vadd.f32 %v954, %v1115
    %v1117 = vpop.f32.mrb[0].mxu0
    %v1118 = vadd.f32 %v959, %v1117
    %v1119 = vpop.f32.mrb[0].mxu0
    %v1120 = vadd.f32 %v959, %v1119
    %1121 = vmatprep.mubr.bf16.mxu0 0
    %1122 = vmatmul.mubr.bf16.gmra.mrb[0].mxu0 %v1046
    %v1123 = vpop.f32.mrb[0].mxu0
    %v1124 = vadd.f32 %v964, %v1123
    %v1125 = vpop.f32.mrb[0].mxu0
    %v1126 = vadd.f32 %v964, %v1125
    %v1127 = vpop.f32.mrb[0].mxu0
    %v1128 = vadd.f32 %v969, %v1127
    %v1129 = vpop.f32.mrb[0].mxu0
    %v1130 = vadd.f32 %v969, %v1129
    %1131 = vmatprep.mubr.bf16.mxu0 0
    %1132 = vmatmul.mubr.bf16.gmra.mrb[0].mxu0 %v1047
    %v1133 = vpop.f32.mrb[0].mxu0
    %v1134 = vadd.f32 %v974, %v1133
    %v1135 = vpop.f32.mrb[0].mxu0
    %v1136 = vadd.f32 %v974, %v1135
    %v1137 = vpop.f32.mrb[0].mxu0
    %v1138 = vadd.f32 %v979, %v1137
    %v1139 = vpop.f32.mrb[0].mxu0
    %v1140 = vadd.f32 %v979, %v1139
    %1141 = vmatprep.mubr.bf16.mxu0 0
    %1142 = vmatmul.mubr.bf16.gmra.mrb[0].mxu0 %v1048
    %v1143 = vpop.f32.mrb[0].mxu0
    %v1144 = vadd.f32 %v984, %v1143
    %v1145 = vpop.f32.mrb[0].mxu0
    %v1146 = vadd.f32 %v984, %v1145
    %v1147 = vpop.f32.mrb[0].mxu0
    %v1148 = vadd.f32 %v989, %v1147
    %v1149 = vpop.f32.mrb[0].mxu0
    %v1150 = vadd.f32 %v989, %v1149
    %1151 = vmatprep.mubr.bf16.mxu0 0
    %1152 = vmatmul.mubr.bf16.gmra.mrb[0].mxu0 %v1049
    %v1153 = vpop.f32.mrb[0].mxu0
    %v1154 = vadd.f32 %v994, %v1153
    %v1155 = vpop.f32.mrb[0].mxu0
    %v1156 = vadd.f32 %v994, %v1155
    %v1157 = vpop.f32.mrb[0].mxu0
    %v1158 = vadd.f32 %v999, %v1157
    %v1159 = vpop.f32.mrb[0].mxu0
    %v1160 = vadd.f32 %v999, %v1159
    %1161 = vmatprep.mubr.bf16.mxu0 0
    %1162 = vmatmul.mubr.bf16.gmra.mrb[0].mxu0 %v1050
    %v1163 = vpop.f32.mrb[0].mxu0
    %v1164 = vadd.f32 %v1004, %v1163
    %v1165 = vpop.f32.mrb[0].mxu0
    %v1166 = vadd.f32 %v1004, %v1165
    %v1167 = vpop.f32.mrb[0].mxu0
    %v1168 = vadd.f32 %v1009, %v1167
    %v1169 = vpop.f32.mrb[0].mxu0
    %v1170 = vadd.f32 %v1009, %v1169
    %1171 = vdwg.mxu0
    %1172 = vmatprep.subr.bf16.mxu0 %v854
    %1173 = vmatpush1.bf16.msra.mxu0 %v853
    %1174 = vmatprep.subr.bf16.mxu0 %v862
    %1175 = vmatpush1.bf16.msra.mxu0 %v861
    %1176 = vmatprep.subr.bf16.mxu0 %v870
    %1177 = vmatpush1.bf16.msra.mxu0 %v869
    %1178 = vmatprep.subr.bf16.mxu0 %v878
    %1179 = vmatpush1.bf16.msra.mxu0 %v877
    %1180 = vmatprep.subr.bf16.mxu0 %v886
    %1181 = vmatpush1.bf16.msra.mxu0 %v885
    %1182 = vmatprep.subr.bf16.mxu0 %v894
    %1183 = vmatpush1.bf16.msra.mxu0 %v893
    %1184 = vmatprep.subr.bf16.mxu0 %v902
    %1185 = vmatpush1.bf16.msra.mxu0 %v901
    %1186 = vmatprep.subr.bf16.mxu0 %v910
    %1187 = vmatpush1.bf16.msra.mxu0 %v909
    %1188 = vmatprep.subr.bf16.mxu0 0
    %1189 = vmatpush1.bf16.msra.mxu0 0
    %1190 = vmatprep.subr.bf16.mxu0 0
    %1191 = vmatpush1.bf16.msra.mxu0 0
    %1192 = vmatprep.subr.bf16.mxu0 0
    %1193 = vmatpush1.bf16.msra.mxu0 0
    %1194 = vmatprep.subr.bf16.mxu0 0
    %1195 = vmatpush1.bf16.msra.mxu0 0
    %1196 = vmatprep.subr.bf16.mxu0 0
    %1197 = vmatpush1.bf16.msra.mxu0 0
    %1198 = vmatprep.subr.bf16.mxu0 0
    %1199 = vmatpush1.bf16.msra.mxu0 0
    %1200 = vmatprep.subr.bf16.mxu0 0
    %1201 = vmatpush1.bf16.msra.mxu0 0
    %1202 = vmatprep.subr.bf16.mxu0 0
    %1203 = vmatpush1.bf16.msra.mxu0 0
    %1204 = vmatprep.mubr.bf16.mxu0 0
    %1205 = vmatmul.mubr.bf16.gmra.mrb[0].mxu0 %v1043
    %v1206 = vpop.f32.mrb[0].mxu0
    %v1207 = vadd.f32 %v934, %v1206
    %v1208 = vpop.f32.mrb[0].mxu0
    %v1209 = vadd.f32 %v934, %v1208
    %v1210 = vpop.f32.mrb[0].mxu0
    %v1211 = vadd.f32 %v939, %v1210
    %v1212 = vpop.f32.mrb[0].mxu0
    %v1213 = vadd.f32 %v939, %v1212
    %1214 = vmatprep.mubr.bf16.mxu0 0
    %1215 = vmatmul.mubr.bf16.gmra.mrb[0].mxu0 %v1044
    %v1216 = vpop.f32.mrb[0].mxu0
    %v1217 = vadd.f32 %v944, %v1216
    %v1218 = vpop.f32.mrb[0].mxu0
    %v1219 = vadd.f32 %v944, %v1218
    %v1220 = vpop.f32.mrb[0].mxu0
    %v1221 = vadd.f32 %v949, %v1220
    %v1222 = vpop.f32.mrb[0].mxu0
    %v1223 = vadd.f32 %v949, %v1222
    %1224 = vmatprep.mubr.bf16.mxu0 0
    %1225 = vmatmul.mubr.bf16.gmra.mrb[0].mxu0 %v1045
    %v1226 = vpop.f32.mrb[0].mxu0
    %v1227 = vadd.f32 %v954, %v1226
    %v1228 = vpop.f32.mrb[0].mxu0
    %v1229 = vadd.f32 %v954, %v1228
    %v1230 = vpop.f32.mrb[0].mxu0
    %v1231 = vadd.f32 %v959, %v1230
    %v1232 = vpop.f32.mrb[0].mxu0
    %v1233 = vadd.f32 %v959, %v1232
    %1234 = vmatprep.mubr.bf16.mxu0 0
    %1235 = vmatmul.mubr.bf16.gmra.mrb[0].mxu0 %v1046
    %v1236 = vpop.f32.mrb[0].mxu0
    %v1237 = vadd.f32 %v964, %v1236
    %v1238 = vpop.f32.mrb[0].mxu0
    %v1239 = vadd.f32 %v964, %v1238
    %v1240 = vpop.f32.mrb[0].mxu0
    %v1241 = vadd.f32 %v969, %v1240
    %v1242 = vpop.f32.mrb[0].mxu0
    %v1243 = vadd.f32 %v969, %v1242
    %1244 = vmatprep.mubr.bf16.mxu0 0
    %1245 = vmatmul.mubr.bf16.gmra.mrb[0].mxu0 %v1047
    %v1246 = vpop.f32.mrb[0].mxu0
    %v1247 = vadd.f32 %v974, %v1246
    %v1248 = vpop.f32.mrb[0].mxu0
    %v1249 = vadd.f32 %v974, %v1248
    %v1250 = vpop.f32.mrb[0].mxu0
    %v1251 = vadd.f32 %v979, %v1250
    %v1252 = vpop.f32.mrb[0].mxu0
    %v1253 = vadd.f32 %v979, %v1252
    %1254 = vmatprep.mubr.bf16.mxu0 0
    %1255 = vmatmul.mubr.bf16.gmra.mrb[0].mxu0 %v1048
    %v1256 = vpop.f32.mrb[0].mxu0
    %v1257 = vadd.f32 %v984, %v1256
    %v1258 = vpop.f32.mrb[0].mxu0
    %v1259 = vadd.f32 %v984, %v1258
    %v1260 = vpop.f32.mrb[0].mxu0
    %v1261 = vadd.f32 %v989, %v1260
    %v1262 = vpop.f32.mrb[0].mxu0
    %v1263 = vadd.f32 %v989, %v1262
    %1264 = vmatprep.mubr.bf16.mxu0 0
    %1265 = vmatmul.mubr.bf16.gmra.mrb[0].mxu0 %v1049
    %v1266 = vpop.f32.mrb[0].mxu0
    %v1267 = vadd.f32 %v994, %v1266
    %v1268 = vpop.f32.mrb[0].mxu0
    %v1269 = vadd.f32 %v994, %v1268
    %v1270 = vpop.f32.mrb[0].mxu0
    %v1271 = vadd.f32 %v999, %v1270
    %v1272 = vpop.f32.mrb[0].mxu0
    %v1273 = vadd.f32 %v999, %v1272
    %1274 = vmatprep.mubr.bf16.mxu0 0
    %1275 = vmatmul.mubr.bf16.gmra.mrb[0].mxu0 %v1050
    %v1276 = vpop.f32.mrb[0].mxu0
    %v1277 = vadd.f32 %v1004, %v1276
    %v1278 = vpop.f32.mrb[0].mxu0
    %v1279 = vadd.f32 %v1004, %v1278
    %v1280 = vpop.f32.mrb[0].mxu0
    %v1281 = vadd.f32 %v1009, %v1280
    %v1282 = vpop.f32.mrb[0].mxu0
    %v1283 = vadd.f32 %v1009, %v1282
    %1284 = vdwg.mxu0
    %1285 = vmatprep.subr.bf16.mxu0 %v856
    %1286 = vmatpush1.bf16.msra.mxu0 %v855
    %1287 = vmatprep.subr.bf16.mxu0 %v864
    %1288 = vmatpush1.bf16.msra.mxu0 %v863
    %1289 = vmatprep.subr.bf16.mxu0 %v872
    %1290 = vmatpush1.bf16.msra.mxu0 %v871
    %1291 = vmatprep.subr.bf16.mxu0 %v880
    %1292 = vmatpush1.bf16.msra.mxu0 %v879
    %1293 = vmatprep.subr.bf16.mxu0 %v888
    %1294 = vmatpush1.bf16.msra.mxu0 %v887
    %1295 = vmatprep.subr.bf16.mxu0 %v896
    %1296 = vmatpush1.bf16.msra.mxu0 %v895
    %1297 = vmatprep.subr.bf16.mxu0 %v904
    %1298 = vmatpush1.bf16.msra.mxu0 %v903
    %1299 = vmatprep.subr.bf16.mxu0 %v912
    %1300 = vmatpush1.bf16.msra.mxu0 %v911
    %1301 = vmatprep.subr.bf16.mxu0 0
    %1302 = vmatpush1.bf16.msra.mxu0 0
    %1303 = vmatprep.subr.bf16.mxu0 0
    %1304 = vmatpush1.bf16.msra.mxu0 0
    %1305 = vmatprep.subr.bf16.mxu0 0
    %1306 = vmatpush1.bf16.msra.mxu0 0
    %1307 = vmatprep.subr.bf16.mxu0 0
    %1308 = vmatpush1.bf16.msra.mxu0 0
    %1309 = vmatprep.subr.bf16.mxu0 0
    %1310 = vmatpush1.bf16.msra.mxu0 0
    %1311 = vmatprep.subr.bf16.mxu0 0
    %1312 = vmatpush1.bf16.msra.mxu0 0
    %1313 = vmatprep.subr.bf16.mxu0 0
    %1314 = vmatpush1.bf16.msra.mxu0 0
    %1315 = vmatprep.subr.bf16.mxu0 0
    %1316 = vmatpush1.bf16.msra.mxu0 0
    %1317 = vmatprep.mubr.bf16.mxu0 0
    %1318 = vmatmul.mubr.bf16.gmra.mrb[0].mxu0 %v1043
    %v1319 = vpop.f32.mrb[0].mxu0
    %v1320 = vadd.f32 %v934, %v1319
    %v1321 = vpop.f32.mrb[0].mxu0
    %v1322 = vadd.f32 %v934, %v1321
    %v1323 = vpop.f32.mrb[0].mxu0
    %v1324 = vadd.f32 %v939, %v1323
    %v1325 = vpop.f32.mrb[0].mxu0
    %v1326 = vadd.f32 %v939, %v1325
    %1327 = vmatprep.mubr.bf16.mxu0 0
    %1328 = vmatmul.mubr.bf16.gmra.mrb[0].mxu0 %v1044
    %v1329 = vpop.f32.mrb[0].mxu0
    %v1330 = vadd.f32 %v944, %v1329
    %v1331 = vpop.f32.mrb[0].mxu0
    %v1332 = vadd.f32 %v944, %v1331
    %v1333 = vpop.f32.mrb[0].mxu0
    %v1334 = vadd.f32 %v949, %v1333
    %v1335 = vpop.f32.mrb[0].mxu0
    %v1336 = vadd.f32 %v949, %v1335
    %1337 = vmatprep.mubr.bf16.mxu0 0
    %1338 = vmatmul.mubr.bf16.gmra.mrb[0].mxu0 %v1045
    %v1339 = vpop.f32.mrb[0].mxu0
    %v1340 = vadd.f32 %v954, %v1339
    %v1341 = vpop.f32.mrb[0].mxu0
    %v1342 = vadd.f32 %v954, %v1341
    %v1343 = vpop.f32.mrb[0].mxu0
    %v1344 = vadd.f32 %v959, %v1343
    %v1345 = vpop.f32.mrb[0].mxu0
    %v1346 = vadd.f32 %v959, %v1345
    %1347 = vmatprep.mubr.bf16.mxu0 0
    %1348 = vmatmul.mubr.bf16.gmra.mrb[0].mxu0 %v1046
    %v1349 = vpop.f32.mrb[0].mxu0
    %v1350 = vadd.f32 %v964, %v1349
    %v1351 = vpop.f32.mrb[0].mxu0
    %v1352 = vadd.f32 %v964, %v1351
    %v1353 = vpop.f32.mrb[0].mxu0
    %v1354 = vadd.f32 %v969, %v1353
    %v1355 = vpop.f32.mrb[0].mxu0
    %v1356 = vadd.f32 %v969, %v1355
    %1357 = vmatprep.mubr.bf16.mxu0 0
    %1358 = vmatmul.mubr.bf16.gmra.mrb[0].mxu0 %v1047
    %v1359 = vpop.f32.mrb[0].mxu0
    %v1360 = vadd.f32 %v974, %v1359
    %v1361 = vpop.f32.mrb[0].mxu0
    %v1362 = vadd.f32 %v974, %v1361
    %v1363 = vpop.f32.mrb[0].mxu0
    %v1364 = vadd.f32 %v979, %v1363
    %v1365 = vpop.f32.mrb[0].mxu0
    %v1366 = vadd.f32 %v979, %v1365
    %1367 = vmatprep.mubr.bf16.mxu0 0
    %1368 = vmatmul.mubr.bf16.gmra.mrb[0].mxu0 %v1048
    %v1369 = vpop.f32.mrb[0].mxu0
    %v1370 = vadd.f32 %v984, %v1369
    %v1371 = vpop.f32.mrb[0].mxu0
    %v1372 = vadd.f32 %v984, %v1371
    %v1373 = vpop.f32.mrb[0].mxu0
    %v1374 = vadd.f32 %v989, %v1373
    %v1375 = vpop.f32.mrb[0].mxu0
    %v1376 = vadd.f32 %v989, %v1375
    %1377 = vmatprep.mubr.bf16.mxu0 0
    %1378 = vmatmul.mubr.bf16.gmra.mrb[0].mxu0 %v1049
    %v1379 = vpop.f32.mrb[0].mxu0
    %v1380 = vadd.f32 %v994, %v1379
    %v1381 = vpop.f32.mrb[0].mxu0
    %v1382 = vadd.f32 %v994, %v1381
    %v1383 = vpop.f32.mrb[0].mxu0
    %v1384 = vadd.f32 %v999, %v1383
    %v1385 = vpop.f32.mrb[0].mxu0
    %v1386 = vadd.f32 %v999, %v1385
    %1387 = vmatprep.mubr.bf16.mxu0 0
    %1388 = vmatmul.mubr.bf16.gmra.mrb[0].mxu0 %v1050
    %v1389 = vpop.f32.mrb[0].mxu0
    %v1390 = vadd.f32 %v1004, %v1389
    %v1391 = vpop.f32.mrb[0].mxu0
    %v1392 = vadd.f32 %v1004, %v1391
    %v1393 = vpop.f32.mrb[0].mxu0
    %v1394 = vadd.f32 %v1009, %v1393
    %v1395 = vpop.f32.mrb[0].mxu0
    %v1396 = vadd.f32 %v1009, %v1395
    %1397 = vdwg.mxu0
    %1398 = vmatprep.subr.bf16.mxu0 %v858
    %1399 = vmatpush1.bf16.msra.mxu0 %v857
    %1400 = vmatprep.subr.bf16.mxu0 %v866
    %1401 = vmatpush1.bf16.msra.mxu0 %v865
    %1402 = vmatprep.subr.bf16.mxu0 %v874
    %1403 = vmatpush1.bf16.msra.mxu0 %v873
    %1404 = vmatprep.subr.bf16.mxu0 %v882
    %1405 = vmatpush1.bf16.msra.mxu0 %v881
    %1406 = vmatprep.subr.bf16.mxu0 %v890
    %1407 = vmatpush1.bf16.msra.mxu0 %v889
    %1408 = vmatprep.subr.bf16.mxu0 %v898
    %1409 = vmatpush1.bf16.msra.mxu0 %v897
    %1410 = vmatprep.subr.bf16.mxu0 %v906
    %1411 = vmatpush1.bf16.msra.mxu0 %v905
    %1412 = vmatprep.subr.bf16.mxu0 %v914
    %1413 = vmatpush1.bf16.msra.mxu0 %v913
    %1414 = vmatprep.subr.bf16.mxu0 0
    %1415 = vmatpush1.bf16.msra.mxu0 0
    %1416 = vmatprep.subr.bf16.mxu0 0
    %1417 = vmatpush1.bf16.msra.mxu0 0
    %1418 = vmatprep.subr.bf16.mxu0 0
    %1419 = vmatpush1.bf16.msra.mxu0 0
    %1420 = vmatprep.subr.bf16.mxu0 0
    %1421 = vmatpush1.bf16.msra.mxu0 0
    %1422 = vmatprep.subr.bf16.mxu0 0
    %1423 = vmatpush1.bf16.msra.mxu0 0
    %1424 = vmatprep.subr.bf16.mxu0 0
    %1425 = vmatpush1.bf16.msra.mxu0 0
    %1426 = vmatprep.subr.bf16.mxu0 0
    %1427 = vmatpush1.bf16.msra.mxu0 0
    %1428 = vmatprep.subr.bf16.mxu0 0
    %1429 = vmatpush1.bf16.msra.mxu0 0
    %1430 = vmatprep.mubr.bf16.mxu0 0
    %1431 = vmatmul.mubr.bf16.gmra.mrb[0].mxu0 %v1043
    %v1432 = vpop.f32.mrb[0].mxu0
    %v1433 = vadd.f32 %v934, %v1432
    %v1434 = vpop.f32.mrb[0].mxu0
    %v1435 = vadd.f32 %v934, %v1434
    %v1436 = vpop.f32.mrb[0].mxu0
    %v1437 = vadd.f32 %v939, %v1436
    %v1438 = vpop.f32.mrb[0].mxu0
    %v1439 = vadd.f32 %v939, %v1438
    %1440 = vmatprep.mubr.bf16.mxu0 0
    %1441 = vmatmul.mubr.bf16.gmra.mrb[0].mxu0 %v1044
    %v1442 = vpop.f32.mrb[0].mxu0
    %v1443 = vadd.f32 %v944, %v1442
    %v1444 = vpop.f32.mrb[0].mxu0
    %v1445 = vadd.f32 %v944, %v1444
    %v1446 = vpop.f32.mrb[0].mxu0
    %v1447 = vadd.f32 %v949, %v1446
    %v1448 = vpop.f32.mrb[0].mxu0
    %v1449 = vadd.f32 %v949, %v1448
    %1450 = vmatprep.mubr.bf16.mxu0 0
    %1451 = vmatmul.mubr.bf16.gmra.mrb[0].mxu0 %v1045
    %v1452 = vpop.f32.mrb[0].mxu0
    %v1453 = vadd.f32 %v954, %v1452
    %v1454 = vpop.f32.mrb[0].mxu0
    %v1455 = vadd.f32 %v954, %v1454
    %v1456 = vpop.f32.mrb[0].mxu0
    %v1457 = vadd.f32 %v959, %v1456
    %v1458 = vpop.f32.mrb[0].mxu0
    %v1459 = vadd.f32 %v959, %v1458
    %1460 = vmatprep.mubr.bf16.mxu0 0
    %1461 = vmatmul.mubr.bf16.gmra.mrb[0].mxu0 %v1046
    %v1462 = vpop.f32.mrb[0].mxu0
    %v1463 = vadd.f32 %v964, %v1462
    %v1464 = vpop.f32.mrb[0].mxu0
    %v1465 = vadd.f32 %v964, %v1464
    %v1466 = vpop.f32.mrb[0].mxu0
    %v1467 = vadd.f32 %v969, %v1466
    %v1468 = vpop.f32.mrb[0].mxu0
    %v1469 = vadd.f32 %v969, %v1468
    %1470 = vmatprep.mubr.bf16.mxu0 0
    %1471 = vmatmul.mubr.bf16.gmra.mrb[0].mxu0 %v1047
    %v1472 = vpop.f32.mrb[0].mxu0
    %v1473 = vadd.f32 %v974, %v1472
    %v1474 = vpop.f32.mrb[0].mxu0
    %v1475 = vadd.f32 %v974, %v1474
    %v1476 = vpop.f32.mrb[0].mxu0
    %v1477 = vadd.f32 %v979, %v1476
    %v1478 = vpop.f32.mrb[0].mxu0
    %v1479 = vadd.f32 %v979, %v1478
    %1480 = vmatprep.mubr.bf16.mxu0 0
    %1481 = vmatmul.mubr.bf16.gmra.mrb[0].mxu0 %v1048
    %v1482 = vpop.f32.mrb[0].mxu0
    %v1483 = vadd.f32 %v984, %v1482
    %v1484 = vpop.f32.mrb[0].mxu0
    %v1485 = vadd.f32 %v984, %v1484
    %v1486 = vpop.f32.mrb[0].mxu0
    %v1487 = vadd.f32 %v989, %v1486
    %v1488 = vpop.f32.mrb[0].mxu0
    %v1489 = vadd.f32 %v989, %v1488
    %1490 = vmatprep.mubr.bf16.mxu0 0
    %1491 = vmatmul.mubr.bf16.gmra.mrb[0].mxu0 %v1049
    %v1492 = vpop.f32.mrb[0].mxu0
    %v1493 = vadd.f32 %v994, %v1492
    %v1494 = vpop.f32.mrb[0].mxu0
    %v1495 = vadd.f32 %v994, %v1494
    %v1496 = vpop.f32.mrb[0].mxu0
    %v1497 = vadd.f32 %v999, %v1496
    %v1498 = vpop.f32.mrb[0].mxu0
    %v1499 = vadd.f32 %v999, %v1498
    %1500 = vmatprep.mubr.bf16.mxu0 0
    %1501 = vmatmul.mubr.bf16.gmra.mrb[0].mxu0 %v1050
    %v1502 = vpop.f32.mrb[0].mxu0
    %v1503 = vadd.f32 %v1004, %v1502
    %v1504 = vpop.f32.mrb[0].mxu0
    %v1505 = vadd.f32 %v1004, %v1504
    %v1506 = vpop.f32.mrb[0].mxu0
    %v1507 = vadd.f32 %v1009, %v1506
    %v1508 = vpop.f32.mrb[0].mxu0
    %v1509 = vadd.f32 %v1009, %v1508
    %1510 = vdwg.mxu0
    %v1511 = vld [vmem:[%s5] sm:$0xf]
    %v1512 = vld [vmem:[%s5 + $0x4] sm:$0xf]
    %v1513 = vld [vmem:[%s5 + $0x8] sm:$0xf]
    %v1514 = vld [vmem:[%s5 + $0xc] sm:$0xf]
    %v1515 = vld [vmem:[%s5 + $0x10] sm:$0xf]
    %v1516 = vld [vmem:[%s5 + $0x14] sm:$0xf]
    %v1517 = vld [vmem:[%s5 + $0x18] sm:$0xf]
    %v1518 = vld [vmem:[%s5 + $0x1c] sm:$0xf]
    %v1519 = vld [vmem:[%s5 + $0x20] sm:$0xf]
    %v1520 = vld [vmem:[%s5 + $0x24] sm:$0xf]
    %v1521 = vld [vmem:[%s5 + $0x28] sm:$0xf]
    %v1522 = vld [vmem:[%s5 + $0x2c] sm:$0xf]
    %v1523 = vld [vmem:[%s5 + $0x30] sm:$0xf]
    %v1524 = vld [vmem:[%s5 + $0x34] sm:$0xf]
    %v1525 = vld [vmem:[%s5 + $0x38] sm:$0xf]
    %v1526 = vld [vmem:[%s5 + $0x3c] sm:$0xf]
    %v1527 = vpack.c.bf16 %v1098, %v1094
    %v1528 = vpack.c.bf16 %v1100, %v1096
    %v1529 = vpack.c.bf16 %v1211, %v1207
    %v1530 = vpack.c.bf16 %v1213, %v1209
    %v1531 = vpack.c.bf16 %v1324, %v1320
    %v1532 = vpack.c.bf16 %v1326, %v1322
    %v1533 = vpack.c.bf16 %v1437, %v1433
    %v1534 = vpack.c.bf16 %v1439, %v1435
    %v1535 = vpack.c.bf16 %v1108, %v1104
    %v1536 = vpack.c.bf16 %v1110, %v1106
    %v1537 = vpack.c.bf16 %v1221, %v1217
    %v1538 = vpack.c.bf16 %v1223, %v1219
    %v1539 = vpack.c.bf16 %v1334, %v1330
    %v1540 = vpack.c.bf16 %v1336, %v1332
    %v1541 = vpack.c.bf16 %v1447, %v1443
    %v1542 = vpack.c.bf16 %v1449, %v1445
    %v1543 = vpack.c.bf16 %v1118, %v1114
    %v1544 = vpack.c.bf16 %v1120, %v1116
    %v1545 = vpack.c.bf16 %v1231, %v1227
    %v1546 = vpack.c.bf16 %v1233, %v1229
    %v1547 = vpack.c.bf16 %v1344, %v1340
    %v1548 = vpack.c.bf16 %v1346, %v1342
    %v1549 = vpack.c.bf16 %v1457, %v1453
    %v1550 = vpack.c.bf16 %v1459, %v1455
    %v1551 = vpack.c.bf16 %v1128, %v1124
    %v1552 = vpack.c.bf16 %v1130, %v1126
    %v1553 = vpack.c.bf16 %v1241, %v1237
    %v1554 = vpack.c.bf16 %v1243, %v1239
    %v1555 = vpack.c.bf16 %v1354, %v1350
    %v1556 = vpack.c.bf16 %v1356, %v1352
    %v1557 = vpack.c.bf16 %v1467, %v1463
    %v1558 = vpack.c.bf16 %v1469, %v1465
    %v1559 = vpack.c.bf16 %v1138, %v1134
    %v1560 = vpack.c.bf16 %v1140, %v1136
    %v1561 = vpack.c.bf16 %v1251, %v1247
    %v1562 = vpack.c.bf16 %v1253, %v1249
    %v1563 = vpack.c.bf16 %v1364, %v1360
    %v1564 = vpack.c.bf16 %v1366, %v1362
    %v1565 = vpack.c.bf16 %v1477, %v1473
    %v1566 = vpack.c.bf16 %v1479, %v1475
    %v1567 = vpack.c.bf16 %v1148, %v1144
    %v1568 = vpack.c.bf16 %v1150, %v1146
    %v1569 = vpack.c.bf16 %v1261, %v1257
    %v1570 = vpack.c.bf16 %v1263, %v1259
    %v1571 = vpack.c.bf16 %v1374, %v1370
    %v1572 = vpack.c.bf16 %v1376, %v1372
    %v1573 = vpack.c.bf16 %v1487, %v1483
    %v1574 = vpack.c.bf16 %v1489, %v1485
    %v1575 = vpack.c.bf16 %v1158, %v1154
    %v1576 = vpack.c.bf16 %v1160, %v1156
    %v1577 = vpack.c.bf16 %v1271, %v1267
    %v1578 = vpack.c.bf16 %v1273, %v1269
    %v1579 = vpack.c.bf16 %v1384, %v1380
    %v1580 = vpack.c.bf16 %v1386, %v1382
    %v1581 = vpack.c.bf16 %v1497, %v1493
    %v1582 = vpack.c.bf16 %v1499, %v1495
    %v1583 = vpack.c.bf16 %v1168, %v1164
    %v1584 = vpack.c.bf16 %v1170, %v1166
    %v1585 = vpack.c.bf16 %v1281, %v1277
    %v1586 = vpack.c.bf16 %v1283, %v1279
    %v1587 = vpack.c.bf16 %v1394, %v1390
    %v1588 = vpack.c.bf16 %v1396, %v1392
    %v1589 = vpack.c.bf16 %v1507, %v1503
    %v1590 = vpack.c.bf16 %v1509, %v1505
    %v1591 = vld [vmem:[%s6] sm:$0xf]
    %v1592 = vld [vmem:[%s6 + $0x4] sm:$0xf]
    %v1593 = vld [vmem:[%s6 + $0x8] sm:$0xf]
    %v1594 = vld [vmem:[%s6 + $0xc] sm:$0xf]
    %v1595 = vld [vmem:[%s6 + $0x10] sm:$0xf]
    %v1596 = vld [vmem:[%s6 + $0x14] sm:$0xf]
    %v1597 = vld [vmem:[%s6 + $0x18] sm:$0xf]
    %v1598 = vld [vmem:[%s6 + $0x1c] sm:$0xf]
    %v1599 = vld [vmem:[%s6 + $0x20] sm:$0xf]
    %v1600 = vld [vmem:[%s6 + $0x24] sm:$0xf]
    %v1601 = vld [vmem:[%s6 + $0x28] sm:$0xf]
    %v1602 = vld [vmem:[%s6 + $0x2c] sm:$0xf]
    %v1603 = vld [vmem:[%s6 + $0x30] sm:$0xf]
    %v1604 = vld [vmem:[%s6 + $0x34] sm:$0xf]
    %v1605 = vld [vmem:[%s6 + $0x38] sm:$0xf]
    %v1606 = vld [vmem:[%s6 + $0x3c] sm:$0xf]
    %v1623 = vunpack.c.l.b16 %v1591
    %v1624 = vunpack.c.l.b16 %v1592
    %v1625 = vunpack.c.l.b16 %v1593
    %v1626 = vunpack.c.l.b16 %v1594
    %v1627 = vunpack.c.l.b16 %v1595
    %v1628 = vunpack.c.l.b16 %v1596
    %v1629 = vunpack.c.l.b16 %v1597
    %v1630 = vunpack.c.l.b16 %v1598
    %v1631 = vunpack.c.l.b16 %v1599
    %v1632 = vunpack.c.l.b16 %v1600
    %v1633 = vunpack.c.l.b16 %v1601
    %v1634 = vunpack.c.l.b16 %v1602
    %v1635 = vunpack.c.l.b16 %v1603
    %v1636 = vunpack.c.l.b16 %v1604
    %v1637 = vunpack.c.l.b16 %v1605
    %v1638 = vunpack.c.l.b16 %v1606
    %v1639 = vpack.c.b16 %v1624, %v1623
    %v1640 = vpack.c.b16 %v1626, %v1625
    %v1641 = vpack.c.b16 %v1628, %v1627
    %v1642 = vpack.c.b16 %v1630, %v1629
    %v1643 = vpack.c.b16 %v1632, %v1631
    %v1644 = vpack.c.b16 %v1634, %v1633
    %v1645 = vpack.c.b16 %v1636, %v1635
    %v1646 = vpack.c.b16 %v1638, %v1637
    %v1648 = vsel %vm205, %v1639, 0
    %v1651 = vsel %vm205, %v1640, 0
    %v1654 = vsel %vm205, %v1641, 0
    %v1657 = vsel %vm205, %v1642, 0
    %v1660 = vsel %vm205, %v1643, 0
    %v1663 = vsel %vm205, %v1644, 0
    %v1666 = vsel %vm205, %v1645, 0
    %v1669 = vsel %vm205, %v1646, 0
    %1671 = vmatprep.subr.bf16.mxu0 %v235
    %1672 = vmatpush1.bf16.msra.mxu0 %v232
    %1673 = vmatprep.subr.bf16.mxu0 0
    %1674 = vmatpush1.bf16.msra.mxu0 0
    %1675 = vmatprep.subr.bf16.mxu0 0
    %1676 = vmatpush1.bf16.msra.mxu0 0
    %1677 = vmatprep.subr.bf16.mxu0 0
    %1678 = vmatpush1.bf16.msra.mxu0 0
    %1679 = vmatprep.subr.bf16.mxu0 0
    %1680 = vmatpush1.bf16.msra.mxu0 0
    %1681 = vmatprep.subr.bf16.mxu0 0
    %1682 = vmatpush1.bf16.msra.mxu0 0
    %1683 = vmatprep.subr.bf16.mxu0 0
    %1684 = vmatpush1.bf16.msra.mxu0 0
    %1685 = vmatprep.subr.bf16.mxu0 0
    %1686 = vmatpush1.bf16.msra.mxu0 0
    %1687 = vmatprep.subr.bf16.mxu0 0
    %1688 = vmatpush1.bf16.msra.mxu0 0
    %1689 = vmatprep.subr.bf16.mxu0 0
    %1690 = vmatpush1.bf16.msra.mxu0 0
    %1691 = vmatprep.subr.bf16.mxu0 0
    %1692 = vmatpush1.bf16.msra.mxu0 0
    %1693 = vmatprep.subr.bf16.mxu0 0
    %1694 = vmatpush1.bf16.msra.mxu0 0
    %1695 = vmatprep.subr.bf16.mxu0 0
    %1696 = vmatpush1.bf16.msra.mxu0 0
    %1697 = vmatprep.subr.bf16.mxu0 0
    %1698 = vmatpush1.bf16.msra.mxu0 0
    %1699 = vmatprep.subr.bf16.mxu0 0
    %1700 = vmatpush1.bf16.msra.mxu0 0
    %1701 = vmatprep.subr.bf16.mxu0 0
    %1702 = vmatpush1.bf16.msra.mxu0 0
    %1703 = vmatprep.mubr.bf16.mxu0 0
    %1704 = vmatmul.mubr.bf16.gmra.mrb[0].mxu0 %v1648
    %v1705 = vpop.f32.mrb[0].mxu0
    %v1706 = vadd.f32 0.0, %v1705
    %v1707 = vpop.f32.mrb[0].mxu0
    %v1708 = vadd.f32 0.0, %v1707
    %v1709 = vpop.f32.mrb[0].mxu0
    %v1710 = vadd.f32 0.0, %v1709
    %v1711 = vpop.f32.mrb[0].mxu0
    %v1712 = vadd.f32 0.0, %v1711
    %1713 = vmatprep.mubr.bf16.mxu0 0
    %1714 = vmatmul.mubr.bf16.gmra.mrb[0].mxu0 %v1651
    %v1715 = vpop.f32.mrb[0].mxu0
    %v1716 = vadd.f32 0.0, %v1715
    %v1717 = vpop.f32.mrb[0].mxu0
    %v1718 = vadd.f32 0.0, %v1717
    %v1719 = vpop.f32.mrb[0].mxu0
    %v1720 = vadd.f32 0.0, %v1719
    %v1721 = vpop.f32.mrb[0].mxu0
    %v1722 = vadd.f32 0.0, %v1721
    %1723 = vmatprep.mubr.bf16.mxu0 0
    %1724 = vmatmul.mubr.bf16.gmra.mrb[0].mxu0 %v1654
    %v1725 = vpop.f32.mrb[0].mxu0
    %v1726 = vadd.f32 0.0, %v1725
    %v1727 = vpop.f32.mrb[0].mxu0
    %v1728 = vadd.f32 0.0, %v1727
    %v1729 = vpop.f32.mrb[0].mxu0
    %v1730 = vadd.f32 0.0, %v1729
    %v1731 = vpop.f32.mrb[0].mxu0
    %v1732 = vadd.f32 0.0, %v1731
    %1733 = vmatprep.mubr.bf16.mxu0 0
    %1734 = vmatmul.mubr.bf16.gmra.mrb[0].mxu0 %v1657
    %v1735 = vpop.f32.mrb[0].mxu0
    %v1736 = vadd.f32 0.0, %v1735
    %v1737 = vpop.f32.mrb[0].mxu0
    %v1738 = vadd.f32 0.0, %v1737
    %v1739 = vpop.f32.mrb[0].mxu0
    %v1740 = vadd.f32 0.0, %v1739
    %v1741 = vpop.f32.mrb[0].mxu0
    %v1742 = vadd.f32 0.0, %v1741
    %1743 = vmatprep.mubr.bf16.mxu0 0
    %1744 = vmatmul.mubr.bf16.gmra.mrb[0].mxu0 %v1660
    %v1745 = vpop.f32.mrb[0].mxu0
    %v1746 = vadd.f32 0.0, %v1745
    %v1747 = vpop.f32.mrb[0].mxu0
    %v1748 = vadd.f32 0.0, %v1747
    %v1749 = vpop.f32.mrb[0].mxu0
    %v1750 = vadd.f32 0.0, %v1749
    %v1751 = vpop.f32.mrb[0].mxu0
    %v1752 = vadd.f32 0.0, %v1751
    %1753 = vmatprep.mubr.bf16.mxu0 0
    %1754 = vmatmul.mubr.bf16.gmra.mrb[0].mxu0 %v1663
    %v1755 = vpop.f32.mrb[0].mxu0
    %v1756 = vadd.f32 0.0, %v1755
    %v1757 = vpop.f32.mrb[0].mxu0
    %v1758 = vadd.f32 0.0, %v1757
    %v1759 = vpop.f32.mrb[0].mxu0
    %v1760 = vadd.f32 0.0, %v1759
    %v1761 = vpop.f32.mrb[0].mxu0
    %v1762 = vadd.f32 0.0, %v1761
    %1763 = vmatprep.mubr.bf16.mxu0 0
    %1764 = vmatmul.mubr.bf16.gmra.mrb[0].mxu0 %v1666
    %v1765 = vpop.f32.mrb[0].mxu0
    %v1766 = vadd.f32 0.0, %v1765
    %v1767 = vpop.f32.mrb[0].mxu0
    %v1768 = vadd.f32 0.0, %v1767
    %v1769 = vpop.f32.mrb[0].mxu0
    %v1770 = vadd.f32 0.0, %v1769
    %v1771 = vpop.f32.mrb[0].mxu0
    %v1772 = vadd.f32 0.0, %v1771
    %1773 = vmatprep.mubr.bf16.mxu0 0
    %1774 = vmatmul.mubr.bf16.gmra.mrb[0].mxu0 %v1669
    %v1775 = vpop.f32.mrb[0].mxu0
    %v1776 = vadd.f32 0.0, %v1775
    %v1777 = vpop.f32.mrb[0].mxu0
    %v1778 = vadd.f32 0.0, %v1777
    %v1779 = vpop.f32.mrb[0].mxu0
    %v1780 = vadd.f32 0.0, %v1779
    %v1781 = vpop.f32.mrb[0].mxu0
    %v1782 = vadd.f32 0.0, %v1781
    %1783 = vdwg.mxu0
    %1784 = vmatprep.subr.bf16.mxu0 %v241
    %1785 = vmatpush1.bf16.msra.mxu0 %v238
    %1786 = vmatprep.subr.bf16.mxu0 0
    %1787 = vmatpush1.bf16.msra.mxu0 0
    %1788 = vmatprep.subr.bf16.mxu0 0
    %1789 = vmatpush1.bf16.msra.mxu0 0
    %1790 = vmatprep.subr.bf16.mxu0 0
    %1791 = vmatpush1.bf16.msra.mxu0 0
    %1792 = vmatprep.subr.bf16.mxu0 0
    %1793 = vmatpush1.bf16.msra.mxu0 0
    %1794 = vmatprep.subr.bf16.mxu0 0
    %1795 = vmatpush1.bf16.msra.mxu0 0
    %1796 = vmatprep.subr.bf16.mxu0 0
    %1797 = vmatpush1.bf16.msra.mxu0 0
    %1798 = vmatprep.subr.bf16.mxu0 0
    %1799 = vmatpush1.bf16.msra.mxu0 0
    %1800 = vmatprep.subr.bf16.mxu0 0
    %1801 = vmatpush1.bf16.msra.mxu0 0
    %1802 = vmatprep.subr.bf16.mxu0 0
    %1803 = vmatpush1.bf16.msra.mxu0 0
    %1804 = vmatprep.subr.bf16.mxu0 0
    %1805 = vmatpush1.bf16.msra.mxu0 0
    %1806 = vmatprep.subr.bf16.mxu0 0
    %1807 = vmatpush1.bf16.msra.mxu0 0
    %1808 = vmatprep.subr.bf16.mxu0 0
    %1809 = vmatpush1.bf16.msra.mxu0 0
    %1810 = vmatprep.subr.bf16.mxu0 0
    %1811 = vmatpush1.bf16.msra.mxu0 0
    %1812 = vmatprep.subr.bf16.mxu0 0
    %1813 = vmatpush1.bf16.msra.mxu0 0
    %1814 = vmatprep.subr.bf16.mxu0 0
    %1815 = vmatpush1.bf16.msra.mxu0 0
    %1816 = vmatprep.mubr.bf16.mxu0 0
    %1817 = vmatmul.mubr.bf16.gmra.mrb[0].mxu0 %v1648
    %v1818 = vpop.f32.mrb[0].mxu0
    %v1819 = vadd.f32 0.0, %v1818
    %v1820 = vpop.f32.mrb[0].mxu0
    %v1821 = vadd.f32 0.0, %v1820
    %v1822 = vpop.f32.mrb[0].mxu0
    %v1823 = vadd.f32 0.0, %v1822
    %v1824 = vpop.f32.mrb[0].mxu0
    %v1825 = vadd.f32 0.0, %v1824
    %1826 = vmatprep.mubr.bf16.mxu0 0
    %1827 = vmatmul.mubr.bf16.gmra.mrb[0].mxu0 %v1651
    %v1828 = vpop.f32.mrb[0].mxu0
    %v1829 = vadd.f32 0.0, %v1828
    %v1830 = vpop.f32.mrb[0].mxu0
    %v1831 = vadd.f32 0.0, %v1830
    %v1832 = vpop.f32.mrb[0].mxu0
    %v1833 = vadd.f32 0.0, %v1832
    %v1834 = vpop.f32.mrb[0].mxu0
    %v1835 = vadd.f32 0.0, %v1834
    %1836 = vmatprep.mubr.bf16.mxu0 0
    %1837 = vmatmul.mubr.bf16.gmra.mrb[0].mxu0 %v1654
    %v1838 = vpop.f32.mrb[0].mxu0
    %v1839 = vadd.f32 0.0, %v1838
    %v1840 = vpop.f32.mrb[0].mxu0
    %v1841 = vadd.f32 0.0, %v1840
    %v1842 = vpop.f32.mrb[0].mxu0
    %v1843 = vadd.f32 0.0, %v1842
    %v1844 = vpop.f32.mrb[0].mxu0
    %v1845 = vadd.f32 0.0, %v1844
    %1846 = vmatprep.mubr.bf16.mxu0 0
    %1847 = vmatmul.mubr.bf16.gmra.mrb[0].mxu0 %v1657
    %v1848 = vpop.f32.mrb[0].mxu0
    %v1849 = vadd.f32 0.0, %v1848
    %v1850 = vpop.f32.mrb[0].mxu0
    %v1851 = vadd.f32 0.0, %v1850
    %v1852 = vpop.f32.mrb[0].mxu0
    %v1853 = vadd.f32 0.0, %v1852
    %v1854 = vpop.f32.mrb[0].mxu0
    %v1855 = vadd.f32 0.0, %v1854
    %1856 = vmatprep.mubr.bf16.mxu0 0
    %1857 = vmatmul.mubr.bf16.gmra.mrb[0].mxu0 %v1660
    %v1858 = vpop.f32.mrb[0].mxu0
    %v1859 = vadd.f32 0.0, %v1858
    %v1860 = vpop.f32.mrb[0].mxu0
    %v1861 = vadd.f32 0.0, %v1860
    %v1862 = vpop.f32.mrb[0].mxu0
    %v1863 = vadd.f32 0.0, %v1862
    %v1864 = vpop.f32.mrb[0].mxu0
    %v1865 = vadd.f32 0.0, %v1864
    %1866 = vmatprep.mubr.bf16.mxu0 0
    %1867 = vmatmul.mubr.bf16.gmra.mrb[0].mxu0 %v1663
    %v1868 = vpop.f32.mrb[0].mxu0
    %v1869 = vadd.f32 0.0, %v1868
    %v1870 = vpop.f32.mrb[0].mxu0
    %v1871 = vadd.f32 0.0, %v1870
    %v1872 = vpop.f32.mrb[0].mxu0
    %v1873 = vadd.f32 0.0, %v1872
    %v1874 = vpop.f32.mrb[0].mxu0
    %v1875 = vadd.f32 0.0, %v1874
    %1876 = vmatprep.mubr.bf16.mxu0 0
    %1877 = vmatmul.mubr.bf16.gmra.mrb[0].mxu0 %v1666
    %v1878 = vpop.f32.mrb[0].mxu0
    %v1879 = vadd.f32 0.0, %v1878
    %v1880 = vpop.f32.mrb[0].mxu0
    %v1881 = vadd.f32 0.0, %v1880
    %v1882 = vpop.f32.mrb[0].mxu0
    %v1883 = vadd.f32 0.0, %v1882
    %v1884 = vpop.f32.mrb[0].mxu0
    %v1885 = vadd.f32 0.0, %v1884
    %1886 = vmatprep.mubr.bf16.mxu0 0
    %1887 = vmatmul.mubr.bf16.gmra.mrb[0].mxu0 %v1669
    %v1888 = vpop.f32.mrb[0].mxu0
    %v1889 = vadd.f32 0.0, %v1888
    %v1890 = vpop.f32.mrb[0].mxu0
    %v1891 = vadd.f32 0.0, %v1890
    %v1892 = vpop.f32.mrb[0].mxu0
    %v1893 = vadd.f32 0.0, %v1892
    %v1894 = vpop.f32.mrb[0].mxu0
    %v1895 = vadd.f32 0.0, %v1894
    %1896 = vdwg.mxu0
    %1897 = vmatprep.subr.bf16.mxu0 %v247
    %1898 = vmatpush1.bf16.msra.mxu0 %v244
    %1899 = vmatprep.subr.bf16.mxu0 0
    %1900 = vmatpush1.bf16.msra.mxu0 0
    %1901 = vmatprep.subr.bf16.mxu0 0
    %1902 = vmatpush1.bf16.msra.mxu0 0
    %1903 = vmatprep.subr.bf16.mxu0 0
    %1904 = vmatpush1.bf16.msra.mxu0 0
    %1905 = vmatprep.subr.bf16.mxu0 0
    %1906 = vmatpush1.bf16.msra.mxu0 0
    %1907 = vmatprep.subr.bf16.mxu0 0
    %1908 = vmatpush1.bf16.msra.mxu0 0
    %1909 = vmatprep.subr.bf16.mxu0 0
    %1910 = vmatpush1.bf16.msra.mxu0 0
    %1911 = vmatprep.subr.bf16.mxu0 0
    %1912 = vmatpush1.bf16.msra.mxu0 0
    %1913 = vmatprep.subr.bf16.mxu0 0
    %1914 = vmatpush1.bf16.msra.mxu0 0
    %1915 = vmatprep.subr.bf16.mxu0 0
    %1916 = vmatpush1.bf16.msra.mxu0 0
    %1917 = vmatprep.subr.bf16.mxu0 0
    %1918 = vmatpush1.bf16.msra.mxu0 0
    %1919 = vmatprep.subr.bf16.mxu0 0
    %1920 = vmatpush1.bf16.msra.mxu0 0
    %1921 = vmatprep.subr.bf16.mxu0 0
    %1922 = vmatpush1.bf16.msra.mxu0 0
    %1923 = vmatprep.subr.bf16.mxu0 0
    %1924 = vmatpush1.bf16.msra.mxu0 0
    %1925 = vmatprep.subr.bf16.mxu0 0
    %1926 = vmatpush1.bf16.msra.mxu0 0
    %1927 = vmatprep.subr.bf16.mxu0 0
    %1928 = vmatpush1.bf16.msra.mxu0 0
    %1929 = vmatprep.mubr.bf16.mxu0 0
    %1930 = vmatmul.mubr.bf16.gmra.mrb[0].mxu0 %v1648
    %v1931 = vpop.f32.mrb[0].mxu0
    %v1932 = vadd.f32 0.0, %v1931
    %v1933 = vpop.f32.mrb[0].mxu0
    %v1934 = vadd.f32 0.0, %v1933
    %v1935 = vpop.f32.mrb[0].mxu0
    %v1936 = vadd.f32 0.0, %v1935
    %v1937 = vpop.f32.mrb[0].mxu0
    %v1938 = vadd.f32 0.0, %v1937
    %1939 = vmatprep.mubr.bf16.mxu0 0
    %1940 = vmatmul.mubr.bf16.gmra.mrb[0].mxu0 %v1651
    %v1941 = vpop.f32.mrb[0].mxu0
    %v1942 = vadd.f32 0.0, %v1941
    %v1943 = vpop.f32.mrb[0].mxu0
    %v1944 = vadd.f32 0.0, %v1943
    %v1945 = vpop.f32.mrb[0].mxu0
    %v1946 = vadd.f32 0.0, %v1945
    %v1947 = vpop.f32.mrb[0].mxu0
    %v1948 = vadd.f32 0.0, %v1947
    %1949 = vmatprep.mubr.bf16.mxu0 0
    %1950 = vmatmul.mubr.bf16.gmra.mrb[0].mxu0 %v1654
    %v1951 = vpop.f32.mrb[0].mxu0
    %v1952 = vadd.f32 0.0, %v1951
    %v1953 = vpop.f32.mrb[0].mxu0
    %v1954 = vadd.f32 0.0, %v1953
    %v1955 = vpop.f32.mrb[0].mxu0
    %v1956 = vadd.f32 0.0, %v1955
    %v1957 = vpop.f32.mrb[0].mxu0
    %v1958 = vadd.f32 0.0, %v1957
    %1959 = vmatprep.mubr.bf16.mxu0 0
    %1960 = vmatmul.mubr.bf16.gmra.mrb[0].mxu0 %v1657
    %v1961 = vpop.f32.mrb[0].mxu0
    %v1962 = vadd.f32 0.0, %v1961
    %v1963 = vpop.f32.mrb[0].mxu0
    %v1964 = vadd.f32 0.0, %v1963
    %v1965 = vpop.f32.mrb[0].mxu0
    %v1966 = vadd.f32 0.0, %v1965
    %v1967 = vpop.f32.mrb[0].mxu0
    %v1968 = vadd.f32 0.0, %v1967
    %1969 = vmatprep.mubr.bf16.mxu0 0
    %1970 = vmatmul.mubr.bf16.gmra.mrb[0].mxu0 %v1660
    %v1971 = vpop.f32.mrb[0].mxu0
    %v1972 = vadd.f32 0.0, %v1971
    %v1973 = vpop.f32.mrb[0].mxu0
    %v1974 = vadd.f32 0.0, %v1973
    %v1975 = vpop.f32.mrb[0].mxu0
    %v1976 = vadd.f32 0.0, %v1975
    %v1977 = vpop.f32.mrb[0].mxu0
    %v1978 = vadd.f32 0.0, %v1977
    %1979 = vmatprep.mubr.bf16.mxu0 0
    %1980 = vmatmul.mubr.bf16.gmra.mrb[0].mxu0 %v1663
    %v1981 = vpop.f32.mrb[0].mxu0
    %v1982 = vadd.f32 0.0, %v1981
    %v1983 = vpop.f32.mrb[0].mxu0
    %v1984 = vadd.f32 0.0, %v1983
    %v1985 = vpop.f32.mrb[0].mxu0
    %v1986 = vadd.f32 0.0, %v1985
    %v1987 = vpop.f32.mrb[0].mxu0
    %v1988 = vadd.f32 0.0, %v1987
    %1989 = vmatprep.mubr.bf16.mxu0 0
    %1990 = vmatmul.mubr.bf16.gmra.mrb[0].mxu0 %v1666
    %v1991 = vpop.f32.mrb[0].mxu0
    %v1992 = vadd.f32 0.0, %v1991
    %v1993 = vpop.f32.mrb[0].mxu0
    %v1994 = vadd.f32 0.0, %v1993
    %v1995 = vpop.f32.mrb[0].mxu0
    %v1996 = vadd.f32 0.0, %v1995
    %v1997 = vpop.f32.mrb[0].mxu0
    %v1998 = vadd.f32 0.0, %v1997
    %1999 = vmatprep.mubr.bf16.mxu0 0
    %2000 = vmatmul.mubr.bf16.gmra.mrb[0].mxu0 %v1669
    %v2001 = vpop.f32.mrb[0].mxu0
    %v2002 = vadd.f32 0.0, %v2001
    %v2003 = vpop.f32.mrb[0].mxu0
    %v2004 = vadd.f32 0.0, %v2003
    %v2005 = vpop.f32.mrb[0].mxu0
    %v2006 = vadd.f32 0.0, %v2005
    %v2007 = vpop.f32.mrb[0].mxu0
    %v2008 = vadd.f32 0.0, %v2007
    %2009 = vdwg.mxu0
    %2010 = vmatprep.subr.bf16.mxu0 %v253
    %2011 = vmatpush1.bf16.msra.mxu0 %v250
    %2012 = vmatprep.subr.bf16.mxu0 0
    %2013 = vmatpush1.bf16.msra.mxu0 0
    %2014 = vmatprep.subr.bf16.mxu0 0
    %2015 = vmatpush1.bf16.msra.mxu0 0
    %2016 = vmatprep.subr.bf16.mxu0 0
    %2017 = vmatpush1.bf16.msra.mxu0 0
    %2018 = vmatprep.subr.bf16.mxu0 0
    %2019 = vmatpush1.bf16.msra.mxu0 0
    %2020 = vmatprep.subr.bf16.mxu0 0
    %2021 = vmatpush1.bf16.msra.mxu0 0
    %2022 = vmatprep.subr.bf16.mxu0 0
    %2023 = vmatpush1.bf16.msra.mxu0 0
    %2024 = vmatprep.subr.bf16.mxu0 0
    %2025 = vmatpush1.bf16.msra.mxu0 0
    %2026 = vmatprep.subr.bf16.mxu0 0
    %2027 = vmatpush1.bf16.msra.mxu0 0
    %2028 = vmatprep.subr.bf16.mxu0 0
    %2029 = vmatpush1.bf16.msra.mxu0 0
    %2030 = vmatprep.subr.bf16.mxu0 0
    %2031 = vmatpush1.bf16.msra.mxu0 0
    %2032 = vmatprep.subr.bf16.mxu0 0
    %2033 = vmatpush1.bf16.msra.mxu0 0
    %2034 = vmatprep.subr.bf16.mxu0 0
    %2035 = vmatpush1.bf16.msra.mxu0 0
    %2036 = vmatprep.subr.bf16.mxu0 0
    %2037 = vmatpush1.bf16.msra.mxu0 0
    %2038 = vmatprep.subr.bf16.mxu0 0
    %2039 = vmatpush1.bf16.msra.mxu0 0
    %2040 = vmatprep.subr.bf16.mxu0 0
    %2041 = vmatpush1.bf16.msra.mxu0 0
    %2042 = vmatprep.mubr.bf16.mxu0 0
    %2043 = vmatmul.mubr.bf16.gmra.mrb[0].mxu0 %v1648
    %v2044 = vpop.f32.mrb[0].mxu0
    %v2045 = vadd.f32 0.0, %v2044
    %v2046 = vpop.f32.mrb[0].mxu0
    %v2047 = vadd.f32 0.0, %v2046
    %v2048 = vpop.f32.mrb[0].mxu0
    %v2049 = vadd.f32 0.0, %v2048
    %v2050 = vpop.f32.mrb[0].mxu0
    %v2051 = vadd.f32 0.0, %v2050
    %2052 = vmatprep.mubr.bf16.mxu0 0
    %2053 = vmatmul.mubr.bf16.gmra.mrb[0].mxu0 %v1651
    %v2054 = vpop.f32.mrb[0].mxu0
    %v2055 = vadd.f32 0.0, %v2054
    %v2056 = vpop.f32.mrb[0].mxu0
    %v2057 = vadd.f32 0.0, %v2056
    %v2058 = vpop.f32.mrb[0].mxu0
    %v2059 = vadd.f32 0.0, %v2058
    %v2060 = vpop.f32.mrb[0].mxu0
    %v2061 = vadd.f32 0.0, %v2060
    %2062 = vmatprep.mubr.bf16.mxu0 0
    %2063 = vmatmul.mubr.bf16.gmra.mrb[0].mxu0 %v1654
    %v2064 = vpop.f32.mrb[0].mxu0
    %v2065 = vadd.f32 0.0, %v2064
    %v2066 = vpop.f32.mrb[0].mxu0
    %v2067 = vadd.f32 0.0, %v2066
    %v2068 = vpop.f32.mrb[0].mxu0
    %v2069 = vadd.f32 0.0, %v2068
    %v2070 = vpop.f32.mrb[0].mxu0
    %v2071 = vadd.f32 0.0, %v2070
    %2072 = vmatprep.mubr.bf16.mxu0 0
    %2073 = vmatmul.mubr.bf16.gmra.mrb[0].mxu0 %v1657
    %v2074 = vpop.f32.mrb[0].mxu0
    %v2075 = vadd.f32 0.0, %v2074
    %v2076 = vpop.f32.mrb[0].mxu0
    %v2077 = vadd.f32 0.0, %v2076
    %v2078 = vpop.f32.mrb[0].mxu0
    %v2079 = vadd.f32 0.0, %v2078
    %v2080 = vpop.f32.mrb[0].mxu0
    %v2081 = vadd.f32 0.0, %v2080
    %2082 = vmatprep.mubr.bf16.mxu0 0
    %2083 = vmatmul.mubr.bf16.gmra.mrb[0].mxu0 %v1660
    %v2084 = vpop.f32.mrb[0].mxu0
    %v2085 = vadd.f32 0.0, %v2084
    %v2086 = vpop.f32.mrb[0].mxu0
    %v2087 = vadd.f32 0.0, %v2086
    %v2088 = vpop.f32.mrb[0].mxu0
    %v2089 = vadd.f32 0.0, %v2088
    %v2090 = vpop.f32.mrb[0].mxu0
    %v2091 = vadd.f32 0.0, %v2090
    %2092 = vmatprep.mubr.bf16.mxu0 0
    %2093 = vmatmul.mubr.bf16.gmra.mrb[0].mxu0 %v1663
    %v2094 = vpop.f32.mrb[0].mxu0
    %v2095 = vadd.f32 0.0, %v2094
    %v2096 = vpop.f32.mrb[0].mxu0
    %v2097 = vadd.f32 0.0, %v2096
    %v2098 = vpop.f32.mrb[0].mxu0
    %v2099 = vadd.f32 0.0, %v2098
    %v2100 = vpop.f32.mrb[0].mxu0
    %v2101 = vadd.f32 0.0, %v2100
    %2102 = vmatprep.mubr.bf16.mxu0 0
    %2103 = vmatmul.mubr.bf16.gmra.mrb[0].mxu0 %v1666
    %v2104 = vpop.f32.mrb[0].mxu0
    %v2105 = vadd.f32 0.0, %v2104
    %v2106 = vpop.f32.mrb[0].mxu0
    %v2107 = vadd.f32 0.0, %v2106
    %v2108 = vpop.f32.mrb[0].mxu0
    %v2109 = vadd.f32 0.0, %v2108
    %v2110 = vpop.f32.mrb[0].mxu0
    %v2111 = vadd.f32 0.0, %v2110
    %2112 = vmatprep.mubr.bf16.mxu0 0
    %2113 = vmatmul.mubr.bf16.gmra.mrb[0].mxu0 %v1669
    %v2114 = vpop.f32.mrb[0].mxu0
    %v2115 = vadd.f32 0.0, %v2114
    %v2116 = vpop.f32.mrb[0].mxu0
    %v2117 = vadd.f32 0.0, %v2116
    %v2118 = vpop.f32.mrb[0].mxu0
    %v2119 = vadd.f32 0.0, %v2118
    %v2120 = vpop.f32.mrb[0].mxu0
    %v2121 = vadd.f32 0.0, %v2120
    %2122 = vdwg.mxu0
    %v2139 = vunpack.c.l.b16 %v1511
    %v2140 = vunpack.c.l.b16 %v1512
    %v2141 = vunpack.c.l.b16 %v1513
    %v2142 = vunpack.c.l.b16 %v1514
    %v2143 = vunpack.c.l.b16 %v1515
    %v2144 = vunpack.c.l.b16 %v1516
    %v2145 = vunpack.c.l.b16 %v1517
    %v2146 = vunpack.c.l.b16 %v1518
    %v2147 = vunpack.c.l.b16 %v1519
    %v2148 = vunpack.c.l.b16 %v1520
    %v2149 = vunpack.c.l.b16 %v1521
    %v2150 = vunpack.c.l.b16 %v1522
    %v2151 = vunpack.c.l.b16 %v1523
    %v2152 = vunpack.c.l.b16 %v1524
    %v2153 = vunpack.c.l.b16 %v1525
    %v2154 = vunpack.c.l.b16 %v1526
    %v2155 = vpack.c.b16 %v2140, %v2139
    %v2156 = vpack.c.b16 %v2142, %v2141
    %v2157 = vpack.c.b16 %v2144, %v2143
    %v2158 = vpack.c.b16 %v2146, %v2145
    %v2159 = vpack.c.b16 %v2148, %v2147
    %v2160 = vpack.c.b16 %v2150, %v2149
    %v2161 = vpack.c.b16 %v2152, %v2151
    %v2162 = vpack.c.b16 %v2154, %v2153
    %2171 = vmatprep.subr.bf16.mxu0 %v1528
    %2172 = vmatpush1.bf16.msra.mxu0 %v1527
    %2173 = vmatprep.subr.bf16.mxu0 %v1536
    %2174 = vmatpush1.bf16.msra.mxu0 %v1535
    %2175 = vmatprep.subr.bf16.mxu0 %v1544
    %2176 = vmatpush1.bf16.msra.mxu0 %v1543
    %2177 = vmatprep.subr.bf16.mxu0 %v1552
    %2178 = vmatpush1.bf16.msra.mxu0 %v1551
    %2179 = vmatprep.subr.bf16.mxu0 %v1560
    %2180 = vmatpush1.bf16.msra.mxu0 %v1559
    %2181 = vmatprep.subr.bf16.mxu0 %v1568
    %2182 = vmatpush1.bf16.msra.mxu0 %v1567
    %2183 = vmatprep.subr.bf16.mxu0 %v1576
    %2184 = vmatpush1.bf16.msra.mxu0 %v1575
    %2185 = vmatprep.subr.bf16.mxu0 %v1584
    %2186 = vmatpush1.bf16.msra.mxu0 %v1583
    %2187 = vmatprep.subr.bf16.mxu0 0
    %2188 = vmatpush1.bf16.msra.mxu0 0
    %2189 = vmatprep.subr.bf16.mxu0 0
    %2190 = vmatpush1.bf16.msra.mxu0 0
    %2191 = vmatprep.subr.bf16.mxu0 0
    %2192 = vmatpush1.bf16.msra.mxu0 0
    %2193 = vmatprep.subr.bf16.mxu0 0
    %2194 = vmatpush1.bf16.msra.mxu0 0
    %2195 = vmatprep.subr.bf16.mxu0 0
    %2196 = vmatpush1.bf16.msra.mxu0 0
    %2197 = vmatprep.subr.bf16.mxu0 0
    %2198 = vmatpush1.bf16.msra.mxu0 0
    %2199 = vmatprep.subr.bf16.mxu0 0
    %2200 = vmatpush1.bf16.msra.mxu0 0
    %2201 = vmatprep.subr.bf16.mxu0 0
    %2202 = vmatpush1.bf16.msra.mxu0 0
    %2203 = vmatprep.mubr.bf16.mxu0 0
    %2204 = vmatmul.mubr.bf16.gmra.mrb[0].mxu0 %v2155
    %v2205 = vpop.f32.mrb[0].mxu0
    %v2206 = vadd.f32 %v1706, %v2205
    %v2207 = vpop.f32.mrb[0].mxu0
    %v2208 = vadd.f32 %v1708, %v2207
    %v2209 = vpop.f32.mrb[0].mxu0
    %v2210 = vadd.f32 %v1710, %v2209
    %v2211 = vpop.f32.mrb[0].mxu0
    %v2212 = vadd.f32 %v1712, %v2211
    %2213 = vmatprep.mubr.bf16.mxu0 0
    %2214 = vmatmul.mubr.bf16.gmra.mrb[0].mxu0 %v2156
    %v2215 = vpop.f32.mrb[0].mxu0
    %v2216 = vadd.f32 %v1716, %v2215
    %v2217 = vpop.f32.mrb[0].mxu0
    %v2218 = vadd.f32 %v1718, %v2217
    %v2219 = vpop.f32.mrb[0].mxu0
    %v2220 = vadd.f32 %v1720, %v2219
    %v2221 = vpop.f32.mrb[0].mxu0
    %v2222 = vadd.f32 %v1722, %v2221
    %2223 = vmatprep.mubr.bf16.mxu0 0
    %2224 = vmatmul.mubr.bf16.gmra.mrb[0].mxu0 %v2157
    %v2225 = vpop.f32.mrb[0].mxu0
    %v2226 = vadd.f32 %v1726, %v2225
    %v2227 = vpop.f32.mrb[0].mxu0
    %v2228 = vadd.f32 %v1728, %v2227
    %v2229 = vpop.f32.mrb[0].mxu0
    %v2230 = vadd.f32 %v1730, %v2229
    %v2231 = vpop.f32.mrb[0].mxu0
    %v2232 = vadd.f32 %v1732, %v2231
    %2233 = vmatprep.mubr.bf16.mxu0 0
    %2234 = vmatmul.mubr.bf16.gmra.mrb[0].mxu0 %v2158
    %v2235 = vpop.f32.mrb[0].mxu0
    %v2236 = vadd.f32 %v1736, %v2235
    %v2237 = vpop.f32.mrb[0].mxu0
    %v2238 = vadd.f32 %v1738, %v2237
    %v2239 = vpop.f32.mrb[0].mxu0
    %v2240 = vadd.f32 %v1740, %v2239
    %v2241 = vpop.f32.mrb[0].mxu0
    %v2242 = vadd.f32 %v1742, %v2241
    %2243 = vmatprep.mubr.bf16.mxu0 0
    %2244 = vmatmul.mubr.bf16.gmra.mrb[0].mxu0 %v2159
    %v2245 = vpop.f32.mrb[0].mxu0
    %v2246 = vadd.f32 %v1746, %v2245
    %v2247 = vpop.f32.mrb[0].mxu0
    %v2248 = vadd.f32 %v1748, %v2247
    %v2249 = vpop.f32.mrb[0].mxu0
    %v2250 = vadd.f32 %v1750, %v2249
    %v2251 = vpop.f32.mrb[0].mxu0
    %v2252 = vadd.f32 %v1752, %v2251
    %2253 = vmatprep.mubr.bf16.mxu0 0
    %2254 = vmatmul.mubr.bf16.gmra.mrb[0].mxu0 %v2160
    %v2255 = vpop.f32.mrb[0].mxu0
    %v2256 = vadd.f32 %v1756, %v2255
    %v2257 = vpop.f32.mrb[0].mxu0
    %v2258 = vadd.f32 %v1758, %v2257
    %v2259 = vpop.f32.mrb[0].mxu0
    %v2260 = vadd.f32 %v1760, %v2259
    %v2261 = vpop.f32.mrb[0].mxu0
    %v2262 = vadd.f32 %v1762, %v2261
    %2263 = vmatprep.mubr.bf16.mxu0 0
    %2264 = vmatmul.mubr.bf16.gmra.mrb[0].mxu0 %v2161
    %v2265 = vpop.f32.mrb[0].mxu0
    %v2266 = vadd.f32 %v1766, %v2265
    %v2267 = vpop.f32.mrb[0].mxu0
    %v2268 = vadd.f32 %v1768, %v2267
    %v2269 = vpop.f32.mrb[0].mxu0
    %v2270 = vadd.f32 %v1770, %v2269
    %v2271 = vpop.f32.mrb[0].mxu0
    %v2272 = vadd.f32 %v1772, %v2271
    %2273 = vmatprep.mubr.bf16.mxu0 0
    %2274 = vmatmul.mubr.bf16.gmra.mrb[0].mxu0 %v2162
    %v2275 = vpop.f32.mrb[0].mxu0
    %v2276 = vadd.f32 %v1776, %v2275
    %v2277 = vpop.f32.mrb[0].mxu0
    %v2278 = vadd.f32 %v1778, %v2277
    %v2279 = vpop.f32.mrb[0].mxu0
    %v2280 = vadd.f32 %v1780, %v2279
    %v2281 = vpop.f32.mrb[0].mxu0
    %v2282 = vadd.f32 %v1782, %v2281
    %2283 = vdwg.mxu0
    %2284 = vmatprep.subr.bf16.mxu0 %v1530
    %2285 = vmatpush1.bf16.msra.mxu0 %v1529
    %2286 = vmatprep.subr.bf16.mxu0 %v1538
    %2287 = vmatpush1.bf16.msra.mxu0 %v1537
    %2288 = vmatprep.subr.bf16.mxu0 %v1546
    %2289 = vmatpush1.bf16.msra.mxu0 %v1545
    %2290 = vmatprep.subr.bf16.mxu0 %v1554
    %2291 = vmatpush1.bf16.msra.mxu0 %v1553
    %2292 = vmatprep.subr.bf16.mxu0 %v1562
    %2293 = vmatpush1.bf16.msra.mxu0 %v1561
    %2294 = vmatprep.subr.bf16.mxu0 %v1570
    %2295 = vmatpush1.bf16.msra.mxu0 %v1569
    %2296 = vmatprep.subr.bf16.mxu0 %v1578
    %2297 = vmatpush1.bf16.msra.mxu0 %v1577
    %2298 = vmatprep.subr.bf16.mxu0 %v1586
    %2299 = vmatpush1.bf16.msra.mxu0 %v1585
    %2300 = vmatprep.subr.bf16.mxu0 0
    %2301 = vmatpush1.bf16.msra.mxu0 0
    %2302 = vmatprep.subr.bf16.mxu0 0
    %2303 = vmatpush1.bf16.msra.mxu0 0
    %2304 = vmatprep.subr.bf16.mxu0 0
    %2305 = vmatpush1.bf16.msra.mxu0 0
    %2306 = vmatprep.subr.bf16.mxu0 0
    %2307 = vmatpush1.bf16.msra.mxu0 0
    %2308 = vmatprep.subr.bf16.mxu0 0
    %2309 = vmatpush1.bf16.msra.mxu0 0
    %2310 = vmatprep.subr.bf16.mxu0 0
    %2311 = vmatpush1.bf16.msra.mxu0 0
    %2312 = vmatprep.subr.bf16.mxu0 0
    %2313 = vmatpush1.bf16.msra.mxu0 0
    %2314 = vmatprep.subr.bf16.mxu0 0
    %2315 = vmatpush1.bf16.msra.mxu0 0
    %2316 = vmatprep.mubr.bf16.mxu0 0
    %2317 = vmatmul.mubr.bf16.gmra.mrb[0].mxu0 %v2155
    %v2318 = vpop.f32.mrb[0].mxu0
    %v2319 = vadd.f32 %v1819, %v2318
    %v2320 = vpop.f32.mrb[0].mxu0
    %v2321 = vadd.f32 %v1821, %v2320
    %v2322 = vpop.f32.mrb[0].mxu0
    %v2323 = vadd.f32 %v1823, %v2322
    %v2324 = vpop.f32.mrb[0].mxu0
    %v2325 = vadd.f32 %v1825, %v2324
    %2326 = vmatprep.mubr.bf16.mxu0 0
    %2327 = vmatmul.mubr.bf16.gmra.mrb[0].mxu0 %v2156
    %v2328 = vpop.f32.mrb[0].mxu0
    %v2329 = vadd.f32 %v1829, %v2328
    %v2330 = vpop.f32.mrb[0].mxu0
    %v2331 = vadd.f32 %v1831, %v2330
    %v2332 = vpop.f32.mrb[0].mxu0
    %v2333 = vadd.f32 %v1833, %v2332
    %v2334 = vpop.f32.mrb[0].mxu0
    %v2335 = vadd.f32 %v1835, %v2334
    %2336 = vmatprep.mubr.bf16.mxu0 0
    %2337 = vmatmul.mubr.bf16.gmra.mrb[0].mxu0 %v2157
    %v2338 = vpop.f32.mrb[0].mxu0
    %v2339 = vadd.f32 %v1839, %v2338
    %v2340 = vpop.f32.mrb[0].mxu0
    %v2341 = vadd.f32 %v1841, %v2340
    %v2342 = vpop.f32.mrb[0].mxu0
    %v2343 = vadd.f32 %v1843, %v2342
    %v2344 = vpop.f32.mrb[0].mxu0
    %v2345 = vadd.f32 %v1845, %v2344
    %2346 = vmatprep.mubr.bf16.mxu0 0
    %2347 = vmatmul.mubr.bf16.gmra.mrb[0].mxu0 %v2158
    %v2348 = vpop.f32.mrb[0].mxu0
    %v2349 = vadd.f32 %v1849, %v2348
    %v2350 = vpop.f32.mrb[0].mxu0
    %v2351 = vadd.f32 %v1851, %v2350
    %v2352 = vpop.f32.mrb[0].mxu0
    %v2353 = vadd.f32 %v1853, %v2352
    %v2354 = vpop.f32.mrb[0].mxu0
    %v2355 = vadd.f32 %v1855, %v2354
    %2356 = vmatprep.mubr.bf16.mxu0 0
    %2357 = vmatmul.mubr.bf16.gmra.mrb[0].mxu0 %v2159
    %v2358 = vpop.f32.mrb[0].mxu0
    %v2359 = vadd.f32 %v1859, %v2358
    %v2360 = vpop.f32.mrb[0].mxu0
    %v2361 = vadd.f32 %v1861, %v2360
    %v2362 = vpop.f32.mrb[0].mxu0
    %v2363 = vadd.f32 %v1863, %v2362
    %v2364 = vpop.f32.mrb[0].mxu0
    %v2365 = vadd.f32 %v1865, %v2364
    %2366 = vmatprep.mubr.bf16.mxu0 0
    %2367 = vmatmul.mubr.bf16.gmra.mrb[0].mxu0 %v2160
    %v2368 = vpop.f32.mrb[0].mxu0
    %v2369 = vadd.f32 %v1869, %v2368
    %v2370 = vpop.f32.mrb[0].mxu0
    %v2371 = vadd.f32 %v1871, %v2370
    %v2372 = vpop.f32.mrb[0].mxu0
    %v2373 = vadd.f32 %v1873, %v2372
    %v2374 = vpop.f32.mrb[0].mxu0
    %v2375 = vadd.f32 %v1875, %v2374
    %2376 = vmatprep.mubr.bf16.mxu0 0
    %2377 = vmatmul.mubr.bf16.gmra.mrb[0].mxu0 %v2161
    %v2378 = vpop.f32.mrb[0].mxu0
    %v2379 = vadd.f32 %v1879, %v2378
    %v2380 = vpop.f32.mrb[0].mxu0
    %v2381 = vadd.f32 %v1881, %v2380
    %v2382 = vpop.f32.mrb[0].mxu0
    %v2383 = vadd.f32 %v1883, %v2382
    %v2384 = vpop.f32.mrb[0].mxu0
    %v2385 = vadd.f32 %v1885, %v2384
    %2386 = vmatprep.mubr.bf16.mxu0 0
    %2387 = vmatmul.mubr.bf16.gmra.mrb[0].mxu0 %v2162
    %v2388 = vpop.f32.mrb[0].mxu0
    %v2389 = vadd.f32 %v1889, %v2388
    %v2390 = vpop.f32.mrb[0].mxu0
    %v2391 = vadd.f32 %v1891, %v2390
    %v2392 = vpop.f32.mrb[0].mxu0
    %v2393 = vadd.f32 %v1893, %v2392
    %v2394 = vpop.f32.mrb[0].mxu0
    %v2395 = vadd.f32 %v1895, %v2394
    %2396 = vdwg.mxu0
    %2397 = vmatprep.subr.bf16.mxu0 %v1532
    %2398 = vmatpush1.bf16.msra.mxu0 %v1531
    %2399 = vmatprep.subr.bf16.mxu0 %v1540
    %2400 = vmatpush1.bf16.msra.mxu0 %v1539
    %2401 = vmatprep.subr.bf16.mxu0 %v1548
    %2402 = vmatpush1.bf16.msra.mxu0 %v1547
    %2403 = vmatprep.subr.bf16.mxu0 %v1556
    %2404 = vmatpush1.bf16.msra.mxu0 %v1555
    %2405 = vmatprep.subr.bf16.mxu0 %v1564
    %2406 = vmatpush1.bf16.msra.mxu0 %v1563
    %2407 = vmatprep.subr.bf16.mxu0 %v1572
    %2408 = vmatpush1.bf16.msra.mxu0 %v1571
    %2409 = vmatprep.subr.bf16.mxu0 %v1580
    %2410 = vmatpush1.bf16.msra.mxu0 %v1579
    %2411 = vmatprep.subr.bf16.mxu0 %v1588
    %2412 = vmatpush1.bf16.msra.mxu0 %v1587
    %2413 = vmatprep.subr.bf16.mxu0 0
    %2414 = vmatpush1.bf16.msra.mxu0 0
    %2415 = vmatprep.subr.bf16.mxu0 0
    %2416 = vmatpush1.bf16.msra.mxu0 0
    %2417 = vmatprep.subr.bf16.mxu0 0
    %2418 = vmatpush1.bf16.msra.mxu0 0
    %2419 = vmatprep.subr.bf16.mxu0 0
    %2420 = vmatpush1.bf16.msra.mxu0 0
    %2421 = vmatprep.subr.bf16.mxu0 0
    %2422 = vmatpush1.bf16.msra.mxu0 0
    %2423 = vmatprep.subr.bf16.mxu0 0
    %2424 = vmatpush1.bf16.msra.mxu0 0
    %2425 = vmatprep.subr.bf16.mxu0 0
    %2426 = vmatpush1.bf16.msra.mxu0 0
    %2427 = vmatprep.subr.bf16.mxu0 0
    %2428 = vmatpush1.bf16.msra.mxu0 0
    %2429 = vmatprep.mubr.bf16.mxu0 0
    %2430 = vmatmul.mubr.bf16.gmra.mrb[0].mxu0 %v2155
    %v2431 = vpop.f32.mrb[0].mxu0
    %v2432 = vadd.f32 %v1932, %v2431
    %v2433 = vpop.f32.mrb[0].mxu0
    %v2434 = vadd.f32 %v1934, %v2433
    %v2435 = vpop.f32.mrb[0].mxu0
    %v2436 = vadd.f32 %v1936, %v2435
    %v2437 = vpop.f32.mrb[0].mxu0
    %v2438 = vadd.f32 %v1938, %v2437
    %2439 = vmatprep.mubr.bf16.mxu0 0
    %2440 = vmatmul.mubr.bf16.gmra.mrb[0].mxu0 %v2156
    %v2441 = vpop.f32.mrb[0].mxu0
    %v2442 = vadd.f32 %v1942, %v2441
    %v2443 = vpop.f32.mrb[0].mxu0
    %v2444 = vadd.f32 %v1944, %v2443
    %v2445 = vpop.f32.mrb[0].mxu0
    %v2446 = vadd.f32 %v1946, %v2445
    %v2447 = vpop.f32.mrb[0].mxu0
    %v2448 = vadd.f32 %v1948, %v2447
    %2449 = vmatprep.mubr.bf16.mxu0 0
    %2450 = vmatmul.mubr.bf16.gmra.mrb[0].mxu0 %v2157
    %v2451 = vpop.f32.mrb[0].mxu0
    %v2452 = vadd.f32 %v1952, %v2451
    %v2453 = vpop.f32.mrb[0].mxu0
    %v2454 = vadd.f32 %v1954, %v2453
    %v2455 = vpop.f32.mrb[0].mxu0
    %v2456 = vadd.f32 %v1956, %v2455
    %v2457 = vpop.f32.mrb[0].mxu0
    %v2458 = vadd.f32 %v1958, %v2457
    %2459 = vmatprep.mubr.bf16.mxu0 0
    %2460 = vmatmul.mubr.bf16.gmra.mrb[0].mxu0 %v2158
    %v2461 = vpop.f32.mrb[0].mxu0
    %v2462 = vadd.f32 %v1962, %v2461
    %v2463 = vpop.f32.mrb[0].mxu0
    %v2464 = vadd.f32 %v1964, %v2463
    %v2465 = vpop.f32.mrb[0].mxu0
    %v2466 = vadd.f32 %v1966, %v2465
    %v2467 = vpop.f32.mrb[0].mxu0
    %v2468 = vadd.f32 %v1968, %v2467
    %2469 = vmatprep.mubr.bf16.mxu0 0
    %2470 = vmatmul.mubr.bf16.gmra.mrb[0].mxu0 %v2159
    %v2471 = vpop.f32.mrb[0].mxu0
    %v2472 = vadd.f32 %v1972, %v2471
    %v2473 = vpop.f32.mrb[0].mxu0
    %v2474 = vadd.f32 %v1974, %v2473
    %v2475 = vpop.f32.mrb[0].mxu0
    %v2476 = vadd.f32 %v1976, %v2475
    %v2477 = vpop.f32.mrb[0].mxu0
    %v2478 = vadd.f32 %v1978, %v2477
    %2479 = vmatprep.mubr.bf16.mxu0 0
    %2480 = vmatmul.mubr.bf16.gmra.mrb[0].mxu0 %v2160
    %v2481 = vpop.f32.mrb[0].mxu0
    %v2482 = vadd.f32 %v1982, %v2481
    %v2483 = vpop.f32.mrb[0].mxu0
    %v2484 = vadd.f32 %v1984, %v2483
    %v2485 = vpop.f32.mrb[0].mxu0
    %v2486 = vadd.f32 %v1986, %v2485
    %v2487 = vpop.f32.mrb[0].mxu0
    %v2488 = vadd.f32 %v1988, %v2487
    %2489 = vmatprep.mubr.bf16.mxu0 0
    %2490 = vmatmul.mubr.bf16.gmra.mrb[0].mxu0 %v2161
    %v2491 = vpop.f32.mrb[0].mxu0
    %v2492 = vadd.f32 %v1992, %v2491
    %v2493 = vpop.f32.mrb[0].mxu0
    %v2494 = vadd.f32 %v1994, %v2493
    %v2495 = vpop.f32.mrb[0].mxu0
    %v2496 = vadd.f32 %v1996, %v2495
    %v2497 = vpop.f32.mrb[0].mxu0
    %v2498 = vadd.f32 %v1998, %v2497
    %2499 = vmatprep.mubr.bf16.mxu0 0
    %2500 = vmatmul.mubr.bf16.gmra.mrb[0].mxu0 %v2162
    %v2501 = vpop.f32.mrb[0].mxu0
    %v2502 = vadd.f32 %v2002, %v2501
    %v2503 = vpop.f32.mrb[0].mxu0
    %v2504 = vadd.f32 %v2004, %v2503
    %v2505 = vpop.f32.mrb[0].mxu0
    %v2506 = vadd.f32 %v2006, %v2505
    %v2507 = vpop.f32.mrb[0].mxu0
    %v2508 = vadd.f32 %v2008, %v2507
    %2509 = vdwg.mxu0
    %2510 = vmatprep.subr.bf16.mxu0 %v1534
    %2511 = vmatpush1.bf16.msra.mxu0 %v1533
    %2512 = vmatprep.subr.bf16.mxu0 %v1542
    %2513 = vmatpush1.bf16.msra.mxu0 %v1541
    %2514 = vmatprep.subr.bf16.mxu0 %v1550
    %2515 = vmatpush1.bf16.msra.mxu0 %v1549
    %2516 = vmatprep.subr.bf16.mxu0 %v1558
    %2517 = vmatpush1.bf16.msra.mxu0 %v1557
    %2518 = vmatprep.subr.bf16.mxu0 %v1566
    %2519 = vmatpush1.bf16.msra.mxu0 %v1565
    %2520 = vmatprep.subr.bf16.mxu0 %v1574
    %2521 = vmatpush1.bf16.msra.mxu0 %v1573
    %2522 = vmatprep.subr.bf16.mxu0 %v1582
    %2523 = vmatpush1.bf16.msra.mxu0 %v1581
    %2524 = vmatprep.subr.bf16.mxu0 %v1590
    %2525 = vmatpush1.bf16.msra.mxu0 %v1589
    %2526 = vmatprep.subr.bf16.mxu0 0
    %2527 = vmatpush1.bf16.msra.mxu0 0
    %2528 = vmatprep.subr.bf16.mxu0 0
    %2529 = vmatpush1.bf16.msra.mxu0 0
    %2530 = vmatprep.subr.bf16.mxu0 0
    %2531 = vmatpush1.bf16.msra.mxu0 0
    %2532 = vmatprep.subr.bf16.mxu0 0
    %2533 = vmatpush1.bf16.msra.mxu0 0
    %2534 = vmatprep.subr.bf16.mxu0 0
    %2535 = vmatpush1.bf16.msra.mxu0 0
    %2536 = vmatprep.subr.bf16.mxu0 0
    %2537 = vmatpush1.bf16.msra.mxu0 0
    %2538 = vmatprep.subr.bf16.mxu0 0
    %2539 = vmatpush1.bf16.msra.mxu0 0
    %2540 = vmatprep.subr.bf16.mxu0 0
    %2541 = vmatpush1.bf16.msra.mxu0 0
    %2542 = vmatprep.mubr.bf16.mxu0 0
    %2543 = vmatmul.mubr.bf16.gmra.mrb[0].mxu0 %v2155
    %v2544 = vpop.f32.mrb[0].mxu0
    %v2545 = vadd.f32 %v2045, %v2544
    %v2546 = vpop.f32.mrb[0].mxu0
    %v2547 = vadd.f32 %v2047, %v2546
    %v2548 = vpop.f32.mrb[0].mxu0
    %v2549 = vadd.f32 %v2049, %v2548
    %v2550 = vpop.f32.mrb[0].mxu0
    %v2551 = vadd.f32 %v2051, %v2550
    %2552 = vmatprep.mubr.bf16.mxu0 0
    %2553 = vmatmul.mubr.bf16.gmra.mrb[0].mxu0 %v2156
    %v2554 = vpop.f32.mrb[0].mxu0
    %v2555 = vadd.f32 %v2055, %v2554
    %v2556 = vpop.f32.mrb[0].mxu0
    %v2557 = vadd.f32 %v2057, %v2556
    %v2558 = vpop.f32.mrb[0].mxu0
    %v2559 = vadd.f32 %v2059, %v2558
    %v2560 = vpop.f32.mrb[0].mxu0
    %v2561 = vadd.f32 %v2061, %v2560
    %2562 = vmatprep.mubr.bf16.mxu0 0
    %2563 = vmatmul.mubr.bf16.gmra.mrb[0].mxu0 %v2157
    %v2564 = vpop.f32.mrb[0].mxu0
    %v2565 = vadd.f32 %v2065, %v2564
    %v2566 = vpop.f32.mrb[0].mxu0
    %v2567 = vadd.f32 %v2067, %v2566
    %v2568 = vpop.f32.mrb[0].mxu0
    %v2569 = vadd.f32 %v2069, %v2568
    %v2570 = vpop.f32.mrb[0].mxu0
    %v2571 = vadd.f32 %v2071, %v2570
    %2572 = vmatprep.mubr.bf16.mxu0 0
    %2573 = vmatmul.mubr.bf16.gmra.mrb[0].mxu0 %v2158
    %v2574 = vpop.f32.mrb[0].mxu0
    %v2575 = vadd.f32 %v2075, %v2574
    %v2576 = vpop.f32.mrb[0].mxu0
    %v2577 = vadd.f32 %v2077, %v2576
    %v2578 = vpop.f32.mrb[0].mxu0
    %v2579 = vadd.f32 %v2079, %v2578
    %v2580 = vpop.f32.mrb[0].mxu0
    %v2581 = vadd.f32 %v2081, %v2580
    %2582 = vmatprep.mubr.bf16.mxu0 0
    %2583 = vmatmul.mubr.bf16.gmra.mrb[0].mxu0 %v2159
    %v2584 = vpop.f32.mrb[0].mxu0
    %v2585 = vadd.f32 %v2085, %v2584
    %v2586 = vpop.f32.mrb[0].mxu0
    %v2587 = vadd.f32 %v2087, %v2586
    %v2588 = vpop.f32.mrb[0].mxu0
    %v2589 = vadd.f32 %v2089, %v2588
    %v2590 = vpop.f32.mrb[0].mxu0
    %v2591 = vadd.f32 %v2091, %v2590
    %2592 = vmatprep.mubr.bf16.mxu0 0
    %2593 = vmatmul.mubr.bf16.gmra.mrb[0].mxu0 %v2160
    %v2594 = vpop.f32.mrb[0].mxu0
    %v2595 = vadd.f32 %v2095, %v2594
    %v2596 = vpop.f32.mrb[0].mxu0
    %v2597 = vadd.f32 %v2097, %v2596
    %v2598 = vpop.f32.mrb[0].mxu0
    %v2599 = vadd.f32 %v2099, %v2598
    %v2600 = vpop.f32.mrb[0].mxu0
    %v2601 = vadd.f32 %v2101, %v2600
    %2602 = vmatprep.mubr.bf16.mxu0 0
    %2603 = vmatmul.mubr.bf16.gmra.mrb[0].mxu0 %v2161
    %v2604 = vpop.f32.mrb[0].mxu0
    %v2605 = vadd.f32 %v2105, %v2604
    %v2606 = vpop.f32.mrb[0].mxu0
    %v2607 = vadd.f32 %v2107, %v2606
    %v2608 = vpop.f32.mrb[0].mxu0
    %v2609 = vadd.f32 %v2109, %v2608
    %v2610 = vpop.f32.mrb[0].mxu0
    %v2611 = vadd.f32 %v2111, %v2610
    %2612 = vmatprep.mubr.bf16.mxu0 0
    %2613 = vmatmul.mubr.bf16.gmra.mrb[0].mxu0 %v2162
    %v2614 = vpop.f32.mrb[0].mxu0
    %v2615 = vadd.f32 %v2115, %v2614
    %v2616 = vpop.f32.mrb[0].mxu0
    %v2617 = vadd.f32 %v2117, %v2616
    %v2618 = vpop.f32.mrb[0].mxu0
    %v2619 = vadd.f32 %v2119, %v2618
    %v2620 = vpop.f32.mrb[0].mxu0
    %v2621 = vadd.f32 %v2121, %v2620
    %2622 = vdwg.mxu0
    %v2623 = vld [vmem:[%s7] sm:$0xff]
    %v2624 = vld [vmem:[%s7 + $0x8] sm:$0xff]
    %v2625 = vld [vmem:[%s7 + $0x10] sm:$0xff]
    %v2626 = vld [vmem:[%s7 + $0x18] sm:$0xff]
    %v2627 = vld [vmem:[%s7 + $0x20] sm:$0xff]
    %v2628 = vld [vmem:[%s7 + $0x28] sm:$0xff]
    %v2629 = vld [vmem:[%s7 + $0x30] sm:$0xff]
    %v2630 = vld [vmem:[%s7 + $0x38] sm:$0xff]
    %v2631 = vld [vmem:[%s7 + $0x40] sm:$0xff]
    %v2632 = vld [vmem:[%s7 + $0x48] sm:$0xff]
    %v2633 = vld [vmem:[%s7 + $0x50] sm:$0xff]
    %v2634 = vld [vmem:[%s7 + $0x58] sm:$0xff]
    %v2635 = vld [vmem:[%s7 + $0x60] sm:$0xff]
    %v2636 = vld [vmem:[%s7 + $0x68] sm:$0xff]
    %v2637 = vld [vmem:[%s7 + $0x70] sm:$0xff]
    %v2638 = vld [vmem:[%s7 + $0x78] sm:$0xff]
    %2640 = vset.pattern.permute.xlu0 0
    %2641 = vperm.xlu0 %2640, %v2623
    %v2642 = vpop.permute.xlu0 %2641
    %2645 = vset.pattern.permute.xlu0 0
    %2646 = vperm.xlu0 %2645, %v2624
    %v2647 = vpop.permute.xlu0 %2646
    %2650 = vset.pattern.permute.xlu0 0
    %2651 = vperm.xlu0 %2650, %v2625
    %v2652 = vpop.permute.xlu0 %2651
    %2655 = vset.pattern.permute.xlu0 0
    %2656 = vperm.xlu0 %2655, %v2626
    %v2657 = vpop.permute.xlu0 %2656
    %2660 = vset.pattern.permute.xlu0 0
    %2661 = vperm.xlu0 %2660, %v2627
    %v2662 = vpop.permute.xlu0 %2661
    %2665 = vset.pattern.permute.xlu0 0
    %2666 = vperm.xlu0 %2665, %v2628
    %v2667 = vpop.permute.xlu0 %2666
    %2670 = vset.pattern.permute.xlu0 0
    %2671 = vperm.xlu0 %2670, %v2629
    %v2672 = vpop.permute.xlu0 %2671
    %2675 = vset.pattern.permute.xlu0 0
    %2676 = vperm.xlu0 %2675, %v2630
    %v2677 = vpop.permute.xlu0 %2676
    %2680 = vset.pattern.permute.xlu0 0
    %2681 = vperm.xlu0 %2680, %v2631
    %v2682 = vpop.permute.xlu0 %2681
    %2685 = vset.pattern.permute.xlu0 0
    %2686 = vperm.xlu0 %2685, %v2632
    %v2687 = vpop.permute.xlu0 %2686
    %2690 = vset.pattern.permute.xlu0 0
    %2691 = vperm.xlu0 %2690, %v2633
    %v2692 = vpop.permute.xlu0 %2691
    %2695 = vset.pattern.permute.xlu0 0
    %2696 = vperm.xlu0 %2695, %v2634
    %v2697 = vpop.permute.xlu0 %2696
    %2700 = vset.pattern.permute.xlu0 0
    %2701 = vperm.xlu0 %2700, %v2635
    %v2702 = vpop.permute.xlu0 %2701
    %2705 = vset.pattern.permute.xlu0 0
    %2706 = vperm.xlu0 %2705, %v2636
    %v2707 = vpop.permute.xlu0 %2706
    %2710 = vset.pattern.permute.xlu0 0
    %2711 = vperm.xlu0 %2710, %v2637
    %v2712 = vpop.permute.xlu0 %2711
    %2715 = vset.pattern.permute.xlu0 0
    %2716 = vperm.xlu0 %2715, %v2638
    %v2717 = vpop.permute.xlu0 %2716
    %v2719 = vadd.f32 %v2206, %v2642
    %v2720 = vadd.f32 %v2208, %v2642
    %v2721 = vadd.f32 %v2319, %v2642
    %v2722 = vadd.f32 %v2321, %v2642
    %v2723 = vadd.f32 %v2432, %v2642
    %v2724 = vadd.f32 %v2434, %v2642
    %v2725 = vadd.f32 %v2545, %v2642
    %v2726 = vadd.f32 %v2547, %v2642
    %v2727 = vadd.f32 %v2210, %v2647
    %v2728 = vadd.f32 %v2212, %v2647
    %v2729 = vadd.f32 %v2323, %v2647
    %v2730 = vadd.f32 %v2325, %v2647
    %v2731 = vadd.f32 %v2436, %v2647
    %v2732 = vadd.f32 %v2438, %v2647
    %v2733 = vadd.f32 %v2549, %v2647
    %v2734 = vadd.f32 %v2551, %v2647
    %v2735 = vadd.f32 %v2216, %v2652
    %v2736 = vadd.f32 %v2218, %v2652
    %v2737 = vadd.f32 %v2329, %v2652
    %v2738 = vadd.f32 %v2331, %v2652
    %v2739 = vadd.f32 %v2442, %v2652
    %v2740 = vadd.f32 %v2444, %v2652
    %v2741 = vadd.f32 %v2555, %v2652
    %v2742 = vadd.f32 %v2557, %v2652
    %v2743 = vadd.f32 %v2220, %v2657
    %v2744 = vadd.f32 %v2222, %v2657
    %v2745 = vadd.f32 %v2333, %v2657
    %v2746 = vadd.f32 %v2335, %v2657
    %v2747 = vadd.f32 %v2446, %v2657
    %v2748 = vadd.f32 %v2448, %v2657
    %v2749 = vadd.f32 %v2559, %v2657
    %v2750 = vadd.f32 %v2561, %v2657
    %v2751 = vadd.f32 %v2226, %v2662
    %v2752 = vadd.f32 %v2228, %v2662
    %v2753 = vadd.f32 %v2339, %v2662
    %v2754 = vadd.f32 %v2341, %v2662
    %v2755 = vadd.f32 %v2452, %v2662
    %v2756 = vadd.f32 %v2454, %v2662
    %v2757 = vadd.f32 %v2565, %v2662
    %v2758 = vadd.f32 %v2567, %v2662
    %v2759 = vadd.f32 %v2230, %v2667
    %v2760 = vadd.f32 %v2232, %v2667
    %v2761 = vadd.f32 %v2343, %v2667
    %v2762 = vadd.f32 %v2345, %v2667
    %v2763 = vadd.f32 %v2456, %v2667
    %v2764 = vadd.f32 %v2458, %v2667
    %v2765 = vadd.f32 %v2569, %v2667
    %v2766 = vadd.f32 %v2571, %v2667
    %v2767 = vadd.f32 %v2236, %v2672
    %v2768 = vadd.f32 %v2238, %v2672
    %v2769 = vadd.f32 %v2349, %v2672
    %v2770 = vadd.f32 %v2351, %v2672
    %v2771 = vadd.f32 %v2462, %v2672
    %v2772 = vadd.f32 %v2464, %v2672
    %v2773 = vadd.f32 %v2575, %v2672
    %v2774 = vadd.f32 %v2577, %v2672
    %v2775 = vadd.f32 %v2240, %v2677
    %v2776 = vadd.f32 %v2242, %v2677
    %v2777 = vadd.f32 %v2353, %v2677
    %v2778 = vadd.f32 %v2355, %v2677
    %v2779 = vadd.f32 %v2466, %v2677
    %v2780 = vadd.f32 %v2468, %v2677
    %v2781 = vadd.f32 %v2579, %v2677
    %v2782 = vadd.f32 %v2581, %v2677
    %v2783 = vadd.f32 %v2246, %v2682
    %v2784 = vadd.f32 %v2248, %v2682
    %v2785 = vadd.f32 %v2359, %v2682
    %v2786 = vadd.f32 %v2361, %v2682
    %v2787 = vadd.f32 %v2472, %v2682
    %v2788 = vadd.f32 %v2474, %v2682
    %v2789 = vadd.f32 %v2585, %v2682
    %v2790 = vadd.f32 %v2587, %v2682
    %v2791 = vadd.f32 %v2250, %v2687
    %v2792 = vadd.f32 %v2252, %v2687
    %v2793 = vadd.f32 %v2363, %v2687
    %v2794 = vadd.f32 %v2365, %v2687
    %v2795 = vadd.f32 %v2476, %v2687
    %v2796 = vadd.f32 %v2478, %v2687
    %v2797 = vadd.f32 %v2589, %v2687
    %v2798 = vadd.f32 %v2591, %v2687
    %v2799 = vadd.f32 %v2256, %v2692
    %v2800 = vadd.f32 %v2258, %v2692
    %v2801 = vadd.f32 %v2369, %v2692
    %v2802 = vadd.f32 %v2371, %v2692
    %v2803 = vadd.f32 %v2482, %v2692
    %v2804 = vadd.f32 %v2484, %v2692
    %v2805 = vadd.f32 %v2595, %v2692
    %v2806 = vadd.f32 %v2597, %v2692
    %v2807 = vadd.f32 %v2260, %v2697
    %v2808 = vadd.f32 %v2262, %v2697
    %v2809 = vadd.f32 %v2373, %v2697
    %v2810 = vadd.f32 %v2375, %v2697
    %v2811 = vadd.f32 %v2486, %v2697
    %v2812 = vadd.f32 %v2488, %v2697
    %v2813 = vadd.f32 %v2599, %v2697
    %v2814 = vadd.f32 %v2601, %v2697
    %v2815 = vadd.f32 %v2266, %v2702
    %v2816 = vadd.f32 %v2268, %v2702
    %v2817 = vadd.f32 %v2379, %v2702
    %v2818 = vadd.f32 %v2381, %v2702
    %v2819 = vadd.f32 %v2492, %v2702
    %v2820 = vadd.f32 %v2494, %v2702
    %v2821 = vadd.f32 %v2605, %v2702
    %v2822 = vadd.f32 %v2607, %v2702
    %v2823 = vadd.f32 %v2270, %v2707
    %v2824 = vadd.f32 %v2272, %v2707
    %v2825 = vadd.f32 %v2383, %v2707
    %v2826 = vadd.f32 %v2385, %v2707
    %v2827 = vadd.f32 %v2496, %v2707
    %v2828 = vadd.f32 %v2498, %v2707
    %v2829 = vadd.f32 %v2609, %v2707
    %v2830 = vadd.f32 %v2611, %v2707
    %v2831 = vadd.f32 %v2276, %v2712
    %v2832 = vadd.f32 %v2278, %v2712
    %v2833 = vadd.f32 %v2389, %v2712
    %v2834 = vadd.f32 %v2391, %v2712
    %v2835 = vadd.f32 %v2502, %v2712
    %v2836 = vadd.f32 %v2504, %v2712
    %v2837 = vadd.f32 %v2615, %v2712
    %v2838 = vadd.f32 %v2617, %v2712
    %v2839 = vadd.f32 %v2280, %v2717
    %v2840 = vadd.f32 %v2282, %v2717
    %v2841 = vadd.f32 %v2393, %v2717
    %v2842 = vadd.f32 %v2395, %v2717
    %v2843 = vadd.f32 %v2506, %v2717
    %v2844 = vadd.f32 %v2508, %v2717
    %v2845 = vadd.f32 %v2619, %v2717
    %v2846 = vadd.f32 %v2621, %v2717
    %v2847 = vmax.f32 %v2719, 0.0
    %v2848 = vmax.f32 %v2720, 0.0
    %v2849 = vmax.f32 %v2721, 0.0
    %v2850 = vmax.f32 %v2722, 0.0
    %v2851 = vmax.f32 %v2723, 0.0
    %v2852 = vmax.f32 %v2724, 0.0
    %v2853 = vmax.f32 %v2725, 0.0
    %v2854 = vmax.f32 %v2726, 0.0
    %v2855 = vmax.f32 %v2727, 0.0
    %v2856 = vmax.f32 %v2728, 0.0
    %v2857 = vmax.f32 %v2729, 0.0
    %v2858 = vmax.f32 %v2730, 0.0
    %v2859 = vmax.f32 %v2731, 0.0
    %v2860 = vmax.f32 %v2732, 0.0
    %v2861 = vmax.f32 %v2733, 0.0
    %v2862 = vmax.f32 %v2734, 0.0
    %v2863 = vmax.f32 %v2735, 0.0
    %v2864 = vmax.f32 %v2736, 0.0
    %v2865 = vmax.f32 %v2737, 0.0
    %v2866 = vmax.f32 %v2738, 0.0
    %v2867 = vmax.f32 %v2739, 0.0
    %v2868 = vmax.f32 %v2740, 0.0
    %v2869 = vmax.f32 %v2741, 0.0
    %v2870 = vmax.f32 %v2742, 0.0
    %v2871 = vmax.f32 %v2743, 0.0
    %v2872 = vmax.f32 %v2744, 0.0
    %v2873 = vmax.f32 %v2745, 0.0
    %v2874 = vmax.f32 %v2746, 0.0
    %v2875 = vmax.f32 %v2747, 0.0
    %v2876 = vmax.f32 %v2748, 0.0
    %v2877 = vmax.f32 %v2749, 0.0
    %v2878 = vmax.f32 %v2750, 0.0
    %v2879 = vmax.f32 %v2751, 0.0
    %v2880 = vmax.f32 %v2752, 0.0
    %v2881 = vmax.f32 %v2753, 0.0
    %v2882 = vmax.f32 %v2754, 0.0
    %v2883 = vmax.f32 %v2755, 0.0
    %v2884 = vmax.f32 %v2756, 0.0
    %v2885 = vmax.f32 %v2757, 0.0
    %v2886 = vmax.f32 %v2758, 0.0
    %v2887 = vmax.f32 %v2759, 0.0
    %v2888 = vmax.f32 %v2760, 0.0
    %v2889 = vmax.f32 %v2761, 0.0
    %v2890 = vmax.f32 %v2762, 0.0
    %v2891 = vmax.f32 %v2763, 0.0
    %v2892 = vmax.f32 %v2764, 0.0
    %v2893 = vmax.f32 %v2765, 0.0
    %v2894 = vmax.f32 %v2766, 0.0
    %v2895 = vmax.f32 %v2767, 0.0
    %v2896 = vmax.f32 %v2768, 0.0
    %v2897 = vmax.f32 %v2769, 0.0
    %v2898 = vmax.f32 %v2770, 0.0
    %v2899 = vmax.f32 %v2771, 0.0
    %v2900 = vmax.f32 %v2772, 0.0
    %v2901 = vmax.f32 %v2773, 0.0
    %v2902 = vmax.f32 %v2774, 0.0
    %v2903 = vmax.f32 %v2775, 0.0
    %v2904 = vmax.f32 %v2776, 0.0
    %v2905 = vmax.f32 %v2777, 0.0
    %v2906 = vmax.f32 %v2778, 0.0
    %v2907 = vmax.f32 %v2779, 0.0
    %v2908 = vmax.f32 %v2780, 0.0
    %v2909 = vmax.f32 %v2781, 0.0
    %v2910 = vmax.f32 %v2782, 0.0
    %v2911 = vmax.f32 %v2783, 0.0
    %v2912 = vmax.f32 %v2784, 0.0
    %v2913 = vmax.f32 %v2785, 0.0
    %v2914 = vmax.f32 %v2786, 0.0
    %v2915 = vmax.f32 %v2787, 0.0
    %v2916 = vmax.f32 %v2788, 0.0
    %v2917 = vmax.f32 %v2789, 0.0
    %v2918 = vmax.f32 %v2790, 0.0
    %v2919 = vmax.f32 %v2791, 0.0
    %v2920 = vmax.f32 %v2792, 0.0
    %v2921 = vmax.f32 %v2793, 0.0
    %v2922 = vmax.f32 %v2794, 0.0
    %v2923 = vmax.f32 %v2795, 0.0
    %v2924 = vmax.f32 %v2796, 0.0
    %v2925 = vmax.f32 %v2797, 0.0
    %v2926 = vmax.f32 %v2798, 0.0
    %v2927 = vmax.f32 %v2799, 0.0
    %v2928 = vmax.f32 %v2800, 0.0
    %v2929 = vmax.f32 %v2801, 0.0
    %v2930 = vmax.f32 %v2802, 0.0
    %v2931 = vmax.f32 %v2803, 0.0
    %v2932 = vmax.f32 %v2804, 0.0
    %v2933 = vmax.f32 %v2805, 0.0
    %v2934 = vmax.f32 %v2806, 0.0
    %v2935 = vmax.f32 %v2807, 0.0
    %v2936 = vmax.f32 %v2808, 0.0
    %v2937 = vmax.f32 %v2809, 0.0
    %v2938 = vmax.f32 %v2810, 0.0
    %v2939 = vmax.f32 %v2811, 0.0
    %v2940 = vmax.f32 %v2812, 0.0
    %v2941 = vmax.f32 %v2813, 0.0
    %v2942 = vmax.f32 %v2814, 0.0
    %v2943 = vmax.f32 %v2815, 0.0
    %v2944 = vmax.f32 %v2816, 0.0
    %v2945 = vmax.f32 %v2817, 0.0
    %v2946 = vmax.f32 %v2818, 0.0
    %v2947 = vmax.f32 %v2819, 0.0
    %v2948 = vmax.f32 %v2820, 0.0
    %v2949 = vmax.f32 %v2821, 0.0
    %v2950 = vmax.f32 %v2822, 0.0
    %v2951 = vmax.f32 %v2823, 0.0
    %v2952 = vmax.f32 %v2824, 0.0
    %v2953 = vmax.f32 %v2825, 0.0
    %v2954 = vmax.f32 %v2826, 0.0
    %v2955 = vmax.f32 %v2827, 0.0
    %v2956 = vmax.f32 %v2828, 0.0
    %v2957 = vmax.f32 %v2829, 0.0
    %v2958 = vmax.f32 %v2830, 0.0
    %v2959 = vmax.f32 %v2831, 0.0
    %v2960 = vmax.f32 %v2832, 0.0
    %v2961 = vmax.f32 %v2833, 0.0
    %v2962 = vmax.f32 %v2834, 0.0
    %v2963 = vmax.f32 %v2835, 0.0
    %v2964 = vmax.f32 %v2836, 0.0
    %v2965 = vmax.f32 %v2837, 0.0
    %v2966 = vmax.f32 %v2838, 0.0
    %v2967 = vmax.f32 %v2839, 0.0
    %v2968 = vmax.f32 %v2840, 0.0
    %v2969 = vmax.f32 %v2841, 0.0
    %v2970 = vmax.f32 %v2842, 0.0
    %v2971 = vmax.f32 %v2843, 0.0
    %v2972 = vmax.f32 %v2844, 0.0
    %v2973 = vmax.f32 %v2845, 0.0
    %v2974 = vmax.f32 %v2846, 0.0
    %v2975 = vld [vmem:[%s8] sm:$0x3]
    %v2976 = vpack.c.bf16 %v2855, %v2847
    %v2977 = vpack.c.bf16 %v2856, %v2848
    %v2978 = vpack.c.bf16 %v2857, %v2849
    %v2979 = vpack.c.bf16 %v2858, %v2850
    %v2980 = vpack.c.bf16 %v2859, %v2851
    %v2981 = vpack.c.bf16 %v2860, %v2852
    %v2982 = vpack.c.bf16 %v2861, %v2853
    %v2983 = vpack.c.bf16 %v2862, %v2854
    %v2984 = vpack.c.bf16 %v2871, %v2863
    %v2985 = vpack.c.bf16 %v2872, %v2864
    %v2986 = vpack.c.bf16 %v2873, %v2865
    %v2987 = vpack.c.bf16 %v2874, %v2866
    %v2988 = vpack.c.bf16 %v2875, %v2867
    %v2989 = vpack.c.bf16 %v2876, %v2868
    %v2990 = vpack.c.bf16 %v2877, %v2869
    %v2991 = vpack.c.bf16 %v2878, %v2870
    %v2992 = vpack.c.bf16 %v2887, %v2879
    %v2993 = vpack.c.bf16 %v2888, %v2880
    %v2994 = vpack.c.bf16 %v2889, %v2881
    %v2995 = vpack.c.bf16 %v2890, %v2882
    %v2996 = vpack.c.bf16 %v2891, %v2883
    %v2997 = vpack.c.bf16 %v2892, %v2884
    %v2998 = vpack.c.bf16 %v2893, %v2885
    %v2999 = vpack.c.bf16 %v2894, %v2886
    %v3000 = vpack.c.bf16 %v2903, %v2895
    %v3001 = vpack.c.bf16 %v2904, %v2896
    %v3002 = vpack.c.bf16 %v2905, %v2897
    %v3003 = vpack.c.bf16 %v2906, %v2898
    %v3004 = vpack.c.bf16 %v2907, %v2899
    %v3005 = vpack.c.bf16 %v2908, %v2900
    %v3006 = vpack.c.bf16 %v2909, %v2901
    %v3007 = vpack.c.bf16 %v2910, %v2902
    %v3008 = vpack.c.bf16 %v2919, %v2911
    %v3009 = vpack.c.bf16 %v2920, %v2912
    %v3010 = vpack.c.bf16 %v2921, %v2913
    %v3011 = vpack.c.bf16 %v2922, %v2914
    %v3012 = vpack.c.bf16 %v2923, %v2915
    %v3013 = vpack.c.bf16 %v2924, %v2916
    %v3014 = vpack.c.bf16 %v2925, %v2917
    %v3015 = vpack.c.bf16 %v2926, %v2918
    %v3016 = vpack.c.bf16 %v2935, %v2927
    %v3017 = vpack.c.bf16 %v2936, %v2928
    %v3018 = vpack.c.bf16 %v2937, %v2929
    %v3019 = vpack.c.bf16 %v2938, %v2930
    %v3020 = vpack.c.bf16 %v2939, %v2931
    %v3021 = vpack.c.bf16 %v2940, %v2932
    %v3022 = vpack.c.bf16 %v2941, %v2933
    %v3023 = vpack.c.bf16 %v2942, %v2934
    %v3024 = vpack.c.bf16 %v2951, %v2943
    %v3025 = vpack.c.bf16 %v2952, %v2944
    %v3026 = vpack.c.bf16 %v2953, %v2945
    %v3027 = vpack.c.bf16 %v2954, %v2946
    %v3028 = vpack.c.bf16 %v2955, %v2947
    %v3029 = vpack.c.bf16 %v2956, %v2948
    %v3030 = vpack.c.bf16 %v2957, %v2949
    %v3031 = vpack.c.bf16 %v2958, %v2950
    %v3032 = vpack.c.bf16 %v2967, %v2959
    %v3033 = vpack.c.bf16 %v2968, %v2960
    %v3034 = vpack.c.bf16 %v2969, %v2961
    %v3035 = vpack.c.bf16 %v2970, %v2962
    %v3036 = vpack.c.bf16 %v2971, %v2963
    %v3037 = vpack.c.bf16 %v2972, %v2964
    %v3038 = vpack.c.bf16 %v2973, %v2965
    %v3039 = vpack.c.bf16 %v2974, %v2966
    %v3040 = vld [vmem:[%s9] sm:$0x7]
    %3042 = vset.pattern.permute.xlu0 0
    %3043 = vperm.xlu0 %3042, %v3040
    %v3044 = vpop.permute.xlu0 %3043
    %3046 = vmatprep.subr.bf16.mxu0 %v2977
    %3047 = vmatpush1.bf16.msra.mxu0 %v2976
    %3048 = vmatprep.subr.bf16.mxu0 %v2985
    %3049 = vmatpush1.bf16.msra.mxu0 %v2984
    %3050 = vmatprep.subr.bf16.mxu0 %v2993
    %3051 = vmatpush1.bf16.msra.mxu0 %v2992
    %3052 = vmatprep.subr.bf16.mxu0 %v3001
    %3053 = vmatpush1.bf16.msra.mxu0 %v3000
    %3054 = vmatprep.subr.bf16.mxu0 %v3009
    %3055 = vmatpush1.bf16.msra.mxu0 %v3008
    %3056 = vmatprep.subr.bf16.mxu0 %v3017
    %3057 = vmatpush1.bf16.msra.mxu0 %v3016
    %3058 = vmatprep.subr.bf16.mxu0 %v3025
    %3059 = vmatpush1.bf16.msra.mxu0 %v3024
    %3060 = vmatprep.subr.bf16.mxu0 %v3033
    %3061 = vmatpush1.bf16.msra.mxu0 %v3032
    %3062 = vmatprep.subr.bf16.mxu0 0
    %3063 = vmatpush1.bf16.msra.mxu0 0
    %3064 = vmatprep.subr.bf16.mxu0 0
    %3065 = vmatpush1.bf16.msra.mxu0 0
    %3066 = vmatprep.subr.bf16.mxu0 0
    %3067 = vmatpush1.bf16.msra.mxu0 0
    %3068 = vmatprep.subr.bf16.mxu0 0
    %3069 = vmatpush1.bf16.msra.mxu0 0
    %3070 = vmatprep.subr.bf16.mxu0 0
    %3071 = vmatpush1.bf16.msra.mxu0 0
    %3072 = vmatprep.subr.bf16.mxu0 0
    %3073 = vmatpush1.bf16.msra.mxu0 0
    %3074 = vmatprep.subr.bf16.mxu0 0
    %3075 = vmatpush1.bf16.msra.mxu0 0
    %3076 = vmatprep.subr.bf16.mxu0 0
    %3077 = vmatpush1.bf16.msra.mxu0 0
    %3078 = vmatprep.mubr.bf16.mxu0 0
    %3079 = vmatmul.mubr.bf16.gmra.mrb[0].mxu0 %v2975
    %v3080 = vpop.f32.mrb[0].mxu0
    %v3081 = vadd.f32 %v3044, %v3080
    %v3082 = vpop.f32.mrb[0].mxu0
    %v3083 = vadd.f32 %v3044, %v3082
    %v3084 = vpop.f32.mrb[0].mxu0
    %v3085 = vpop.f32.mrb[0].mxu0
    %3086 = vdwg.mxu0
    %3087 = vmatprep.subr.bf16.mxu0 %v2979
    %3088 = vmatpush1.bf16.msra.mxu0 %v2978
    %3089 = vmatprep.subr.bf16.mxu0 %v2987
    %3090 = vmatpush1.bf16.msra.mxu0 %v2986
    %3091 = vmatprep.subr.bf16.mxu0 %v2995
    %3092 = vmatpush1.bf16.msra.mxu0 %v2994
    %3093 = vmatprep.subr.bf16.mxu0 %v3003
    %3094 = vmatpush1.bf16.msra.mxu0 %v3002
    %3095 = vmatprep.subr.bf16.mxu0 %v3011
    %3096 = vmatpush1.bf16.msra.mxu0 %v3010
    %3097 = vmatprep.subr.bf16.mxu0 %v3019
    %3098 = vmatpush1.bf16.msra.mxu0 %v3018
    %3099 = vmatprep.subr.bf16.mxu0 %v3027
    %3100 = vmatpush1.bf16.msra.mxu0 %v3026
    %3101 = vmatprep.subr.bf16.mxu0 %v3035
    %3102 = vmatpush1.bf16.msra.mxu0 %v3034
    %3103 = vmatprep.subr.bf16.mxu0 0
    %3104 = vmatpush1.bf16.msra.mxu0 0
    %3105 = vmatprep.subr.bf16.mxu0 0
    %3106 = vmatpush1.bf16.msra.mxu0 0
    %3107 = vmatprep.subr.bf16.mxu0 0
    %3108 = vmatpush1.bf16.msra.mxu0 0
    %3109 = vmatprep.subr.bf16.mxu0 0
    %3110 = vmatpush1.bf16.msra.mxu0 0
    %3111 = vmatprep.subr.bf16.mxu0 0
    %3112 = vmatpush1.bf16.msra.mxu0 0
    %3113 = vmatprep.subr.bf16.mxu0 0
    %3114 = vmatpush1.bf16.msra.mxu0 0
    %3115 = vmatprep.subr.bf16.mxu0 0
    %3116 = vmatpush1.bf16.msra.mxu0 0
    %3117 = vmatprep.subr.bf16.mxu0 0
    %3118 = vmatpush1.bf16.msra.mxu0 0
    %3119 = vmatprep.mubr.bf16.mxu0 0
    %3120 = vmatmul.mubr.bf16.gmra.mrb[0].mxu0 %v2975
    %v3121 = vpop.f32.mrb[0].mxu0
    %v3122 = vadd.f32 %v3044, %v3121
    %v3123 = vpop.f32.mrb[0].mxu0
    %v3124 = vadd.f32 %v3044, %v3123
    %v3125 = vpop.f32.mrb[0].mxu0
    %v3126 = vpop.f32.mrb[0].mxu0
    %3127 = vdwg.mxu0
    %3128 = vmatprep.subr.bf16.mxu0 %v2981
    %3129 = vmatpush1.bf16.msra.mxu0 %v2980
    %3130 = vmatprep.subr.bf16.mxu0 %v2989
    %3131 = vmatpush1.bf16.msra.mxu0 %v2988
    %3132 = vmatprep.subr.bf16.mxu0 %v2997
    %3133 = vmatpush1.bf16.msra.mxu0 %v2996
    %3134 = vmatprep.subr.bf16.mxu0 %v3005
    %3135 = vmatpush1.bf16.msra.mxu0 %v3004
    %3136 = vmatprep.subr.bf16.mxu0 %v3013
    %3137 = vmatpush1.bf16.msra.mxu0 %v3012
    %3138 = vmatprep.subr.bf16.mxu0 %v3021
    %3139 = vmatpush1.bf16.msra.mxu0 %v3020
    %3140 = vmatprep.subr.bf16.mxu0 %v3029
    %3141 = vmatpush1.bf16.msra.mxu0 %v3028
    %3142 = vmatprep.subr.bf16.mxu0 %v3037
    %3143 = vmatpush1.bf16.msra.mxu0 %v3036
    %3144 = vmatprep.subr.bf16.mxu0 0
    %3145 = vmatpush1.bf16.msra.mxu0 0
    %3146 = vmatprep.subr.bf16.mxu0 0
    %3147 = vmatpush1.bf16.msra.mxu0 0
    %3148 = vmatprep.subr.bf16.mxu0 0
    %3149 = vmatpush1.bf16.msra.mxu0 0
    %3150 = vmatprep.subr.bf16.mxu0 0
    %3151 = vmatpush1.bf16.msra.mxu0 0
    %3152 = vmatprep.subr.bf16.mxu0 0
    %3153 = vmatpush1.bf16.msra.mxu0 0
    %3154 = vmatprep.subr.bf16.mxu0 0
    %3155 = vmatpush1.bf16.msra.mxu0 0
    %3156 = vmatprep.subr.bf16.mxu0 0
    %3157 = vmatpush1.bf16.msra.mxu0 0
    %3158 = vmatprep.subr.bf16.mxu0 0
    %3159 = vmatpush1.bf16.msra.mxu0 0
    %3160 = vmatprep.mubr.bf16.mxu0 0
    %3161 = vmatmul.mubr.bf16.gmra.mrb[0].mxu0 %v2975
    %v3162 = vpop.f32.mrb[0].mxu0
    %v3163 = vadd.f32 %v3044, %v3162
    %v3164 = vpop.f32.mrb[0].mxu0
    %v3165 = vadd.f32 %v3044, %v3164
    %v3166 = vpop.f32.mrb[0].mxu0
    %v3167 = vpop.f32.mrb[0].mxu0
    %3168 = vdwg.mxu0
    %3169 = vmatprep.subr.bf16.mxu0 %v2983
    %3170 = vmatpush1.bf16.msra.mxu0 %v2982
    %3171 = vmatprep.subr.bf16.mxu0 %v2991
    %3172 = vmatpush1.bf16.msra.mxu0 %v2990
    %3173 = vmatprep.subr.bf16.mxu0 %v2999
    %3174 = vmatpush1.bf16.msra.mxu0 %v2998
    %3175 = vmatprep.subr.bf16.mxu0 %v3007
    %3176 = vmatpush1.bf16.msra.mxu0 %v3006
    %3177 = vmatprep.subr.bf16.mxu0 %v3015
    %3178 = vmatpush1.bf16.msra.mxu0 %v3014
    %3179 = vmatprep.subr.bf16.mxu0 %v3023
    %3180 = vmatpush1.bf16.msra.mxu0 %v3022
    %3181 = vmatprep.subr.bf16.mxu0 %v3031
    %3182 = vmatpush1.bf16.msra.mxu0 %v3030
    %3183 = vmatprep.subr.bf16.mxu0 %v3039
    %3184 = vmatpush1.bf16.msra.mxu0 %v3038
    %3185 = vmatprep.subr.bf16.mxu0 0
    %3186 = vmatpush1.bf16.msra.mxu0 0
    %3187 = vmatprep.subr.bf16.mxu0 0
    %3188 = vmatpush1.bf16.msra.mxu0 0
    %3189 = vmatprep.subr.bf16.mxu0 0
    %3190 = vmatpush1.bf16.msra.mxu0 0
    %3191 = vmatprep.subr.bf16.mxu0 0
    %3192 = vmatpush1.bf16.msra.mxu0 0
    %3193 = vmatprep.subr.bf16.mxu0 0
    %3194 = vmatpush1.bf16.msra.mxu0 0
    %3195 = vmatprep.subr.bf16.mxu0 0
    %3196 = vmatpush1.bf16.msra.mxu0 0
    %3197 = vmatprep.subr.bf16.mxu0 0
    %3198 = vmatpush1.bf16.msra.mxu0 0
    %3199 = vmatprep.subr.bf16.mxu0 0
    %3200 = vmatpush1.bf16.msra.mxu0 0
    %3201 = vmatprep.mubr.bf16.mxu0 0
    %3202 = vmatmul.mubr.bf16.gmra.mrb[0].mxu0 %v2975
    %v3203 = vpop.f32.mrb[0].mxu0
    %v3204 = vadd.f32 %v3044, %v3203
    %v3205 = vpop.f32.mrb[0].mxu0
    %v3206 = vadd.f32 %v3044, %v3205
    %v3207 = vpop.f32.mrb[0].mxu0
    %v3208 = vpop.f32.mrb[0].mxu0
    %3209 = vdwg.mxu0
    %v3210 = vxor.u32 %v3081, 2147483648
    %v3211 = vxor.u32 %v3083, 2147483648
    %v3212 = vxor.u32 %v3122, 2147483648
    %v3213 = vxor.u32 %v3124, 2147483648
    %v3214 = vxor.u32 %v3163, 2147483648
    %v3215 = vxor.u32 %v3165, 2147483648
    %v3216 = vxor.u32 %v3204, 2147483648
    %v3217 = vxor.u32 %v3206, 2147483648
    %v3218 = vmul.f32 %v3210, 1.442695
    %v3219 = vpow.pop %v3218
    %v3220 = vmul.f32 %v3211, 1.442695
    %v3221 = vpow.pop %v3220
    %v3222 = vmul.f32 %v3212, 1.442695
    %v3223 = vpow.pop %v3222
    %v3224 = vmul.f32 %v3213, 1.442695
    %v3225 = vpow.pop %v3224
    %v3226 = vmul.f32 %v3214, 1.442695
    %v3227 = vpow.pop %v3226
    %v3228 = vmul.f32 %v3215, 1.442695
    %v3229 = vpow.pop %v3228
    %v3230 = vmul.f32 %v3216, 1.442695
    %v3231 = vpow.pop %v3230
    %v3232 = vmul.f32 %v3217, 1.442695
    %v3233 = vpow.pop %v3232
    %v3234 = vadd.f32 %v3219, 1.0
    %v3235 = vadd.f32 %v3221, 1.0
    %v3236 = vadd.f32 %v3223, 1.0
    %v3237 = vadd.f32 %v3225, 1.0
    %v3238 = vadd.f32 %v3227, 1.0
    %v3239 = vadd.f32 %v3229, 1.0
    %v3240 = vadd.f32 %v3231, 1.0
    %v3241 = vadd.f32 %v3233, 1.0
    %v3242 = vrcp.pop %v3234
    %v3243 = vmul.f32 1.0, %v3242
    %v3244 = vrcp.pop %v3235
    %v3245 = vmul.f32 1.0, %v3244
    %v3246 = vrcp.pop %v3236
    %v3247 = vmul.f32 1.0, %v3246
    %v3248 = vrcp.pop %v3237
    %v3249 = vmul.f32 1.0, %v3248
    %v3250 = vrcp.pop %v3238
    %v3251 = vmul.f32 1.0, %v3250
    %v3252 = vrcp.pop %v3239
    %v3253 = vmul.f32 1.0, %v3252
    %v3254 = vrcp.pop %v3240
    %v3255 = vmul.f32 1.0, %v3254
    %v3256 = vrcp.pop %v3241
    %v3257 = vmul.f32 1.0, %v3256
    %vm3258 = vcmp.lt.f32.partialorder %v37, 0.5
    %vm3259 = vcmp.lt.f32.partialorder %v38, 0.5
    %vm3260 = vcmp.lt.f32.partialorder %v39, 0.5
    %vm3261 = vcmp.lt.f32.partialorder %v40, 0.5
    %vm3262 = vcmp.lt.f32.partialorder %v41, 0.5
    %vm3263 = vcmp.lt.f32.partialorder %v42, 0.5
    %vm3264 = vcmp.lt.f32.partialorder %v43, 0.5
    %vm3265 = vcmp.lt.f32.partialorder %v44, 0.5
    %v3274 = vrot.slane %v1094, 2
    %v3275 = vrot.slane %v1096, 2
    %v3276 = vrot.slane %v1207, 2
    %v3277 = vrot.slane %v1209, 2
    %v3278 = vrot.slane %v1320, 2
    %v3279 = vrot.slane %v1322, 2
    %v3280 = vrot.slane %v1433, 2
    %v3281 = vrot.slane %v1435, 2
    %v3290 = vsel %vm3258, %v3274, 100.0
    %v3291 = vsel %vm3259, %v3275, 100.0
    %v3292 = vsel %vm3260, %v3276, 100.0
    %v3293 = vsel %vm3261, %v3277, 100.0
    %v3294 = vsel %vm3262, %v3278, 100.0
    %v3295 = vsel %vm3263, %v3279, 100.0
    %v3296 = vsel %vm3264, %v3280, 100.0
    %v3297 = vsel %vm3265, %v3281, 100.0
    %v3306 = vcombine.high %v3290, %v3291
    %v3307 = vcombine.high %v3292, %v3293
    %v3308 = vcombine.high %v3294, %v3295
    %v3309 = vcombine.high %v3296, %v3297
    %v3311 = vunpack.c.l.s4 1966171168
    %v3312 = vunpack.c.0.s8 %v3311
    %v3313 = vlaneseq
    %v3314 = vshrl.u32 %v3313, 7
    %v3315 = vsub.s32 %v3312, %v3314
    %v3316 = vrot.slane %v3306, %v3315
    %v3318 = vunpack.c.l.s4 1966171168
    %v3319 = vunpack.c.0.s8 %v3318
    %v3320 = vlaneseq
    %v3321 = vshrl.u32 %v3320, 7
    %v3322 = vsub.s32 %v3319, %v3321
    %v3323 = vrot.slane %v3307, %v3322
    %v3325 = vunpack.c.l.s4 1966171168
    %v3326 = vunpack.c.0.s8 %v3325
    %v3327 = vlaneseq
    %v3328 = vshrl.u32 %v3327, 7
    %v3329 = vsub.s32 %v3326, %v3328
    %v3330 = vrot.slane %v3308, %v3329
    %v3332 = vunpack.c.l.s4 1966171168
    %v3333 = vunpack.c.0.s8 %v3332
    %v3334 = vlaneseq
    %v3335 = vshrl.u32 %v3334, 7
    %v3336 = vsub.s32 %v3333, %v3335
    %v3337 = vrot.slane %v3309, %v3336
    %v3338 = vcombine.low %v3316, %v3323
    %v3339 = vcombine.low %v3330, %v3337
    %v3341 = vunpack.c.l.s4 1966171168
    %v3342 = vunpack.c.0.s8 %v3341
    %v3343 = vlaneseq
    %v3344 = vshrl.u32 %v3343, 7
    %v3345 = vsub.s32 %v3342, %v3344
    %v3346 = vrot.slane %v3338, %v3345
    %v3348 = vunpack.c.l.s4 1966171168
    %v3349 = vunpack.c.0.s8 %v3348
    %v3350 = vlaneseq
    %v3351 = vshrl.u32 %v3350, 7
    %v3352 = vsub.s32 %v3349, %v3351
    %v3353 = vrot.slane %v3339, %v3352
    %v3354 = vcombine.high %v3346, %v3353
    %3356 = vst [vmem:[#allocation2] ss:$4 sm:$0xff] %v3354
    %v3357 = vsel %vm3258, 1, 0
    %v3358 = vsel %vm3259, 1, 0
    %v3359 = vsel %vm3260, 1, 0
    %v3360 = vsel %vm3261, 1, 0
    %v3361 = vsel %vm3262, 1, 0
    %v3362 = vsel %vm3263, 1, 0
    %v3363 = vsel %vm3264, 1, 0
    %v3364 = vsel %vm3265, 1, 0
    %v3365 = vlaneseq
    %v3366 = vshrl.u32 %v3365, 7
    %v3367 = vsub.s32 6, %v3366
    %v3368 = vrot.slane %v3357, %v3367
    %v3369 = vlaneseq
    %v3370 = vshrl.u32 %v3369, 7
    %v3371 = vsub.s32 6, %v3370
    %v3372 = vrot.slane %v3358, %v3371
    %v3373 = vlaneseq
    %v3374 = vshrl.u32 %v3373, 7
    %v3375 = vsub.s32 6, %v3374
    %v3376 = vrot.slane %v3359, %v3375
    %v3377 = vlaneseq
    %v3378 = vshrl.u32 %v3377, 7
    %v3379 = vsub.s32 6, %v3378
    %v3380 = vrot.slane %v3360, %v3379
    %v3381 = vlaneseq
    %v3382 = vshrl.u32 %v3381, 7
    %v3383 = vsub.s32 6, %v3382
    %v3384 = vrot.slane %v3361, %v3383
    %v3385 = vlaneseq
    %v3386 = vshrl.u32 %v3385, 7
    %v3387 = vsub.s32 6, %v3386
    %v3388 = vrot.slane %v3362, %v3387
    %v3389 = vlaneseq
    %v3390 = vshrl.u32 %v3389, 7
    %v3391 = vsub.s32 6, %v3390
    %v3392 = vrot.slane %v3363, %v3391
    %v3393 = vlaneseq
    %v3394 = vshrl.u32 %v3393, 7
    %v3395 = vsub.s32 6, %v3394
    %v3396 = vrot.slane %v3364, %v3395
    %vm3397 = vcmp.eq.s32.totalorder %v3368, 1
    %vm3398 = vcmp.eq.s32.totalorder %v3372, 1
    %vm3399 = vcmp.eq.s32.totalorder %v3376, 1
    %vm3400 = vcmp.eq.s32.totalorder %v3380, 1
    %vm3401 = vcmp.eq.s32.totalorder %v3384, 1
    %vm3402 = vcmp.eq.s32.totalorder %v3388, 1
    %vm3403 = vcmp.eq.s32.totalorder %v3392, 1
    %vm3404 = vcmp.eq.s32.totalorder %v3396, 1
    %v3405 = vsel %vm3397, %v3243, 0.0
    %v3406 = vsel %vm3398, %v3245, 0.0
    %v3407 = vsel %vm3399, %v3247, 0.0
    %v3408 = vsel %vm3400, %v3249, 0.0
    %v3409 = vsel %vm3401, %v3251, 0.0
    %v3410 = vsel %vm3402, %v3253, 0.0
    %v3411 = vsel %vm3403, %v3255, 0.0
    %v3412 = vsel %vm3404, %v3257, 0.0
    %v3421 = vcombine.low %v3405, %v3406
    %v3422 = vcombine.low %v3407, %v3408
    %v3423 = vcombine.low %v3409, %v3410
    %v3424 = vcombine.low %v3411, %v3412
    %v3425 = vrot.slane %v3421, 7
    %v3426 = vrot.slane %v3422, 7
    %v3427 = vrot.slane %v3423, 7
    %v3428 = vrot.slane %v3424, 7
    %3433 = vst [vmem:[#allocation2] sm:$0xee] %v3425
    %3434 = vst [vmem:[#allocation2 + $0x8] sm:$0xee] %v3426
    %3435 = vst [vmem:[#allocation2 + $0x10] sm:$0xee] %v3427
    %3436 = vst [vmem:[#allocation2 + $0x18] sm:$0xee] %v3428
    // Predicated region
    $region42: #{tpu_custom_call.1} parent=1 // pred_check
      _
    $region43: #{tpu_custom_call.1} parent=1 // pred_check_branch
      %3438 = sbr.rel (0) target = $region45
    $region44: #{tpu_custom_call.1} parent=1 // pred_region
      %s3440 = ssub.s32 512, 512
      %3441 = vsyncadd [#allocation3], %s3440
      %s3443 = sshll.u32 [#allocation2], 4
      %s3444 = int_to_ptr.vmem [resolvable:$true] %s3443
      %3446 = dma.vmem_to_hbm [thread:$0]  %s3444, 512, %s10, [#allocation3]
    $region45: #{tpu_custom_call.1} parent=1 // pred_fallthru
      _
    // Predicated region
    $region46: #{tpu_custom_call.1} parent=1 // pred_check
      _
    $region47: #{tpu_custom_call.1} parent=1 // pred_check_branch
      %3448 = sbr.rel (0) target = $region49
    $region48: #{tpu_custom_call.1} parent=1 // pred_region
      %3449 = dma.done [#allocation3], 512
    $region49: #{tpu_custom_call.1} parent=1 // pred_fallthru
      _
    %3450 = vsyncpa [#allocation3], 1

</llo_original>
